<compile_context>
chip_gen: v7x
topology: tpu7x:2x2x1
jax: 0.10.0
libtpu: 0.0.40
codegen_flags: <defaults>
</compile_context>

<pallas_src>
import functools

import jax
import jax.numpy as jnp
import numpy as np
from jax.experimental import pallas as pl
from jax.experimental.pallas import tpu as pltpu


NEG_BIG = -1e9  # finite mask bias: avoids -inf -> NaN on fully-padded rows


# ----------------------------- shared helpers -------------------------------

def _round_up(n, m):
    return (n + m - 1) // m * m


def _divisor_tile(n, cap, step):
    """Largest multiple of `step` that divides n and is <= cap (or n itself)."""
    if n <= cap:
        return n
    t = (cap // step) * step
    while t >= step:
        if n % t == 0:
            return t
        t -= step
    return n


def _layer_norm(x, gamma, beta, eps=1e-5):
    # single-pass variance (E[x^2] - mu^2): one fewer cross-lane reduction
    mu = jnp.mean(x, axis=-1, keepdims=True)
    var = jnp.mean(x * x, axis=-1, keepdims=True) - mu * mu
    return (x - mu) * jax.lax.rsqrt(var + eps) * gamma + beta


# ------------------------------ encoder kernel -------------------------------

def encoder_kernel(x_ref, mask_ref,
                   wce_ref, bce_ref, pos_ref, lng_ref, lnb_ref,
                   win_ref, bin_ref, wout_ref, bout_ref,
                   g1_ref, b1_ref, w1_ref, bf1_ref, w2_ref, bf2_ref,
                   g2_ref, b2_ref,
                   h_ref, x_vmem, *, n_heads):
    l = pl.program_id(1)
    Bblk, T, Vp = x_ref.shape
    D = wce_ref.shape[1]
    hd = D // n_heads
    N = Bblk * T
    scale = hd ** (-0.5)
    mdt = win_ref.dtype            # MXU operand dtype (bf16 or f32)

    def mm(a, w):                  # 2-D MXU matmul, f32 accumulation
        return jnp.dot(a.astype(mdt), w.astype(mdt),
                       preferred_element_type=jnp.float32)

    def bmm(subs, a, b):           # batched (leading batch dim) MXU matmul
        return jnp.einsum(subs, a.astype(mdt), b.astype(mdt),
                          preferred_element_type=jnp.float32)

    # ---- embedding: only at the first depth step of each batch block ----
    @pl.when(l == 0)
    def _embed():
        xe = mm(x_ref[...].reshape(N, Vp), wce_ref[...]) + bce_ref[...]
        xe = (xe.reshape(Bblk, T, D) + pos_ref[...][None, :, :]).reshape(N, D)
        x_vmem[...] = _layer_norm(xe, lng_ref[...], lnb_ref[...])

    x = x_vmem[...]                                   # (N, D) f32, resident

    # additive key-padding bias: 0 keep / -1e9 pad (finite; all-pad rows give a
    # uniform distribution instead of the reference's NaN -- documented choice).
    bias = (1.0 - mask_ref[...]) * NEG_BIG            # (Bblk, 1, T)

    # ---- multi-head self-attention ----
    qkv = mm(x, win_ref[...]) + bin_ref[...]          # (N, 3D) f32
    proj = jnp.zeros((N, D), jnp.float32)
    # TODO(synk): collapse this loop into one head-batched einsum
    # ('bqhd,bkhd->bhqk') once Mosaic dot_general with two batch dims is
    # verified on the target jax version; the per-head form below keeps every
    # dot rank<=3 with a leading batch dim (documented, known-good lowering)
    # and folds each head straight into the out-projection, so there is no
    # assembly scratch and no sub-128-lane partial stores.
    for h in range(n_heads):
        qh = (qkv[:, h * hd:(h + 1) * hd] * scale).reshape(Bblk, T, hd)
        kh = qkv[:, D + h * hd:D + (h + 1) * hd].reshape(Bblk, T, hd)
        vh = qkv[:, 2 * D + h * hd:2 * D + (h + 1) * hd].reshape(Bblk, T, hd)
        s = bmm('bqd,bkd->bqk', qh, kh) + bias        # (Bblk, T, T)
        s = s - jnp.max(s, axis=-1, keepdims=True)
        p = jnp.exp(s)
        p = p * pl.reciprocal(jnp.sum(p, axis=-1, keepdims=True), approx=True)
        ah = bmm('bqk,bkd->bqd', p, vh)               # (Bblk, T, hd)
        proj = proj + mm(ah.reshape(N, hd), wout_ref[h * hd:(h + 1) * hd, :])
    proj = proj + bout_ref[...]
    x = _layer_norm(x + proj, g1_ref[...], b1_ref[...])

    # ---- feed-forward ----
    hidden = jnp.maximum(mm(x, w1_ref[...]) + bf1_ref[...], 0.0)
    ff = mm(hidden, w2_ref[...]) + bf2_ref[...]
    x = _layer_norm(x + ff, g2_ref[...], b2_ref[...])

    x_vmem[...] = x

    # ---- emit the final hidden state once per batch block ----
    @pl.when(l == pl.num_programs(1) - 1)
    def _emit():
        h_ref[...] = x


# ------------------------------ decoder kernel -------------------------------

def decoder_kernel(h_ref, wd_ref, bd_ref, o_ref):
    o_ref[...] = (jnp.dot(h_ref[...].astype(wd_ref.dtype), wd_ref[...],
                          preferred_element_type=jnp.float32) + bd_ref[...])


# ------------------------------ pallas wrapper -------------------------------

def mlm_bert_forward(input_ids, params, *, n_heads, pad_token_id,
                     matmul_dtype=jnp.float32, batch_block=1):
    B, T, V = input_ids.shape
    D = params["wce"].shape[1]
    depth = params["win"].shape[0]
    if B % batch_block != 0:
        batch_block = 1
    n_bblk = B // batch_block
    Nblk = batch_block * T
    BT = B * T

    # ---- pad the vocab/feature dim to a multiple of 128 lanes ----
    Vp = max(128, _round_up(V, 128))
    pad_v = Vp - V
    x = jnp.pad(input_ids, ((0, 0), (0, 0), (0, pad_v))) if pad_v else input_ids
    wce = jnp.pad(params["wce"], ((0, pad_v), (0, 0))) if pad_v else params["wce"]
    wd = jnp.pad(params["wd"], ((0, 0), (0, pad_v))) if pad_v else params["wd"]
    bd = jnp.pad(params["bd"], ((0, 0), (0, pad_v))) if pad_v else params["bd"]

    # ---- big matmul weights stored in matmul_dtype (bf16 halves HBM/VMEM) ----
    mdt = matmul_dtype
    wce = wce.astype(mdt)
    wd = wd.astype(mdt)
    win = params["win"].astype(mdt)
    wout = params["wout"].astype(mdt)
    w1 = params["w1"].astype(mdt)
    w2 = params["w2"].astype(mdt)

    # NOTE: comparing a continuous float feature against pad_token_id means the
    # mask is effectively all-ones for dense inputs (mirrors the PyTorch model).
    mask = (input_ids[:, :, 0] != pad_token_id).astype(jnp.float32)[:, None, :]
    pos = params["pos"][:T]

    const_in = (wce, params["bce"], pos, params["ln_g"], params["ln_b"])
    layer_in = (win, params["bin"], wout, params["bout"],
                params["g1"], params["b1"], w1, params["bf1"],
                w2, params["bf2"], params["g2"], params["b2"])

    def const_spec(a):
        zero = (0,) * a.ndim
        return pl.BlockSpec(a.shape, lambda b, l: zero)

    def layer_spec(a):  # leading depth axis streamed per grid step l
        zero = (0,) * (a.ndim - 1)
        return pl.BlockSpec((None,) + tuple(a.shape[1:]),
                            lambda b, l: (l,) + zero)

    in_specs = ([pl.BlockSpec((batch_block, T, Vp), lambda b, l: (b, 0, 0)),
                 pl.BlockSpec((batch_block, 1, T), lambda b, l: (b, 0, 0))]
                + [const_spec(a) for a in const_in]
                + [layer_spec(a) for a in layer_in])

    # VMEM budget: 2x (double-buffered) per-layer weights + resident constants
    # + activation scratch + I/O blocks, with headroom.
    bytes_of = lambda arrs: sum(int(a.size) * a.dtype.itemsize for a in arrs)
    per_layer_b = bytes_of(layer_in) // depth
    resident_b = (bytes_of(const_in) + batch_block * T * (Vp + 1) * 4
                  + 2 * Nblk * D * 4)
    enc_vmem = int(min(max(2 * per_layer_b + resident_b + (8 << 20), 32 << 20),
                       64 << 20))

    flops = 2 * BT * Vp * D + depth * (2 * BT * D * 3 * D + 4 * BT * T * D
                                       + 2 * BT * D * D + 16 * BT * D * D)
    cost = pl.CostEstimate(flops=int(flops),
                           transcendentals=int(depth * n_heads * BT * T),
                           bytes_accessed=int(bytes_of(const_in)
                                              + bytes_of(layer_in)
                                              + BT * (Vp + D) * 4))

    hidden = pl.pallas_call(
        functools.partial(encoder_kernel, n_heads=n_heads),
        out_shape=jax.ShapeDtypeStruct((BT, D), jnp.float32),
        grid=(n_bblk, depth),
        in_specs=in_specs,
        out_specs=pl.BlockSpec((Nblk, D), lambda b, l: (b, 0)),
        scratch_shapes=[pltpu.VMEM((Nblk, D), jnp.float32)],
        compiler_params=pltpu.CompilerParams(
            dimension_semantics=("parallel", "arbitrary"),
            vmem_limit_bytes=enc_vmem),
        cost_estimate=cost,
    )(x, mask, *const_in, *layer_in)

    # ---- decoder: tiled over (row blocks, vocab tiles), both parallel ----
    row_t = _divisor_tile(BT, 256, 8)
    voc_t = _divisor_tile(Vp, 512, 128)
    dec_vmem = int(min(max(2 * (row_t * D * 4 + (D + 1) * voc_t * wd.dtype.itemsize
                                + row_t * voc_t * 4) + (8 << 20), 32 << 20),
                       64 << 20))
    logits = pl.pallas_call(
        decoder_kernel,
        out_shape=jax.ShapeDtypeStruct((BT, Vp), jnp.float32),
        grid=(BT // row_t, Vp // voc_t),
        in_specs=[pl.BlockSpec((row_t, D), lambda i, j: (i, 0)),
                  pl.BlockSpec((D, voc_t), lambda i, j: (0, j)),
                  pl.BlockSpec((1, voc_t), lambda i, j: (0, j))],
        out_specs=pl.BlockSpec((row_t, voc_t), lambda i, j: (i, j)),
        compiler_params=pltpu.CompilerParams(
            dimension_semantics=("parallel", "parallel"),
            vmem_limit_bytes=dec_vmem),
    )(hidden, wd, bd)

    logits = logits[:, :V] if pad_v else logits
    return logits.reshape(B, T, V)


# --------------------------- parameter initialization ------------------------

def init_params(key, vocab_size, max_len, dim, depth):
    keys = iter(jax.random.split(key, 64))

    def lin(fan_in, fan_out):
        w = jax.random.normal(next(keys), (fan_in, fan_out), jnp.float32) * 0.1
        b = jnp.zeros((1, fan_out), jnp.float32)
        return w, b

    wce, bce = lin(vocab_size, dim)
    pos = jax.random.normal(next(keys), (max_len, dim), jnp.float32) * 0.1

    per_layer = []
    for _ in range(depth):
        win, binp = lin(dim, 3 * dim)
        wout, bout = lin(dim, dim)
        w1, bf1 = lin(dim, 4 * dim)
        w2, bf2 = lin(4 * dim, dim)
        per_layer.append(dict(
            win=win, bin=binp, wout=wout, bout=bout,
            g1=jnp.ones((1, dim), jnp.float32), b1=jnp.zeros((1, dim), jnp.float32),
            w1=w1, bf1=bf1, w2=w2, bf2=bf2,
            g2=jnp.ones((1, dim), jnp.float32), b2=jnp.zeros((1, dim), jnp.float32)))
    stacked = {k: jnp.stack([lp[k] for lp in per_layer]) for k in per_layer[0]}

    wd, bd = lin(dim, vocab_size)
    return dict(wce=wce, bce=bce, pos=pos,
                ln_g=jnp.ones((1, dim), jnp.float32),
                ln_b=jnp.zeros((1, dim), jnp.float32),
                wd=wd, bd=bd, **stacked)


# ------------------------------ pure-JAX reference ---------------------------

def ref_forward(input_ids, params, *, n_heads, pad_token_id):
    mask = (input_ids[:, :, 0] != pad_token_id)
    B, T, _ = input_ids.shape
    D = params["wce"].shape[1]
    depth = params["win"].shape[0]
    hd = D // n_heads

    x = input_ids @ params["wce"] + params["bce"]
    x = x + params["pos"][:T]
    x = _layer_norm(x, params["ln_g"], params["ln_b"])
    for l in range(depth):
        qkv = x @ params["win"][l] + params["bin"][l]
        q, k, v = jnp.split(qkv, 3, axis=-1)
        q = q.reshape(B, T, n_heads, hd).transpose(0, 2, 1, 3)
        k = k.reshape(B, T, n_heads, hd).transpose(0, 2, 1, 3)
        v = v.reshape(B, T, n_heads, hd).transpose(0, 2, 1, 3)
        s = q @ jnp.swapaxes(k, -1, -2)
        s = jnp.where(mask[:, None, None, :], s, -jnp.inf)
        p = jax.nn.softmax(s * (hd ** -0.5), axis=-1)
        a = (p @ v).transpose(0, 2, 1, 3).reshape(B, T, D)
        a = a @ params["wout"][l] + params["bout"][l]
        x = _layer_norm(x + a, params["g1"][l], params["b1"][l])
        h = jax.nn.relu(x @ params["w1"][l] + params["bf1"][l])
        f = h @ params["w2"][l] + params["bf2"][l]
        x = _layer_norm(x + f, params["g2"][l], params["b2"][l])
    return x @ params["wd"] + params["bd"]


# ------------------------------------ main -----------------------------------

if __name__ == "__main__":
    config = dict(vocab_size=16, max_len=16, dim=32, n_heads=4, depth=2,
                  attn_dropout=0.0, mlp_dropout=0.0,
                  pad_token_id=0.0, mask_token_id=1.0, num_static_features=0)
    B, T = 2, 8

    key = jax.random.PRNGKey(0)
    kp, kx = jax.random.split(key)
    params = init_params(kp, config["vocab_size"], config["max_len"],
                         config["dim"], config["depth"])

    # input_ids is a dense float feature tensor (B, T, vocab_size) fed to a Linear.
    input_ids = jax.random.normal(kx, (B, T, config["vocab_size"]), jnp.float32)
    # plant a few exact mask-token values so the masked-LM gather is non-empty
    input_ids = input_ids.at[0, 2, :].set(config["mask_token_id"])
    input_ids = input_ids.at[1, 5, 3].set(config["mask_token_id"])

    fwd = jax.jit(functools.partial(
        mlm_bert_forward, n_heads=config["n_heads"],
        pad_token_id=config["pad_token_id"]))
    output = jax.block_until_ready(fwd(input_ids, params))

    # masked-LM gather: data-dependent (dynamic) shape -> done eagerly outside kernels
    mask_idx = (input_ids == config["mask_token_id"])
    result = {"mask_predictions": output[mask_idx], "predictions": output}

    # correctness check vs pure-JAX reference (f32 path)
    ref = jax.block_until_ready(
        ref_forward(input_ids, params, n_heads=config["n_heads"],
                    pad_token_id=config["pad_token_id"]))
    np.testing.assert_allclose(np.asarray(output), np.asarray(ref),
                               rtol=5e-3, atol=5e-3)
    assert result["mask_predictions"].shape[0] == int(mask_idx.sum())

    # bf16 MXU path: weights stored in bf16 (cast once in the wrapper), f32 accumulation,
    # LayerNorm/softmax stay f32.
    fwd_bf16 = jax.jit(functools.partial(
        mlm_bert_forward, n_heads=config["n_heads"],
        pad_token_id=config["pad_token_id"], matmul_dtype=jnp.bfloat16))
    out_bf16 = jax.block_until_ready(fwd_bf16(input_ids, params))
    np.testing.assert_allclose(np.asarray(out_bf16), np.asarray(output),
                               rtol=1e-1, atol=1e-1)

    print("KERNEL_OK")
</pallas_src>

<mosaic_0001>
module attributes {stable_mosaic.version = 11 : i64} {
  func.func @encoder_kernel(%arg0: i32, %arg1: i32, %arg2: memref<1x8x128xf32, #tpu.memory_space<vmem>>, %arg3: memref<1x1x8xf32, #tpu.memory_space<vmem>>, %arg4: memref<128x32xf32, #tpu.memory_space<vmem>>, %arg5: memref<1x32xf32, #tpu.memory_space<vmem>>, %arg6: memref<8x32xf32, #tpu.memory_space<vmem>>, %arg7: memref<1x32xf32, #tpu.memory_space<vmem>>, %arg8: memref<1x32xf32, #tpu.memory_space<vmem>>, %arg9: memref<1x32x96xf32, #tpu.memory_space<vmem>>, %arg10: memref<1x1x96xf32, #tpu.memory_space<vmem>>, %arg11: memref<1x32x32xf32, #tpu.memory_space<vmem>>, %arg12: memref<1x1x32xf32, #tpu.memory_space<vmem>>, %arg13: memref<1x1x32xf32, #tpu.memory_space<vmem>>, %arg14: memref<1x1x32xf32, #tpu.memory_space<vmem>>, %arg15: memref<1x32x128xf32, #tpu.memory_space<vmem>>, %arg16: memref<1x1x128xf32, #tpu.memory_space<vmem>>, %arg17: memref<1x128x32xf32, #tpu.memory_space<vmem>>, %arg18: memref<1x1x32xf32, #tpu.memory_space<vmem>>, %arg19: memref<1x1x32xf32, #tpu.memory_space<vmem>>, %arg20: memref<1x1x32xf32, #tpu.memory_space<vmem>>, %arg21: memref<8x32xf32, #tpu.memory_space<vmem>>, %arg22: memref<8x32xf32, #tpu.memory_space<vmem>>) attributes {dimension_semantics = [#tpu.dimension_semantics<parallel>, #tpu.dimension_semantics<arbitrary>], iteration_bounds = array<i64: 2, 2>, scalar_prefetch = 0 : i64, scratch_operands = 1 : i64, tpu.core_type = #tpu.core_type<tc>, window_params = [{transform_indices = @transform_0, window_bounds = array<i64: 1, 8, 128>}, {transform_indices = @transform_1, window_bounds = array<i64: 1, 1, 8>}, {pipeline_mode = #tpu.pipeline_mode<synchronous>, transform_indices = @transform_2, window_bounds = array<i64: 128, 32>}, {pipeline_mode = #tpu.pipeline_mode<synchronous>, transform_indices = @transform_3, window_bounds = array<i64: 1, 32>}, {pipeline_mode = #tpu.pipeline_mode<synchronous>, transform_indices = @transform_4, window_bounds = array<i64: 8, 32>}, {pipeline_mode = #tpu.pipeline_mode<synchronous>, transform_indices = @transform_5, window_bounds = array<i64: 1, 32>}, {pipeline_mode = #tpu.pipeline_mode<synchronous>, transform_indices = @transform_6, window_bounds = array<i64: 1, 32>}, {transform_indices = @transform_7, window_bounds = array<i64: 1, 32, 96>}, {transform_indices = @transform_8, window_bounds = array<i64: 1, 1, 96>}, {transform_indices = @transform_9, window_bounds = array<i64: 1, 32, 32>}, {transform_indices = @transform_10, window_bounds = array<i64: 1, 1, 32>}, {transform_indices = @transform_11, window_bounds = array<i64: 1, 1, 32>}, {transform_indices = @transform_12, window_bounds = array<i64: 1, 1, 32>}, {transform_indices = @transform_13, window_bounds = array<i64: 1, 32, 128>}, {transform_indices = @transform_14, window_bounds = array<i64: 1, 1, 128>}, {transform_indices = @transform_15, window_bounds = array<i64: 1, 128, 32>}, {transform_indices = @transform_16, window_bounds = array<i64: 1, 1, 32>}, {transform_indices = @transform_17, window_bounds = array<i64: 1, 1, 32>}, {transform_indices = @transform_18, window_bounds = array<i64: 1, 1, 32>}, {transform_indices = @transform_19, window_bounds = array<i64: 8, 32>}]} {
    %c0_i32 = arith.constant 0 : i32
    %0 = arith.cmpi eq, %arg1, %c0_i32 : i32
    %1 = arith.extui %0 : i1 to i32
    %c0_i32_0 = arith.constant 0 : i32
    %2 = arith.cmpi ne, %1, %c0_i32_0 : i32
    scf.if %2 {
      %c0_90 = arith.constant 0 : index
      %c0_91 = arith.constant 0 : index
      %c0_92 = arith.constant 0 : index
      %203 = vector.load %arg2[%c0_90, %c0_91, %c0_92] : memref<1x8x128xf32, #tpu.memory_space<vmem>>, vector<1x8x128xf32>
      %204 = vector.shape_cast %203 : vector<1x8x128xf32> to vector<8x128xf32>
      %c0_93 = arith.constant 0 : index
      %c0_94 = arith.constant 0 : index
      %205 = vector.load %arg4[%c0_93, %c0_94] : memref<128x32xf32, #tpu.memory_space<vmem>>, vector<128x32xf32>
      %cst_95 = arith.constant dense<0.000000e+00> : vector<8x32xf32>
      %206 = tpu.matmul %204, %205, %cst_95 {dimension_numbers = #tpu.dot_dimension_numbers<[1], [0], [0], [1], [0, 0, 1, 1], [], []>} : vector<8x128xf32>, vector<128x32xf32>, vector<8x32xf32> -> vector<8x32xf32>
      %c0_96 = arith.constant 0 : index
      %c0_97 = arith.constant 0 : index
      %207 = vector.load %arg5[%c0_96, %c0_97] : memref<1x32xf32, #tpu.memory_space<vmem>>, vector<1x32xf32>
      %208 = vector.broadcast %207 : vector<1x32xf32> to vector<8x32xf32>
      %209 = arith.addf %206, %208 : vector<8x32xf32>
      %210 = vector.shape_cast %209 : vector<8x32xf32> to vector<1x8x32xf32>
      %c0_98 = arith.constant 0 : index
      %c0_99 = arith.constant 0 : index
      %211 = vector.load %arg6[%c0_98, %c0_99] : memref<8x32xf32, #tpu.memory_space<vmem>>, vector<8x32xf32>
      %212 = vector.shape_cast %211 : vector<8x32xf32> to vector<1x8x32xf32>
      %213 = arith.addf %210, %212 : vector<1x8x32xf32>
      %214 = vector.shape_cast %213 : vector<1x8x32xf32> to vector<8x32xf32>
      %c0_100 = arith.constant 0 : index
      %c0_101 = arith.constant 0 : index
      %215 = vector.load %arg7[%c0_100, %c0_101] : memref<1x32xf32, #tpu.memory_space<vmem>>, vector<1x32xf32>
      %c0_102 = arith.constant 0 : index
      %c0_103 = arith.constant 0 : index
      %216 = vector.load %arg8[%c0_102, %c0_103] : memref<1x32xf32, #tpu.memory_space<vmem>>, vector<1x32xf32>
      %cst_104 = arith.constant dense<0.000000e+00> : vector<8xf32>
      %217 = vector.multi_reduction <add>, %214, %cst_104 [1] : vector<8x32xf32> to vector<8xf32>
      %218 = vector.shape_cast %217 : vector<8xf32> to vector<8x1xf32>
      %cst_105 = arith.constant 3.200000e+01 : f32
      %219 = vector.broadcast %cst_105 : f32 to vector<8x1xf32>
      %220 = arith.divf %218, %219 : vector<8x1xf32>
      %221 = arith.mulf %214, %214 : vector<8x32xf32>
      %cst_106 = arith.constant dense<0.000000e+00> : vector<8xf32>
      %222 = vector.multi_reduction <add>, %221, %cst_106 [1] : vector<8x32xf32> to vector<8xf32>
      %223 = vector.shape_cast %222 : vector<8xf32> to vector<8x1xf32>
      %cst_107 = arith.constant 3.200000e+01 : f32
      %224 = vector.broadcast %cst_107 : f32 to vector<8x1xf32>
      %225 = arith.divf %223, %224 : vector<8x1xf32>
      %226 = arith.mulf %220, %220 : vector<8x1xf32>
      %227 = arith.subf %225, %226 : vector<8x1xf32>
      %228 = vector.broadcast %220 : vector<8x1xf32> to vector<8x32xf32>
      %229 = arith.subf %214, %228 : vector<8x32xf32>
      %cst_108 = arith.constant 9.99999974E-6 : f32
      %230 = vector.broadcast %cst_108 : f32 to vector<8x1xf32>
      %231 = arith.addf %227, %230 : vector<8x1xf32>
      %232 = math.rsqrt %231 : vector<8x1xf32>
      %233 = vector.broadcast %232 : vector<8x1xf32> to vector<8x32xf32>
      %234 = arith.mulf %229, %233 : vector<8x32xf32>
      %235 = vector.broadcast %215 : vector<1x32xf32> to vector<8x32xf32>
      %236 = arith.mulf %234, %235 : vector<8x32xf32>
      %237 = vector.broadcast %216 : vector<1x32xf32> to vector<8x32xf32>
      %238 = arith.addf %236, %237 : vector<8x32xf32>
      %c0_109 = arith.constant 0 : index
      %c0_110 = arith.constant 0 : index
      %239 = vector.load %arg22[%c0_109, %c0_110] : memref<8x32xf32, #tpu.memory_space<vmem>>, vector<8x32xf32>
      tpu.vector_store %arg22[%c0_109, %c0_110], %238 {strides = array<i32>} : memref<8x32xf32, #tpu.memory_space<vmem>>, vector<8x32xf32>,
    } else {
    }
    %c0 = arith.constant 0 : index
    %c0_1 = arith.constant 0 : index
    %3 = vector.load %arg22[%c0, %c0_1] : memref<8x32xf32, #tpu.memory_space<vmem>>, vector<8x32xf32>
    %c0_2 = arith.constant 0 : index
    %c0_3 = arith.constant 0 : index
    %c0_4 = arith.constant 0 : index
    %4 = vector.load %arg3[%c0_2, %c0_3, %c0_4] : memref<1x1x8xf32, #tpu.memory_space<vmem>>, vector<1x1x8xf32>
    %cst = arith.constant 1.000000e+00 : f32
    %5 = vector.broadcast %cst : f32 to vector<1x1x8xf32>
    %6 = arith.subf %5, %4 : vector<1x1x8xf32>
    %cst_5 = arith.constant -1.000000e+09 : f32
    %7 = vector.broadcast %cst_5 : f32 to vector<1x1x8xf32>
    %8 = arith.mulf %6, %7 : vector<1x1x8xf32>
    %c0_6 = arith.constant 0 : index
    %c0_7 = arith.constant 0 : index
    %c0_8 = arith.constant 0 : index
    %9 = vector.load %arg9[%c0_6, %c0_7, %c0_8] : memref<1x32x96xf32, #tpu.memory_space<vmem>>, vector<1x32x96xf32>
    %10 = vector.shape_cast %9 : vector<1x32x96xf32> to vector<32x96xf32>
    %cst_9 = arith.constant dense<0.000000e+00> : vector<8x96xf32>
    %11 = tpu.matmul %3, %10, %cst_9 {dimension_numbers = #tpu.dot_dimension_numbers<[1], [0], [0], [1], [0, 0, 1, 1], [], []>} : vector<8x32xf32>, vector<32x96xf32>, vector<8x96xf32> -> vector<8x96xf32>
    %c0_10 = arith.constant 0 : index
    %c0_11 = arith.constant 0 : index
    %c0_12 = arith.constant 0 : index
    %12 = vector.load %arg10[%c0_10, %c0_11, %c0_12] : memref<1x1x96xf32, #tpu.memory_space<vmem>>, vector<1x1x96xf32>
    %13 = vector.shape_cast %12 : vector<1x1x96xf32> to vector<1x96xf32>
    %14 = vector.broadcast %13 : vector<1x96xf32> to vector<8x96xf32>
    %15 = arith.addf %11, %14 : vector<8x96xf32>
    %cst_13 = arith.constant 0.000000e+00 : f32
    %16 = vector.broadcast %cst_13 : f32 to vector<8x32xf32>
    %17 = vector.extract_strided_slice %15 {offsets = [0, 0], sizes = [8, 8], strides = [1, 1]} : vector<8x96xf32> to vector<8x8xf32>
    %cst_14 = arith.constant 0.353553385 : f32
    %18 = vector.broadcast %cst_14 : f32 to vector<8x8xf32>
    %19 = arith.mulf %17, %18 : vector<8x8xf32>
    %20 = vector.shape_cast %19 : vector<8x8xf32> to vector<1x8x8xf32>
    %21 = vector.extract_strided_slice %15 {offsets = [0, 32], sizes = [8, 8], strides = [1, 1]} : vector<8x96xf32> to vector<8x8xf32>
    %22 = vector.shape_cast %21 : vector<8x8xf32> to vector<1x8x8xf32>
    %23 = vector.extract_strided_slice %15 {offsets = [0, 64], sizes = [8, 8], strides = [1, 1]} : vector<8x96xf32> to vector<8x8xf32>
    %24 = vector.shape_cast %23 : vector<8x8xf32> to vector<1x8x8xf32>
    "tpu.trace_start"() <{level = 10 : i32, message = "bqd,bkd->bqk"}> : () -> ()
    %cst_15 = arith.constant dense<0.000000e+00> : vector<1x8x8xf32>
    %25 = tpu.matmul %20, %22, %cst_15 {dimension_numbers = #tpu.dot_dimension_numbers<[2], [2], [1], [1], [0, 0, 0, 1, 1, 1], [0], [0]>} : vector<1x8x8xf32>, vector<1x8x8xf32>, vector<1x8x8xf32> -> vector<1x8x8xf32>
    "tpu.trace_stop"() : () -> ()
    %26 = vector.broadcast %8 : vector<1x1x8xf32> to vector<1x8x8xf32>
    %27 = arith.addf %25, %26 : vector<1x8x8xf32>
    %cst_16 = arith.constant dense<0xFF800000> : vector<1x8xf32>
    %28 = vector.multi_reduction <maximumf>, %27, %cst_16 [2] : vector<1x8x8xf32> to vector<1x8xf32>
    %29 = vector.shape_cast %28 : vector<1x8xf32> to vector<1x8x1xf32>
    %30 = vector.broadcast %29 : vector<1x8x1xf32> to vector<1x8x8xf32>
    %31 = arith.subf %27, %30 : vector<1x8x8xf32>
    %32 = math.exp %31 : vector<1x8x8xf32>
    %cst_17 = arith.constant dense<0.000000e+00> : vector<1x8xf32>
    %33 = vector.multi_reduction <add>, %32, %cst_17 [2] : vector<1x8x8xf32> to vector<1x8xf32>
    %34 = vector.shape_cast %33 : vector<1x8xf32> to vector<1x8x1xf32>
    %35 = tpu.reciprocal %34 {approx = true} : vector<1x8x1xf32> -> vector<1x8x1xf32>
    %36 = vector.broadcast %35 : vector<1x8x1xf32> to vector<1x8x8xf32>
    %37 = arith.mulf %32, %36 : vector<1x8x8xf32>
    "tpu.trace_start"() <{level = 10 : i32, message = "bqk,bkd->bqd"}> : () -> ()
    %cst_18 = arith.constant dense<0.000000e+00> : vector<1x8x8xf32>
    %38 = tpu.matmul %37, %24, %cst_18 {dimension_numbers = #tpu.dot_dimension_numbers<[2], [1], [1], [2], [0, 0, 0, 1, 1, 2], [0], [0]>} : vector<1x8x8xf32>, vector<1x8x8xf32>, vector<1x8x8xf32> -> vector<1x8x8xf32>
    "tpu.trace_stop"() : () -> ()
    %39 = vector.shape_cast %38 : vector<1x8x8xf32> to vector<8x8xf32>
    %c0_19 = arith.constant 0 : index
    %c0_20 = arith.constant 0 : index
    %c0_21 = arith.constant 0 : index
    %40 = vector.load %arg11[%c0_19, %c0_20, %c0_21] : memref<1x32x32xf32, #tpu.memory_space<vmem>>, vector<1x8x32xf32>
    %41 = vector.shape_cast %40 : vector<1x8x32xf32> to vector<8x32xf32>
    %cst_22 = arith.constant dense<0.000000e+00> : vector<8x32xf32>
    %42 = tpu.matmul %39, %41, %cst_22 {dimension_numbers = #tpu.dot_dimension_numbers<[1], [0], [0], [1], [0, 0, 1, 1], [], []>} : vector<8x8xf32>, vector<8x32xf32>, vector<8x32xf32> -> vector<8x32xf32>
    %43 = arith.addf %16, %42 : vector<8x32xf32>
    %44 = vector.extract_strided_slice %15 {offsets = [0, 8], sizes = [8, 8], strides = [1, 1]} : vector<8x96xf32> to vector<8x8xf32>
    %cst_23 = arith.constant 0.353553385 : f32
    %45 = vector.broadcast %cst_23 : f32 to vector<8x8xf32>
    %46 = arith.mulf %44, %45 : vector<8x8xf32>
    %47 = vector.shape_cast %46 : vector<8x8xf32> to vector<1x8x8xf32>
    %48 = vector.extract_strided_slice %15 {offsets = [0, 40], sizes = [8, 8], strides = [1, 1]} : vector<8x96xf32> to vector<8x8xf32>
    %49 = vector.shape_cast %48 : vector<8x8xf32> to vector<1x8x8xf32>
    %50 = vector.extract_strided_slice %15 {offsets = [0, 72], sizes = [8, 8], strides = [1, 1]} : vector<8x96xf32> to vector<8x8xf32>
    %51 = vector.shape_cast %50 : vector<8x8xf32> to vector<1x8x8xf32>
    "tpu.trace_start"() <{level = 10 : i32, message = "bqd,bkd->bqk"}> : () -> ()
    %cst_24 = arith.constant dense<0.000000e+00> : vector<1x8x8xf32>
    %52 = tpu.matmul %47, %49, %cst_24 {dimension_numbers = #tpu.dot_dimension_numbers<[2], [2], [1], [1], [0, 0, 0, 1, 1, 1], [0], [0]>} : vector<1x8x8xf32>, vector<1x8x8xf32>, vector<1x8x8xf32> -> vector<1x8x8xf32>
    "tpu.trace_stop"() : () -> ()
    %53 = vector.broadcast %8 : vector<1x1x8xf32> to vector<1x8x8xf32>
    %54 = arith.addf %52, %53 : vector<1x8x8xf32>
    %cst_25 = arith.constant dense<0xFF800000> : vector<1x8xf32>
    %55 = vector.multi_reduction <maximumf>, %54, %cst_25 [2] : vector<1x8x8xf32> to vector<1x8xf32>
    %56 = vector.shape_cast %55 : vector<1x8xf32> to vector<1x8x1xf32>
    %57 = vector.broadcast %56 : vector<1x8x1xf32> to vector<1x8x8xf32>
    %58 = arith.subf %54, %57 : vector<1x8x8xf32>
    %59 = math.exp %58 : vector<1x8x8xf32>
    %cst_26 = arith.constant dense<0.000000e+00> : vector<1x8xf32>
    %60 = vector.multi_reduction <add>, %59, %cst_26 [2] : vector<1x8x8xf32> to vector<1x8xf32>
    %61 = vector.shape_cast %60 : vector<1x8xf32> to vector<1x8x1xf32>
    %62 = tpu.reciprocal %61 {approx = true} : vector<1x8x1xf32> -> vector<1x8x1xf32>
    %63 = vector.broadcast %62 : vector<1x8x1xf32> to vector<1x8x8xf32>
    %64 = arith.mulf %59, %63 : vector<1x8x8xf32>
    "tpu.trace_start"() <{level = 10 : i32, message = "bqk,bkd->bqd"}> : () -> ()
    %cst_27 = arith.constant dense<0.000000e+00> : vector<1x8x8xf32>
    %65 = tpu.matmul %64, %51, %cst_27 {dimension_numbers = #tpu.dot_dimension_numbers<[2], [1], [1], [2], [0, 0, 0, 1, 1, 2], [0], [0]>} : vector<1x8x8xf32>, vector<1x8x8xf32>, vector<1x8x8xf32> -> vector<1x8x8xf32>
    "tpu.trace_stop"() : () -> ()
    %66 = vector.shape_cast %65 : vector<1x8x8xf32> to vector<8x8xf32>
    %c0_28 = arith.constant 0 : index
    %c8 = arith.constant 8 : index
    %c0_29 = arith.constant 0 : index
    %67 = vector.load %arg11[%c0_28, %c8, %c0_29] : memref<1x32x32xf32, #tpu.memory_space<vmem>>, vector<1x8x32xf32>
    %68 = vector.shape_cast %67 : vector<1x8x32xf32> to vector<8x32xf32>
    %cst_30 = arith.constant dense<0.000000e+00> : vector<8x32xf32>
    %69 = tpu.matmul %66, %68, %cst_30 {dimension_numbers = #tpu.dot_dimension_numbers<[1], [0], [0], [1], [0, 0, 1, 1], [], []>} : vector<8x8xf32>, vector<8x32xf32>, vector<8x32xf32> -> vector<8x32xf32>
    %70 = arith.addf %43, %69 : vector<8x32xf32>
    %71 = vector.extract_strided_slice %15 {offsets = [0, 16], sizes = [8, 8], strides = [1, 1]} : vector<8x96xf32> to vector<8x8xf32>
    %cst_31 = arith.constant 0.353553385 : f32
    %72 = vector.broadcast %cst_31 : f32 to vector<8x8xf32>
    %73 = arith.mulf %71, %72 : vector<8x8xf32>
    %74 = vector.shape_cast %73 : vector<8x8xf32> to vector<1x8x8xf32>
    %75 = vector.extract_strided_slice %15 {offsets = [0, 48], sizes = [8, 8], strides = [1, 1]} : vector<8x96xf32> to vector<8x8xf32>
    %76 = vector.shape_cast %75 : vector<8x8xf32> to vector<1x8x8xf32>
    %77 = vector.extract_strided_slice %15 {offsets = [0, 80], sizes = [8, 8], strides = [1, 1]} : vector<8x96xf32> to vector<8x8xf32>
    %78 = vector.shape_cast %77 : vector<8x8xf32> to vector<1x8x8xf32>
    "tpu.trace_start"() <{level = 10 : i32, message = "bqd,bkd->bqk"}> : () -> ()
    %cst_32 = arith.constant dense<0.000000e+00> : vector<1x8x8xf32>
    %79 = tpu.matmul %74, %76, %cst_32 {dimension_numbers = #tpu.dot_dimension_numbers<[2], [2], [1], [1], [0, 0, 0, 1, 1, 1], [0], [0]>} : vector<1x8x8xf32>, vector<1x8x8xf32>, vector<1x8x8xf32> -> vector<1x8x8xf32>
    "tpu.trace_stop"() : () -> ()
    %80 = vector.broadcast %8 : vector<1x1x8xf32> to vector<1x8x8xf32>
    %81 = arith.addf %79, %80 : vector<1x8x8xf32>
    %cst_33 = arith.constant dense<0xFF800000> : vector<1x8xf32>
    %82 = vector.multi_reduction <maximumf>, %81, %cst_33 [2] : vector<1x8x8xf32> to vector<1x8xf32>
    %83 = vector.shape_cast %82 : vector<1x8xf32> to vector<1x8x1xf32>
    %84 = vector.broadcast %83 : vector<1x8x1xf32> to vector<1x8x8xf32>
    %85 = arith.subf %81, %84 : vector<1x8x8xf32>
    %86 = math.exp %85 : vector<1x8x8xf32>
    %cst_34 = arith.constant dense<0.000000e+00> : vector<1x8xf32>
    %87 = vector.multi_reduction <add>, %86, %cst_34 [2] : vector<1x8x8xf32> to vector<1x8xf32>
    %88 = vector.shape_cast %87 : vector<1x8xf32> to vector<1x8x1xf32>
    %89 = tpu.reciprocal %88 {approx = true} : vector<1x8x1xf32> -> vector<1x8x1xf32>
    %90 = vector.broadcast %89 : vector<1x8x1xf32> to vector<1x8x8xf32>
    %91 = arith.mulf %86, %90 : vector<1x8x8xf32>
    "tpu.trace_start"() <{level = 10 : i32, message = "bqk,bkd->bqd"}> : () -> ()
    %cst_35 = arith.constant dense<0.000000e+00> : vector<1x8x8xf32>
    %92 = tpu.matmul %91, %78, %cst_35 {dimension_numbers = #tpu.dot_dimension_numbers<[2], [1], [1], [2], [0, 0, 0, 1, 1, 2], [0], [0]>} : vector<1x8x8xf32>, vector<1x8x8xf32>, vector<1x8x8xf32> -> vector<1x8x8xf32>
    "tpu.trace_stop"() : () -> ()
    %93 = vector.shape_cast %92 : vector<1x8x8xf32> to vector<8x8xf32>
    %c0_36 = arith.constant 0 : index
    %c16 = arith.constant 16 : index
    %c0_37 = arith.constant 0 : index
    %94 = vector.load %arg11[%c0_36, %c16, %c0_37] : memref<1x32x32xf32, #tpu.memory_space<vmem>>, vector<1x8x32xf32>
    %95 = vector.shape_cast %94 : vector<1x8x32xf32> to vector<8x32xf32>
    %cst_38 = arith.constant dense<0.000000e+00> : vector<8x32xf32>
    %96 = tpu.matmul %93, %95, %cst_38 {dimension_numbers = #tpu.dot_dimension_numbers<[1], [0], [0], [1], [0, 0, 1, 1], [], []>} : vector<8x8xf32>, vector<8x32xf32>, vector<8x32xf32> -> vector<8x32xf32>
    %97 = arith.addf %70, %96 : vector<8x32xf32>
    %98 = vector.extract_strided_slice %15 {offsets = [0, 24], sizes = [8, 8], strides = [1, 1]} : vector<8x96xf32> to vector<8x8xf32>
    %cst_39 = arith.constant 0.353553385 : f32
    %99 = vector.broadcast %cst_39 : f32 to vector<8x8xf32>
    %100 = arith.mulf %98, %99 : vector<8x8xf32>
    %101 = vector.shape_cast %100 : vector<8x8xf32> to vector<1x8x8xf32>
    %102 = vector.extract_strided_slice %15 {offsets = [0, 56], sizes = [8, 8], strides = [1, 1]} : vector<8x96xf32> to vector<8x8xf32>
    %103 = vector.shape_cast %102 : vector<8x8xf32> to vector<1x8x8xf32>
    %104 = vector.extract_strided_slice %15 {offsets = [0, 88], sizes = [8, 8], strides = [1, 1]} : vector<8x96xf32> to vector<8x8xf32>
    %105 = vector.shape_cast %104 : vector<8x8xf32> to vector<1x8x8xf32>
    "tpu.trace_start"() <{level = 10 : i32, message = "bqd,bkd->bqk"}> : () -> ()
    %cst_40 = arith.constant dense<0.000000e+00> : vector<1x8x8xf32>
    %106 = tpu.matmul %101, %103, %cst_40 {dimension_numbers = #tpu.dot_dimension_numbers<[2], [2], [1], [1], [0, 0, 0, 1, 1, 1], [0], [0]>} : vector<1x8x8xf32>, vector<1x8x8xf32>, vector<1x8x8xf32> -> vector<1x8x8xf32>
    "tpu.trace_stop"() : () -> ()
    %107 = vector.broadcast %8 : vector<1x1x8xf32> to vector<1x8x8xf32>
    %108 = arith.addf %106, %107 : vector<1x8x8xf32>
    %cst_41 = arith.constant dense<0xFF800000> : vector<1x8xf32>
    %109 = vector.multi_reduction <maximumf>, %108, %cst_41 [2] : vector<1x8x8xf32> to vector<1x8xf32>
    %110 = vector.shape_cast %109 : vector<1x8xf32> to vector<1x8x1xf32>
    %111 = vector.broadcast %110 : vector<1x8x1xf32> to vector<1x8x8xf32>
    %112 = arith.subf %108, %111 : vector<1x8x8xf32>
    %113 = math.exp %112 : vector<1x8x8xf32>
    %cst_42 = arith.constant dense<0.000000e+00> : vector<1x8xf32>
    %114 = vector.multi_reduction <add>, %113, %cst_42 [2] : vector<1x8x8xf32> to vector<1x8xf32>
    %115 = vector.shape_cast %114 : vector<1x8xf32> to vector<1x8x1xf32>
    %116 = tpu.reciprocal %115 {approx = true} : vector<1x8x1xf32> -> vector<1x8x1xf32>
    %117 = vector.broadcast %116 : vector<1x8x1xf32> to vector<1x8x8xf32>
    %118 = arith.mulf %113, %117 : vector<1x8x8xf32>
    "tpu.trace_start"() <{level = 10 : i32, message = "bqk,bkd->bqd"}> : () -> ()
    %cst_43 = arith.constant dense<0.000000e+00> : vector<1x8x8xf32>
    %119 = tpu.matmul %118, %105, %cst_43 {dimension_numbers = #tpu.dot_dimension_numbers<[2], [1], [1], [2], [0, 0, 0, 1, 1, 2], [0], [0]>} : vector<1x8x8xf32>, vector<1x8x8xf32>, vector<1x8x8xf32> -> vector<1x8x8xf32>
    "tpu.trace_stop"() : () -> ()
    %120 = vector.shape_cast %119 : vector<1x8x8xf32> to vector<8x8xf32>
    %c0_44 = arith.constant 0 : index
    %c24 = arith.constant 24 : index
    %c0_45 = arith.constant 0 : index
    %121 = vector.load %arg11[%c0_44, %c24, %c0_45] : memref<1x32x32xf32, #tpu.memory_space<vmem>>, vector<1x8x32xf32>
    %122 = vector.shape_cast %121 : vector<1x8x32xf32> to vector<8x32xf32>
    %cst_46 = arith.constant dense<0.000000e+00> : vector<8x32xf32>
    %123 = tpu.matmul %120, %122, %cst_46 {dimension_numbers = #tpu.dot_dimension_numbers<[1], [0], [0], [1], [0, 0, 1, 1], [], []>} : vector<8x8xf32>, vector<8x32xf32>, vector<8x32xf32> -> vector<8x32xf32>
    %124 = arith.addf %97, %123 : vector<8x32xf32>
    %c0_47 = arith.constant 0 : index
    %c0_48 = arith.constant 0 : index
    %c0_49 = arith.constant 0 : index
    %125 = vector.load %arg12[%c0_47, %c0_48, %c0_49] : memref<1x1x32xf32, #tpu.memory_space<vmem>>, vector<1x1x32xf32>
    %126 = vector.shape_cast %125 : vector<1x1x32xf32> to vector<1x32xf32>
    %127 = vector.broadcast %126 : vector<1x32xf32> to vector<8x32xf32>
    %128 = arith.addf %124, %127 : vector<8x32xf32>
    %129 = arith.addf %3, %128 : vector<8x32xf32>
    %c0_50 = arith.constant 0 : index
    %c0_51 = arith.constant 0 : index
    %c0_52 = arith.constant 0 : index
    %130 = vector.load %arg13[%c0_50, %c0_51, %c0_52] : memref<1x1x32xf32, #tpu.memory_space<vmem>>, vector<1x1x32xf32>
    %131 = vector.shape_cast %130 : vector<1x1x32xf32> to vector<1x32xf32>
    %c0_53 = arith.constant 0 : index
    %c0_54 = arith.constant 0 : index
    %c0_55 = arith.constant 0 : index
    %132 = vector.load %arg14[%c0_53, %c0_54, %c0_55] : memref<1x1x32xf32, #tpu.memory_space<vmem>>, vector<1x1x32xf32>
    %133 = vector.shape_cast %132 : vector<1x1x32xf32> to vector<1x32xf32>
    %cst_56 = arith.constant dense<0.000000e+00> : vector<8xf32>
    %134 = vector.multi_reduction <add>, %129, %cst_56 [1] : vector<8x32xf32> to vector<8xf32>
    %135 = vector.shape_cast %134 : vector<8xf32> to vector<8x1xf32>
    %cst_57 = arith.constant 3.200000e+01 : f32
    %136 = vector.broadcast %cst_57 : f32 to vector<8x1xf32>
    %137 = arith.divf %135, %136 : vector<8x1xf32>
    %138 = arith.mulf %129, %129 : vector<8x32xf32>
    %cst_58 = arith.constant dense<0.000000e+00> : vector<8xf32>
    %139 = vector.multi_reduction <add>, %138, %cst_58 [1] : vector<8x32xf32> to vector<8xf32>
    %140 = vector.shape_cast %139 : vector<8xf32> to vector<8x1xf32>
    %cst_59 = arith.constant 3.200000e+01 : f32
    %141 = vector.broadcast %cst_59 : f32 to vector<8x1xf32>
    %142 = arith.divf %140, %141 : vector<8x1xf32>
    %143 = arith.mulf %137, %137 : vector<8x1xf32>
    %144 = arith.subf %142, %143 : vector<8x1xf32>
    %145 = vector.broadcast %137 : vector<8x1xf32> to vector<8x32xf32>
    %146 = arith.subf %129, %145 : vector<8x32xf32>
    %cst_60 = arith.constant 9.99999974E-6 : f32
    %147 = vector.broadcast %cst_60 : f32 to vector<8x1xf32>
    %148 = arith.addf %144, %147 : vector<8x1xf32>
    %149 = math.rsqrt %148 : vector<8x1xf32>
    %150 = vector.broadcast %149 : vector<8x1xf32> to vector<8x32xf32>
    %151 = arith.mulf %146, %150 : vector<8x32xf32>
    %152 = vector.broadcast %131 : vector<1x32xf32> to vector<8x32xf32>
    %153 = arith.mulf %151, %152 : vector<8x32xf32>
    %154 = vector.broadcast %133 : vector<1x32xf32> to vector<8x32xf32>
    %155 = arith.addf %153, %154 : vector<8x32xf32>
    %c0_61 = arith.constant 0 : index
    %c0_62 = arith.constant 0 : index
    %c0_63 = arith.constant 0 : index
    %156 = vector.load %arg15[%c0_61, %c0_62, %c0_63] : memref<1x32x128xf32, #tpu.memory_space<vmem>>, vector<1x32x128xf32>
    %157 = vector.shape_cast %156 : vector<1x32x128xf32> to vector<32x128xf32>
    %cst_64 = arith.constant dense<0.000000e+00> : vector<8x128xf32>
    %158 = tpu.matmul %155, %157, %cst_64 {dimension_numbers = #tpu.dot_dimension_numbers<[1], [0], [0], [1], [0, 0, 1, 1], [], []>} : vector<8x32xf32>, vector<32x128xf32>, vector<8x128xf32> -> vector<8x128xf32>
    %c0_65 = arith.constant 0 : index
    %c0_66 = arith.constant 0 : index
    %c0_67 = arith.constant 0 : index
    %159 = vector.load %arg16[%c0_65, %c0_66, %c0_67] : memref<1x1x128xf32, #tpu.memory_space<vmem>>, vector<1x1x128xf32>
    %160 = vector.shape_cast %159 : vector<1x1x128xf32> to vector<1x128xf32>
    %161 = vector.broadcast %160 : vector<1x128xf32> to vector<8x128xf32>
    %162 = arith.addf %158, %161 : vector<8x128xf32>
    %cst_68 = arith.constant 0.000000e+00 : f32
    %163 = vector.broadcast %cst_68 : f32 to vector<8x128xf32>
    %164 = arith.maximumf %162, %163 : vector<8x128xf32>
    %c0_69 = arith.constant 0 : index
    %c0_70 = arith.constant 0 : index
    %c0_71 = arith.constant 0 : index
    %165 = vector.load %arg17[%c0_69, %c0_70, %c0_71] : memref<1x128x32xf32, #tpu.memory_space<vmem>>, vector<1x128x32xf32>
    %166 = vector.shape_cast %165 : vector<1x128x32xf32> to vector<128x32xf32>
    %cst_72 = arith.constant dense<0.000000e+00> : vector<8x32xf32>
    %167 = tpu.matmul %164, %166, %cst_72 {dimension_numbers = #tpu.dot_dimension_numbers<[1], [0], [0], [1], [0, 0, 1, 1], [], []>} : vector<8x128xf32>, vector<128x32xf32>, vector<8x32xf32> -> vector<8x32xf32>
    %c0_73 = arith.constant 0 : index
    %c0_74 = arith.constant 0 : index
    %c0_75 = arith.constant 0 : index
    %168 = vector.load %arg18[%c0_73, %c0_74, %c0_75] : memref<1x1x32xf32, #tpu.memory_space<vmem>>, vector<1x1x32xf32>
    %169 = vector.shape_cast %168 : vector<1x1x32xf32> to vector<1x32xf32>
    %170 = vector.broadcast %169 : vector<1x32xf32> to vector<8x32xf32>
    %171 = arith.addf %167, %170 : vector<8x32xf32>
    %172 = arith.addf %155, %171 : vector<8x32xf32>
    %c0_76 = arith.constant 0 : index
    %c0_77 = arith.constant 0 : index
    %c0_78 = arith.constant 0 : index
    %173 = vector.load %arg19[%c0_76, %c0_77, %c0_78] : memref<1x1x32xf32, #tpu.memory_space<vmem>>, vector<1x1x32xf32>
    %174 = vector.shape_cast %173 : vector<1x1x32xf32> to vector<1x32xf32>
    %c0_79 = arith.constant 0 : index
    %c0_80 = arith.constant 0 : index
    %c0_81 = arith.constant 0 : index
    %175 = vector.load %arg20[%c0_79, %c0_80, %c0_81] : memref<1x1x32xf32, #tpu.memory_space<vmem>>, vector<1x1x32xf32>
    %176 = vector.shape_cast %175 : vector<1x1x32xf32> to vector<1x32xf32>
    %cst_82 = arith.constant dense<0.000000e+00> : vector<8xf32>
    %177 = vector.multi_reduction <add>, %172, %cst_82 [1] : vector<8x32xf32> to vector<8xf32>
    %178 = vector.shape_cast %177 : vector<8xf32> to vector<8x1xf32>
    %cst_83 = arith.constant 3.200000e+01 : f32
    %179 = vector.broadcast %cst_83 : f32 to vector<8x1xf32>
    %180 = arith.divf %178, %179 : vector<8x1xf32>
    %181 = arith.mulf %172, %172 : vector<8x32xf32>
    %cst_84 = arith.constant dense<0.000000e+00> : vector<8xf32>
    %182 = vector.multi_reduction <add>, %181, %cst_84 [1] : vector<8x32xf32> to vector<8xf32>
    %183 = vector.shape_cast %182 : vector<8xf32> to vector<8x1xf32>
    %cst_85 = arith.constant 3.200000e+01 : f32
    %184 = vector.broadcast %cst_85 : f32 to vector<8x1xf32>
    %185 = arith.divf %183, %184 : vector<8x1xf32>
    %186 = arith.mulf %180, %180 : vector<8x1xf32>
    %187 = arith.subf %185, %186 : vector<8x1xf32>
    %188 = vector.broadcast %180 : vector<8x1xf32> to vector<8x32xf32>
    %189 = arith.subf %172, %188 : vector<8x32xf32>
    %cst_86 = arith.constant 9.99999974E-6 : f32
    %190 = vector.broadcast %cst_86 : f32 to vector<8x1xf32>
    %191 = arith.addf %187, %190 : vector<8x1xf32>
    %192 = math.rsqrt %191 : vector<8x1xf32>
    %193 = vector.broadcast %192 : vector<8x1xf32> to vector<8x32xf32>
    %194 = arith.mulf %189, %193 : vector<8x32xf32>
    %195 = vector.broadcast %174 : vector<1x32xf32> to vector<8x32xf32>
    %196 = arith.mulf %194, %195 : vector<8x32xf32>
    %197 = vector.broadcast %176 : vector<1x32xf32> to vector<8x32xf32>
    %198 = arith.addf %196, %197 : vector<8x32xf32>
    %c0_87 = arith.constant 0 : index
    %c0_88 = arith.constant 0 : index
    %199 = vector.load %arg22[%c0_87, %c0_88] : memref<8x32xf32, #tpu.memory_space<vmem>>, vector<8x32xf32>
    tpu.vector_store %arg22[%c0_87, %c0_88], %198 {strides = array<i32>} : memref<8x32xf32, #tpu.memory_space<vmem>>, vector<8x32xf32>,
    %c1_i32 = arith.constant 1 : i32
    %200 = arith.cmpi eq, %arg1, %c1_i32 : i32
    %201 = arith.extui %200 : i1 to i32
    %c0_i32_89 = arith.constant 0 : i32
    %202 = arith.cmpi ne, %201, %c0_i32_89 : i32
    scf.if %202 {
      %c0_90 = arith.constant 0 : index
      %c0_91 = arith.constant 0 : index
      %203 = vector.load %arg21[%c0_90, %c0_91] : memref<8x32xf32, #tpu.memory_space<vmem>>, vector<8x32xf32>
      tpu.vector_store %arg21[%c0_90, %c0_91], %198 {strides = array<i32>} : memref<8x32xf32, #tpu.memory_space<vmem>>, vector<8x32xf32>,
    } else {
    }
    return
  }
  func.func @transform_0(%arg0: i32, %arg1: i32) -> (i32, i32, i32) {
    %c0_i32 = arith.constant 0 : i32
    %c0_i32_0 = arith.constant 0 : i32
    %c0_i32_1 = arith.constant 0 : i32
    return %arg0, %c0_i32, %c0_i32_0 : i32, i32, i32
  }
  func.func @transform_1(%arg0: i32, %arg1: i32) -> (i32, i32, i32) {
    %c0_i32 = arith.constant 0 : i32
    %c0_i32_0 = arith.constant 0 : i32
    %c0_i32_1 = arith.constant 0 : i32
    return %arg0, %c0_i32, %c0_i32_0 : i32, i32, i32
  }
  func.func @transform_2(%arg0: i32, %arg1: i32) -> (i32, i32) {
    %c0_i32 = arith.constant 0 : i32
    %c0_i32_0 = arith.constant 0 : i32
    %c0_i32_1 = arith.constant 0 : i32
    return %c0_i32, %c0_i32_0 : i32, i32
  }
  func.func @transform_3(%arg0: i32, %arg1: i32) -> (i32, i32) {
    %c0_i32 = arith.constant 0 : i32
    %c0_i32_0 = arith.constant 0 : i32
    %c0_i32_1 = arith.constant 0 : i32
    return %c0_i32, %c0_i32_0 : i32, i32
  }
  func.func @transform_4(%arg0: i32, %arg1: i32) -> (i32, i32) {
    %c0_i32 = arith.constant 0 : i32
    %c0_i32_0 = arith.constant 0 : i32
    %c0_i32_1 = arith.constant 0 : i32
    return %c0_i32, %c0_i32_0 : i32, i32
  }
  func.func @transform_5(%arg0: i32, %arg1: i32) -> (i32, i32) {
    %c0_i32 = arith.constant 0 : i32
    %c0_i32_0 = arith.constant 0 : i32
    %c0_i32_1 = arith.constant 0 : i32
    return %c0_i32, %c0_i32_0 : i32, i32
  }
  func.func @transform_6(%arg0: i32, %arg1: i32) -> (i32, i32) {
    %c0_i32 = arith.constant 0 : i32
    %c0_i32_0 = arith.constant 0 : i32
    %c0_i32_1 = arith.constant 0 : i32
    return %c0_i32, %c0_i32_0 : i32, i32
  }
  func.func @transform_7(%arg0: i32, %arg1: i32) -> (i32, i32, i32) {
    %c0_i32 = arith.constant 0 : i32
    %c0_i32_0 = arith.constant 0 : i32
    %c0_i32_1 = arith.constant 0 : i32
    return %arg1, %c0_i32, %c0_i32_0 : i32, i32, i32
  }
  func.func @transform_8(%arg0: i32, %arg1: i32) -> (i32, i32, i32) {
    %c0_i32 = arith.constant 0 : i32
    %c0_i32_0 = arith.constant 0 : i32
    %c0_i32_1 = arith.constant 0 : i32
    return %arg1, %c0_i32, %c0_i32_0 : i32, i32, i32
  }
  func.func @transform_9(%arg0: i32, %arg1: i32) -> (i32, i32, i32) {
    %c0_i32 = arith.constant 0 : i32
    %c0_i32_0 = arith.constant 0 : i32
    %c0_i32_1 = arith.constant 0 : i32
    return %arg1, %c0_i32, %c0_i32_0 : i32, i32, i32
  }
  func.func @transform_10(%arg0: i32, %arg1: i32) -> (i32, i32, i32) {
    %c0_i32 = arith.constant 0 : i32
    %c0_i32_0 = arith.constant 0 : i32
    %c0_i32_1 = arith.constant 0 : i32
    return %arg1, %c0_i32, %c0_i32_0 : i32, i32, i32
  }
  func.func @transform_11(%arg0: i32, %arg1: i32) -> (i32, i32, i32) {
    %c0_i32 = arith.constant 0 : i32
    %c0_i32_0 = arith.constant 0 : i32
    %c0_i32_1 = arith.constant 0 : i32
    return %arg1, %c0_i32, %c0_i32_0 : i32, i32, i32
  }
  func.func @transform_12(%arg0: i32, %arg1: i32) -> (i32, i32, i32) {
    %c0_i32 = arith.constant 0 : i32
    %c0_i32_0 = arith.constant 0 : i32
    %c0_i32_1 = arith.constant 0 : i32
    return %arg1, %c0_i32, %c0_i32_0 : i32, i32, i32
  }
  func.func @transform_13(%arg0: i32, %arg1: i32) -> (i32, i32, i32) {
    %c0_i32 = arith.constant 0 : i32
    %c0_i32_0 = arith.constant 0 : i32
    %c0_i32_1 = arith.constant 0 : i32
    return %arg1, %c0_i32, %c0_i32_0 : i32, i32, i32
  }
  func.func @transform_14(%arg0: i32, %arg1: i32) -> (i32, i32, i32) {
    %c0_i32 = arith.constant 0 : i32
    %c0_i32_0 = arith.constant 0 : i32
    %c0_i32_1 = arith.constant 0 : i32
    return %arg1, %c0_i32, %c0_i32_0 : i32, i32, i32
  }
  func.func @transform_15(%arg0: i32, %arg1: i32) -> (i32, i32, i32) {
    %c0_i32 = arith.constant 0 : i32
    %c0_i32_0 = arith.constant 0 : i32
    %c0_i32_1 = arith.constant 0 : i32
    return %arg1, %c0_i32, %c0_i32_0 : i32, i32, i32
  }
  func.func @transform_16(%arg0: i32, %arg1: i32) -> (i32, i32, i32) {
    %c0_i32 = arith.constant 0 : i32
    %c0_i32_0 = arith.constant 0 : i32
    %c0_i32_1 = arith.constant 0 : i32
    return %arg1, %c0_i32, %c0_i32_0 : i32, i32, i32
  }
  func.func @transform_17(%arg0: i32, %arg1: i32) -> (i32, i32, i32) {
    %c0_i32 = arith.constant 0 : i32
    %c0_i32_0 = arith.constant 0 : i32
    %c0_i32_1 = arith.constant 0 : i32
    return %arg1, %c0_i32, %c0_i32_0 : i32, i32, i32
  }
  func.func @transform_18(%arg0: i32, %arg1: i32) -> (i32, i32, i32) {
    %c0_i32 = arith.constant 0 : i32
    %c0_i32_0 = arith.constant 0 : i32
    %c0_i32_1 = arith.constant 0 : i32
    return %arg1, %c0_i32, %c0_i32_0 : i32, i32, i32
  }
  func.func @transform_19(%arg0: i32, %arg1: i32) -> (i32, i32) {
    %c0_i32 = arith.constant 0 : i32
    %c0_i32_0 = arith.constant 0 : i32
    return %arg0, %c0_i32 : i32, i32
  }
}

module attributes {stable_mosaic.version = 11 : i64} {
  func.func @decoder_kernel(%arg0: i32, %arg1: i32, %arg2: memref<16x32xf32, #tpu.memory_space<vmem>>, %arg3: memref<32x128xf32, #tpu.memory_space<vmem>>, %arg4: memref<1x128xf32, #tpu.memory_space<vmem>>, %arg5: memref<16x128xf32, #tpu.memory_space<vmem>>) attributes {dimension_semantics = [#tpu.dimension_semantics<parallel>, #tpu.dimension_semantics<parallel>], iteration_bounds = array<i64: 1, 1>, scalar_prefetch = 0 : i64, scratch_operands = 0 : i64, tpu.core_type = #tpu.core_type<tc>, window_params = [{transform_indices = @transform_0, window_bounds = array<i64: 16, 32>}, {transform_indices = @transform_1, window_bounds = array<i64: 32, 128>}, {transform_indices = @transform_2, window_bounds = array<i64: 1, 128>}, {transform_indices = @transform_3, window_bounds = array<i64: 16, 128>}]} {
    %c0 = arith.constant 0 : index
    %c0_0 = arith.constant 0 : index
    %0 = vector.load %arg2[%c0, %c0_0] : memref<16x32xf32, #tpu.memory_space<vmem>>, vector<16x32xf32>
    %c0_1 = arith.constant 0 : index
    %c0_2 = arith.constant 0 : index
    %1 = vector.load %arg3[%c0_1, %c0_2] : memref<32x128xf32, #tpu.memory_space<vmem>>, vector<32x128xf32>
    %cst = arith.constant dense<0.000000e+00> : vector<16x128xf32>
    %2 = tpu.matmul %0, %1, %cst {dimension_numbers = #tpu.dot_dimension_numbers<[1], [0], [0], [1], [0, 0, 1, 1], [], []>} : vector<16x32xf32>, vector<32x128xf32>, vector<16x128xf32> -> vector<16x128xf32>
    %c0_3 = arith.constant 0 : index
    %c0_4 = arith.constant 0 : index
    %3 = vector.load %arg4[%c0_3, %c0_4] : memref<1x128xf32, #tpu.memory_space<vmem>>, vector<1x128xf32>
    %4 = vector.broadcast %3 : vector<1x128xf32> to vector<16x128xf32>
    %5 = arith.addf %2, %4 : vector<16x128xf32>
    %c0_5 = arith.constant 0 : index
    %c0_6 = arith.constant 0 : index
    %6 = vector.load %arg5[%c0_5, %c0_6] : memref<16x128xf32, #tpu.memory_space<vmem>>, vector<16x128xf32>
    tpu.vector_store %arg5[%c0_5, %c0_6], %5 {strides = array<i32>} : memref<16x128xf32, #tpu.memory_space<vmem>>, vector<16x128xf32>,
    return
  }
  func.func @transform_0(%arg0: i32, %arg1: i32) -> (i32, i32) {
    %c0_i32 = arith.constant 0 : i32
    %c0_i32_0 = arith.constant 0 : i32
    return %arg0, %c0_i32 : i32, i32
  }
  func.func @transform_1(%arg0: i32, %arg1: i32) -> (i32, i32) {
    %c0_i32 = arith.constant 0 : i32
    %c0_i32_0 = arith.constant 0 : i32
    return %c0_i32, %arg1 : i32, i32
  }
  func.func @transform_2(%arg0: i32, %arg1: i32) -> (i32, i32) {
    %c0_i32 = arith.constant 0 : i32
    %c0_i32_0 = arith.constant 0 : i32
    return %c0_i32, %arg1 : i32, i32
  }
  func.func @transform_3(%arg0: i32, %arg1: i32) -> (i32, i32) {
    %c0_i32 = arith.constant 0 : i32
    return %arg0, %arg1 : i32, i32
  }
}

</mosaic_0001>

<llo_original>
// kernel: mlm_bert_forward.3
$region0: #{mlm_bert_forward.3}
  #allocation0 [shape = 'u32[]', space=smem, size = 0x4, offset = 0x4, fixed_abs, tag = 'smem constant byte address 0x4 - core index']
  #allocation1 [shape = 'u32[144,128]{1,0:T(1,128)}', space=vmem, size = 0x12000, scoped, tag = 'internal scratch']
  %s0 = inlined_call_operand.vmem [shape: f32[16,32], index: 0, kind: input, shape index: {}]
  %s1 = inlined_call_operand.vmem [shape: f32[32,128], index: 1, kind: input, shape index: {}]
  %s2 = inlined_call_operand.vmem [shape: f32[1,128], index: 2, kind: input, shape index: {}]
  %s3 = inlined_call_operand.vmem [shape: f32[16,128], index: 3, kind: output, shape index: {}]
  %s4 = sld [smem:[#allocation0]]
  $region22: #{mlm_bert_forward.3} parent=0
    _
  %s6 = ssub.s32 1, %s4
  %s7 = scalar_select 0, %s6, %s4
  // Predicated region
  $region2: #{mlm_bert_forward.3} parent=0 // pred_check
    _
  $region3: #{mlm_bert_forward.3} parent=0 // pred_check_branch
    %9 = sbr.rel (0) target = $region5
  $region4: #{mlm_bert_forward.3} parent=0 // pred_region
    _
  $region5: #{mlm_bert_forward.3} parent=0 // pred_fallthru
    _
  // Predicated region
  $region6: #{mlm_bert_forward.3} parent=0 // pred_check
    _
  $region7: #{mlm_bert_forward.3} parent=0 // pred_check_branch
    %11 = sbr.rel (0) target = $region9
  $region8: #{mlm_bert_forward.3} parent=0 // pred_region
    _
  $region9: #{mlm_bert_forward.3} parent=0 // pred_fallthru
    _
  // Predicated region
  $region10: #{mlm_bert_forward.3} parent=0 // pred_check
    _
  $region11: #{mlm_bert_forward.3} parent=0 // pred_check_branch
    %13 = sbr.rel (0) target = $region13
  $region12: #{mlm_bert_forward.3} parent=0 // pred_region
    _
  $region13: #{mlm_bert_forward.3} parent=0 // pred_fallthru
    _
  %v14 = vld [vmem:[%s0] sm:$0xff]
  %v15 = vld [vmem:[%s0 + $0x8] sm:$0xff]
  %v16 = vld [vmem:[%s1] sm:$0xff]
  %v17 = vld [vmem:[%s1 + $0x8] sm:$0xff]
  %v18 = vld [vmem:[%s1 + $0x10] sm:$0xff]
  %v19 = vld [vmem:[%s1 + $0x18] sm:$0xff]
  %v20 = vld [vmem:[%s2] sm:$0x1]
  %v22 = vlaneseq
  %v23 = vshrl.u32 %v22, 7
  %v24 = vsub.s32 0, %v23
  %v25 = vrot.slane %v20, %v24
  %vm27 = vcmask 261120
  %v29 = vsel %vm27, %v14, 0
  %v32 = vsel %vm27, %v15, 0
  %34 = vmatprep.subr.mxu0 0.0
  %35 = vmatpush1.msra.mxu0 %v16
  %36 = vmatprep.subr.mxu0 0.0
  %37 = vmatpush1.msra.mxu0 %v17
  %38 = vmatprep.subr.mxu0 0.0
  %39 = vmatpush1.msra.mxu0 %v18
  %40 = vmatprep.subr.mxu0 0.0
  %41 = vmatpush1.msra.mxu0 %v19
  %42 = vmatprep.subr.mxu0 0.0
  %43 = vmatpush1.msra.mxu0 0.0
  %44 = vmatprep.subr.mxu0 0.0
  %45 = vmatpush1.msra.mxu0 0.0
  %46 = vmatprep.subr.mxu0 0.0
  %47 = vmatpush1.msra.mxu0 0.0
  %48 = vmatprep.subr.mxu0 0.0
  %49 = vmatpush1.msra.mxu0 0.0
  %50 = vmatprep.subr.mxu0 0.0
  %51 = vmatpush1.msra.mxu0 0.0
  %52 = vmatprep.subr.mxu0 0.0
  %53 = vmatpush1.msra.mxu0 0.0
  %54 = vmatprep.subr.mxu0 0.0
  %55 = vmatpush1.msra.mxu0 0.0
  %56 = vmatprep.subr.mxu0 0.0
  %57 = vmatpush1.msra.mxu0 0.0
  %58 = vmatprep.subr.mxu0 0.0
  %59 = vmatpush1.msra.mxu0 0.0
  %60 = vmatprep.subr.mxu0 0.0
  %61 = vmatpush1.msra.mxu0 0.0
  %62 = vmatprep.subr.mxu0 0.0
  %63 = vmatpush1.msra.mxu0 0.0
  %64 = vmatprep.subr.mxu0 0.0
  %65 = vmatpush1.msra.mxu0 0.0
  %66 = vmatprep.subr.mxu0 0.0
  %67 = vmatpush1.msra.mxu0 0.0
  %68 = vmatprep.subr.mxu0 0.0
  %69 = vmatpush1.msra.mxu0 0.0
  %70 = vmatprep.subr.mxu0 0.0
  %71 = vmatpush1.msra.mxu0 0.0
  %72 = vmatprep.subr.mxu0 0.0
  %73 = vmatpush1.msra.mxu0 0.0
  %74 = vmatprep.subr.mxu0 0.0
  %75 = vmatpush1.msra.mxu0 0.0
  %76 = vmatprep.subr.mxu0 0.0
  %77 = vmatpush1.msra.mxu0 0.0
  %78 = vmatprep.subr.mxu0 0.0
  %79 = vmatpush1.msra.mxu0 0.0
  %80 = vmatprep.subr.mxu0 0.0
  %81 = vmatpush1.msra.mxu0 0.0
  %82 = vmatprep.subr.mxu0 0.0
  %83 = vmatpush1.msra.mxu0 0.0
  %84 = vmatprep.subr.mxu0 0.0
  %85 = vmatpush1.msra.mxu0 0.0
  %86 = vmatprep.subr.mxu0 0.0
  %87 = vmatpush1.msra.mxu0 0.0
  %88 = vmatprep.subr.mxu0 0.0
  %89 = vmatpush1.msra.mxu0 0.0
  %90 = vmatprep.subr.mxu0 0.0
  %91 = vmatpush1.msra.mxu0 0.0
  %92 = vmatprep.subr.mxu0 0.0
  %93 = vmatpush1.msra.mxu0 0.0
  %94 = vmatprep.subr.mxu0 0.0
  %95 = vmatpush1.msra.mxu0 0.0
  %96 = vmatprep.subr.mxu0 0.0
  %97 = vmatpush1.msra.mxu0 0.0
  %98 = vmatprep.mubr.f32.mxu0 0.0
  %99 = vmatmul.mubr.f32.gmra.mrb[0].mxu0 %v29
  %v100 = vpop.f32.mrb[0].mxu0
  %v101 = vadd.f32 %v25, %v100
  %v102 = vpop.f32.mrb[0].mxu0
  %103 = vmatprep.mubr.f32.mxu0 0.0
  %104 = vmatmul.mubr.f32.gmra.mrb[0].mxu0 %v32
  %v105 = vpop.f32.mrb[0].mxu0
  %v106 = vadd.f32 %v25, %v105
  %v107 = vpop.f32.mrb[0].mxu0
  %108 = vdwg.mxu0
  %109 = vst [vmem:[%s3] sm:$0xff] %v101
  %110 = vst [vmem:[%s3 + $0x8] sm:$0xff] %v106
  // Predicated region
  $region14: #{mlm_bert_forward.3} parent=0 // pred_check
    _
  $region15: #{mlm_bert_forward.3} parent=0 // pred_check_branch
    %112 = sbr.rel (0) target = $region17
  $region16: #{mlm_bert_forward.3} parent=0 // pred_region
    _
  $region17: #{mlm_bert_forward.3} parent=0 // pred_fallthru
    _
  // Predicated region
  $region18: #{mlm_bert_forward.3} parent=0 // pred_check
    _
  $region19: #{mlm_bert_forward.3} parent=0 // pred_check_branch
    %114 = sbr.rel (0) target = $region21
  $region20: #{mlm_bert_forward.3} parent=0 // pred_region
    _
  $region21: #{mlm_bert_forward.3} parent=0 // pred_fallthru
    _

// kernel: mlm_bert_forward.2
$region0: #{mlm_bert_forward.2}
  #allocation0 [shape = 'u32[]', space=smem, size = 0x4, offset = 0x4, fixed_abs, tag = 'smem constant byte address 0x4 - core index']
  #allocation1 [shape = 'u32[144,128]{1,0:T(1,128)}', space=vmem, size = 0x12000, scoped, tag = 'internal scratch']
  #allocation2 [shape = 'f32[8,32]{1,0:T(8,128)}', space=vmem, size = 0x1000, scoped, tag = 'scratch operand']
  %s0 = inlined_call_operand.vmem [shape: f32[2,8,128], index: 0, kind: input, shape index: {}]
  %s1 = inlined_call_operand.vmem [shape: f32[2,1,8], index: 1, kind: input, shape index: {}]
  %s2 = inlined_call_operand.vmem [shape: f32[128,32], index: 2, kind: input, shape index: {}]
  %s3 = inlined_call_operand.vmem [shape: f32[1,32], index: 3, kind: input, shape index: {}]
  %s4 = inlined_call_operand.vmem [shape: f32[8,32], index: 4, kind: input, shape index: {}]
  %s5 = inlined_call_operand.vmem [shape: f32[1,32], index: 5, kind: input, shape index: {}]
  %s6 = inlined_call_operand.vmem [shape: f32[1,32], index: 6, kind: input, shape index: {}]
  %s7 = inlined_call_operand.vmem [shape: f32[2,32,96], index: 7, kind: input, shape index: {}]
  %s8 = inlined_call_operand.vmem [shape: f32[2,1,96], index: 8, kind: input, shape index: {}]
  %s9 = inlined_call_operand.vmem [shape: f32[2,32,32], index: 9, kind: input, shape index: {}]
  %s10 = inlined_call_operand.vmem [shape: f32[2,1,32], index: 10, kind: input, shape index: {}]
  %s11 = inlined_call_operand.vmem [shape: f32[2,1,32], index: 11, kind: input, shape index: {}]
  %s12 = inlined_call_operand.vmem [shape: f32[2,1,32], index: 12, kind: input, shape index: {}]
  %s13 = inlined_call_operand.vmem [shape: f32[2,32,128], index: 13, kind: input, shape index: {}]
  %s14 = inlined_call_operand.vmem [shape: f32[2,1,128], index: 14, kind: input, shape index: {}]
  %s15 = inlined_call_operand.vmem [shape: f32[2,128,32], index: 15, kind: input, shape index: {}]
  %s16 = inlined_call_operand.vmem [shape: f32[2,1,32], index: 16, kind: input, shape index: {}]
  %s17 = inlined_call_operand.vmem [shape: f32[2,1,32], index: 17, kind: input, shape index: {}]
  %s18 = inlined_call_operand.vmem [shape: f32[2,1,32], index: 18, kind: input, shape index: {}]
  %s19 = inlined_call_operand.vmem [shape: f32[16,32], index: 19, kind: output, shape index: {}]
  %s20 = sld [smem:[#allocation0]]
  $region117: #{mlm_bert_forward.2} parent=0
    _
  %s22 = ssub.s32 1, %s20
  %s23 = scalar_select 0, %s22, %s20
  loop: start=0, step=1, limit=6
  $region2: #{mlm_bert_forward.2} parent=0 // loop_pre_header
    _
  $region3: #{mlm_bert_forward.2} parent=0 // loop_header
    %s25 = sphi 0, %s29
    %p26 = scmp.ge.s32.totalorder %s25, 6
    %s32 = sphi 0, %s44
    %s33 = sphi 0, %s40
    %s34 = sphi 0, %s32
    %s35 = sphi 0, %s33
    %s36 = sphi 0, %s34
    %s37 = sphi 0, %s35
    %s47 = sphi 0, %s49
    %s50 = sphi 0, %s47
    %s51 = sphi 0, %s50
    %s67 = sphi 0, %s51
    %s73 = sphi 0, %s75
    %s76 = sphi 0, %s73
    %s77 = sphi 0, %s76
    %s93 = sphi 0, %s77
    %s97 = sphi 0, %s97
    %s99 = sphi 0, %s97
    %s100 = sphi 0, %s99
    %s114 = sphi 0, %s100
    %s118 = sphi 0, %s118
    %s120 = sphi 0, %s118
    %s121 = sphi 0, %s120
    %s135 = sphi 0, %s121
    %s139 = sphi 0, %s139
    %s141 = sphi 0, %s139
    %s142 = sphi 0, %s141
    %s156 = sphi 0, %s142
    %s160 = sphi 0, %s160
    %s162 = sphi 0, %s160
    %s163 = sphi 0, %s162
    %s177 = sphi 0, %s163
    %s181 = sphi 0, %s181
    %s183 = sphi 0, %s181
    %s184 = sphi 0, %s183
    %s198 = sphi 0, %s184
    %s204 = sphi 0, %s206
    %s207 = sphi 0, %s204
    %s208 = sphi 0, %s207
    %s224 = sphi 0, %s208
    %s230 = sphi 0, %s232
    %s233 = sphi 0, %s230
    %s234 = sphi 0, %s233
    %s250 = sphi 0, %s234
    %s256 = sphi 0, %s258
    %s259 = sphi 0, %s256
    %s260 = sphi 0, %s259
    %s276 = sphi 0, %s260
    %s282 = sphi 0, %s284
    %s285 = sphi 0, %s282
    %s286 = sphi 0, %s285
    %s302 = sphi 0, %s286
    %s308 = sphi 0, %s310
    %s311 = sphi 0, %s308
    %s312 = sphi 0, %s311
    %s328 = sphi 0, %s312
    %s334 = sphi 0, %s336
    %s337 = sphi 0, %s334
    %s338 = sphi 0, %s337
    %s354 = sphi 0, %s338
    %s360 = sphi 0, %s362
    %s363 = sphi 0, %s360
    %s364 = sphi 0, %s363
    %s380 = sphi 0, %s364
    %s386 = sphi 0, %s388
    %s389 = sphi 0, %s386
    %s390 = sphi 0, %s389
    %s406 = sphi 0, %s390
    %s412 = sphi 0, %s414
    %s415 = sphi 0, %s412
    %s416 = sphi 0, %s415
    %s432 = sphi 0, %s416
    %s438 = sphi 0, %s440
    %s441 = sphi 0, %s438
    %s442 = sphi 0, %s441
    %s458 = sphi 0, %s442
    %s464 = sphi 0, %s466
    %s467 = sphi 0, %s464
    %s468 = sphi 0, %s467
    %s484 = sphi 0, %s468
    %s490 = sphi 0, %s492
    %s493 = sphi 0, %s490
    %s494 = sphi 0, %s493
    %s510 = sphi 0, %s494
    %s516 = sphi 0, %s518
    %s519 = sphi 0, %s516
    %s520 = sphi 0, %s519
    %s536 = sphi 0, %s520
  $region4: #{mlm_bert_forward.2} parent=0 // loop_header_branch
    %28 = sbr.rel (%p26) target = $region8
  $region5: #{mlm_bert_forward.2} parent=0 // loop_body
    %s30 = ssub.s32 %s25, 1
    %s31 = ssub.s32 %s25, 2
    %s38 = sadd.s32 1, %s33
    %p39 = scmp.ge.s32.totalorder %s38, 2
    %s40 = scalar_select %p39, 0, %s38
    %s41 = sadd.s32 1, %s32
    %s42 = scalar_select %p39, %s41, %s32
    %p43 = scmp.ge.s32.totalorder %s42, 2
    %s44 = scalar_select %p43, 0, %s42
    %s45 = ssub.s32 %s32, %s44
    %p46 = scmp.eq.s32.totalorder %s45, 0
    %s48 = sadd.s32 %s47, 1
    %s49 = scalar_select %p46, %s47, %s48
    %p52 = pneg %p46
    %p53 = scmp.eq.s32.totalorder %s25, 3
    %p54 = por %p52, %p53
    %p55 = scmp.ne.s32.totalorder %s47, %s50
    %p56 = scmp.eq.s32.totalorder %s25, 0
    %p57 = por %p55, %p56
    %p58 = scmp.ne.s32.totalorder %s47, %s50
    %p59 = scmp.eq.s32.totalorder %s30, 3
    %p60 = por %p58, %p59
    %p61 = scmp.ne.s32.totalorder %s50, %s51
    %p62 = scmp.eq.s32.totalorder %s30, 0
    %p63 = por %p61, %p62
    %p64 = scmp.ne.s32.totalorder %s50, %s51
    %p65 = scmp.eq.s32.totalorder %s31, 3
    %p66 = por %p64, %p65
    %p68 = scmp.ne.s32.totalorder %s51, %s67
    %p69 = scmp.eq.s32.totalorder %s31, 0
    %p70 = por %p68, %p69
    %s71 = ssub.s32 %s32, %s44
    %p72 = scmp.eq.s32.totalorder %s71, 0
    %s74 = sadd.s32 %s73, 1
    %s75 = scalar_select %p72, %s73, %s74
    %p78 = pneg %p72
    %p79 = scmp.eq.s32.totalorder %s25, 3
    %p80 = por %p78, %p79
    %p81 = scmp.ne.s32.totalorder %s73, %s76
    %p82 = scmp.eq.s32.totalorder %s25, 0
    %p83 = por %p81, %p82
    %p84 = scmp.ne.s32.totalorder %s73, %s76
    %p85 = scmp.eq.s32.totalorder %s30, 3
    %p86 = por %p84, %p85
    %p87 = scmp.ne.s32.totalorder %s76, %s77
    %p88 = scmp.eq.s32.totalorder %s30, 0
    %p89 = por %p87, %p88
    %p90 = scmp.ne.s32.totalorder %s76, %s77
    %p91 = scmp.eq.s32.totalorder %s31, 3
    %p92 = por %p90, %p91
    %p94 = scmp.ne.s32.totalorder %s77, %s93
    %p95 = scmp.eq.s32.totalorder %s31, 0
    %p96 = por %p94, %p95
    %s98 = sadd.s32 %s97, 1
    %p101 = scmp.eq.s32.totalorder %s25, 3
    %p102 = scmp.ne.s32.totalorder %s97, %s99
    %p103 = scmp.eq.s32.totalorder %s25, 0
    %p104 = por %p102, %p103
    %p105 = scmp.ne.s32.totalorder %s97, %s99
    %p106 = scmp.eq.s32.totalorder %s30, 3
    %p107 = por %p105, %p106
    %p108 = scmp.ne.s32.totalorder %s99, %s100
    %p109 = scmp.eq.s32.totalorder %s30, 0
    %p110 = por %p108, %p109
    %p111 = scmp.ne.s32.totalorder %s99, %s100
    %p112 = scmp.eq.s32.totalorder %s31, 3
    %p113 = por %p111, %p112
    %p115 = scmp.ne.s32.totalorder %s100, %s114
    %p116 = scmp.eq.s32.totalorder %s31, 0
    %p117 = por %p115, %p116
    %s119 = sadd.s32 %s118, 1
    %p122 = scmp.eq.s32.totalorder %s25, 3
    %p123 = scmp.ne.s32.totalorder %s118, %s120
    %p124 = scmp.eq.s32.totalorder %s25, 0
    %p125 = por %p123, %p124
    %p126 = scmp.ne.s32.totalorder %s118, %s120
    %p127 = scmp.eq.s32.totalorder %s30, 3
    %p128 = por %p126, %p127
    %p129 = scmp.ne.s32.totalorder %s120, %s121
    %p130 = scmp.eq.s32.totalorder %s30, 0
    %p131 = por %p129, %p130
    %p132 = scmp.ne.s32.totalorder %s120, %s121
    %p133 = scmp.eq.s32.totalorder %s31, 3
    %p134 = por %p132, %p133
    %p136 = scmp.ne.s32.totalorder %s121, %s135
    %p137 = scmp.eq.s32.totalorder %s31, 0
    %p138 = por %p136, %p137
    %s140 = sadd.s32 %s139, 1
    %p143 = scmp.eq.s32.totalorder %s25, 3
    %p144 = scmp.ne.s32.totalorder %s139, %s141
    %p145 = scmp.eq.s32.totalorder %s25, 0
    %p146 = por %p144, %p145
    %p147 = scmp.ne.s32.totalorder %s139, %s141
    %p148 = scmp.eq.s32.totalorder %s30, 3
    %p149 = por %p147, %p148
    %p150 = scmp.ne.s32.totalorder %s141, %s142
    %p151 = scmp.eq.s32.totalorder %s30, 0
    %p152 = por %p150, %p151
    %p153 = scmp.ne.s32.totalorder %s141, %s142
    %p154 = scmp.eq.s32.totalorder %s31, 3
    %p155 = por %p153, %p154
    %p157 = scmp.ne.s32.totalorder %s142, %s156
    %p158 = scmp.eq.s32.totalorder %s31, 0
    %p159 = por %p157, %p158
    %s161 = sadd.s32 %s160, 1
    %p164 = scmp.eq.s32.totalorder %s25, 3
    %p165 = scmp.ne.s32.totalorder %s160, %s162
    %p166 = scmp.eq.s32.totalorder %s25, 0
    %p167 = por %p165, %p166
    %p168 = scmp.ne.s32.totalorder %s160, %s162
    %p169 = scmp.eq.s32.totalorder %s30, 3
    %p170 = por %p168, %p169
    %p171 = scmp.ne.s32.totalorder %s162, %s163
    %p172 = scmp.eq.s32.totalorder %s30, 0
    %p173 = por %p171, %p172
    %p174 = scmp.ne.s32.totalorder %s162, %s163
    %p175 = scmp.eq.s32.totalorder %s31, 3
    %p176 = por %p174, %p175
    %p178 = scmp.ne.s32.totalorder %s163, %s177
    %p179 = scmp.eq.s32.totalorder %s31, 0
    %p180 = por %p178, %p179
    %s182 = sadd.s32 %s181, 1
    %p185 = scmp.eq.s32.totalorder %s25, 3
    %p186 = scmp.ne.s32.totalorder %s181, %s183
    %p187 = scmp.eq.s32.totalorder %s25, 0
    %p188 = por %p186, %p187
    %p189 = scmp.ne.s32.totalorder %s181, %s183
    %p190 = scmp.eq.s32.totalorder %s30, 3
    %p191 = por %p189, %p190
    %p192 = scmp.ne.s32.totalorder %s183, %s184
    %p193 = scmp.eq.s32.totalorder %s30, 0
    %p194 = por %p192, %p193
    %p195 = scmp.ne.s32.totalorder %s183, %s184
    %p196 = scmp.eq.s32.totalorder %s31, 3
    %p197 = por %p195, %p196
    %p199 = scmp.ne.s32.totalorder %s184, %s198
    %p200 = scmp.eq.s32.totalorder %s31, 0
    %p201 = por %p199, %p200
    %s202 = ssub.s32 %s33, %s40
    %p203 = scmp.eq.s32.totalorder %s202, 0
    %s205 = sadd.s32 %s204, 1
    %s206 = scalar_select %p203, %s204, %s205
    %p209 = pneg %p203
    %p210 = scmp.eq.s32.totalorder %s25, 3
    %p211 = por %p209, %p210
    %p212 = scmp.ne.s32.totalorder %s204, %s207
    %p213 = scmp.eq.s32.totalorder %s25, 0
    %p214 = por %p212, %p213
    %p215 = scmp.ne.s32.totalorder %s204, %s207
    %p216 = scmp.eq.s32.totalorder %s30, 3
    %p217 = por %p215, %p216
    %p218 = scmp.ne.s32.totalorder %s207, %s208
    %p219 = scmp.eq.s32.totalorder %s30, 0
    %p220 = por %p218, %p219
    %p221 = scmp.ne.s32.totalorder %s207, %s208
    %p222 = scmp.eq.s32.totalorder %s31, 3
    %p223 = por %p221, %p222
    %p225 = scmp.ne.s32.totalorder %s208, %s224
    %p226 = scmp.eq.s32.totalorder %s31, 0
    %p227 = por %p225, %p226
    %s228 = ssub.s32 %s33, %s40
    %p229 = scmp.eq.s32.totalorder %s228, 0
    %s231 = sadd.s32 %s230, 1
    %s232 = scalar_select %p229, %s230, %s231
    %p235 = pneg %p229
    %p236 = scmp.eq.s32.totalorder %s25, 3
    %p237 = por %p235, %p236
    %p238 = scmp.ne.s32.totalorder %s230, %s233
    %p239 = scmp.eq.s32.totalorder %s25, 0
    %p240 = por %p238, %p239
    %p241 = scmp.ne.s32.totalorder %s230, %s233
    %p242 = scmp.eq.s32.totalorder %s30, 3
    %p243 = por %p241, %p242
    %p244 = scmp.ne.s32.totalorder %s233, %s234
    %p245 = scmp.eq.s32.totalorder %s30, 0
    %p246 = por %p244, %p245
    %p247 = scmp.ne.s32.totalorder %s233, %s234
    %p248 = scmp.eq.s32.totalorder %s31, 3
    %p249 = por %p247, %p248
    %p251 = scmp.ne.s32.totalorder %s234, %s250
    %p252 = scmp.eq.s32.totalorder %s31, 0
    %p253 = por %p251, %p252
    %s254 = ssub.s32 %s33, %s40
    %p255 = scmp.eq.s32.totalorder %s254, 0
    %s257 = sadd.s32 %s256, 1
    %s258 = scalar_select %p255, %s256, %s257
    %p261 = pneg %p255
    %p262 = scmp.eq.s32.totalorder %s25, 3
    %p263 = por %p261, %p262
    %p264 = scmp.ne.s32.totalorder %s256, %s259
    %p265 = scmp.eq.s32.totalorder %s25, 0
    %p266 = por %p264, %p265
    %p267 = scmp.ne.s32.totalorder %s256, %s259
    %p268 = scmp.eq.s32.totalorder %s30, 3
    %p269 = por %p267, %p268
    %p270 = scmp.ne.s32.totalorder %s259, %s260
    %p271 = scmp.eq.s32.totalorder %s30, 0
    %p272 = por %p270, %p271
    %p273 = scmp.ne.s32.totalorder %s259, %s260
    %p274 = scmp.eq.s32.totalorder %s31, 3
    %p275 = por %p273, %p274
    %p277 = scmp.ne.s32.totalorder %s260, %s276
    %p278 = scmp.eq.s32.totalorder %s31, 0
    %p279 = por %p277, %p278
    %s280 = ssub.s32 %s33, %s40
    %p281 = scmp.eq.s32.totalorder %s280, 0
    %s283 = sadd.s32 %s282, 1
    %s284 = scalar_select %p281, %s282, %s283
    %p287 = pneg %p281
    %p288 = scmp.eq.s32.totalorder %s25, 3
    %p289 = por %p287, %p288
    %p290 = scmp.ne.s32.totalorder %s282, %s285
    %p291 = scmp.eq.s32.totalorder %s25, 0
    %p292 = por %p290, %p291
    %p293 = scmp.ne.s32.totalorder %s282, %s285
    %p294 = scmp.eq.s32.totalorder %s30, 3
    %p295 = por %p293, %p294
    %p296 = scmp.ne.s32.totalorder %s285, %s286
    %p297 = scmp.eq.s32.totalorder %s30, 0
    %p298 = por %p296, %p297
    %p299 = scmp.ne.s32.totalorder %s285, %s286
    %p300 = scmp.eq.s32.totalorder %s31, 3
    %p301 = por %p299, %p300
    %p303 = scmp.ne.s32.totalorder %s286, %s302
    %p304 = scmp.eq.s32.totalorder %s31, 0
    %p305 = por %p303, %p304
    %s306 = ssub.s32 %s33, %s40
    %p307 = scmp.eq.s32.totalorder %s306, 0
    %s309 = sadd.s32 %s308, 1
    %s310 = scalar_select %p307, %s308, %s309
    %p313 = pneg %p307
    %p314 = scmp.eq.s32.totalorder %s25, 3
    %p315 = por %p313, %p314
    %p316 = scmp.ne.s32.totalorder %s308, %s311
    %p317 = scmp.eq.s32.totalorder %s25, 0
    %p318 = por %p316, %p317
    %p319 = scmp.ne.s32.totalorder %s308, %s311
    %p320 = scmp.eq.s32.totalorder %s30, 3
    %p321 = por %p319, %p320
    %p322 = scmp.ne.s32.totalorder %s311, %s312
    %p323 = scmp.eq.s32.totalorder %s30, 0
    %p324 = por %p322, %p323
    %p325 = scmp.ne.s32.totalorder %s311, %s312
    %p326 = scmp.eq.s32.totalorder %s31, 3
    %p327 = por %p325, %p326
    %p329 = scmp.ne.s32.totalorder %s312, %s328
    %p330 = scmp.eq.s32.totalorder %s31, 0
    %p331 = por %p329, %p330
    %s332 = ssub.s32 %s33, %s40
    %p333 = scmp.eq.s32.totalorder %s332, 0
    %s335 = sadd.s32 %s334, 1
    %s336 = scalar_select %p333, %s334, %s335
    %p339 = pneg %p333
    %p340 = scmp.eq.s32.totalorder %s25, 3
    %p341 = por %p339, %p340
    %p342 = scmp.ne.s32.totalorder %s334, %s337
    %p343 = scmp.eq.s32.totalorder %s25, 0
    %p344 = por %p342, %p343
    %p345 = scmp.ne.s32.totalorder %s334, %s337
    %p346 = scmp.eq.s32.totalorder %s30, 3
    %p347 = por %p345, %p346
    %p348 = scmp.ne.s32.totalorder %s337, %s338
    %p349 = scmp.eq.s32.totalorder %s30, 0
    %p350 = por %p348, %p349
    %p351 = scmp.ne.s32.totalorder %s337, %s338
    %p352 = scmp.eq.s32.totalorder %s31, 3
    %p353 = por %p351, %p352
    %p355 = scmp.ne.s32.totalorder %s338, %s354
    %p356 = scmp.eq.s32.totalorder %s31, 0
    %p357 = por %p355, %p356
    %s358 = ssub.s32 %s33, %s40
    %p359 = scmp.eq.s32.totalorder %s358, 0
    %s361 = sadd.s32 %s360, 1
    %s362 = scalar_select %p359, %s360, %s361
    %p365 = pneg %p359
    %p366 = scmp.eq.s32.totalorder %s25, 3
    %p367 = por %p365, %p366
    %p368 = scmp.ne.s32.totalorder %s360, %s363
    %p369 = scmp.eq.s32.totalorder %s25, 0
    %p370 = por %p368, %p369
    %p371 = scmp.ne.s32.totalorder %s360, %s363
    %p372 = scmp.eq.s32.totalorder %s30, 3
    %p373 = por %p371, %p372
    %p374 = scmp.ne.s32.totalorder %s363, %s364
    %p375 = scmp.eq.s32.totalorder %s30, 0
    %p376 = por %p374, %p375
    %p377 = scmp.ne.s32.totalorder %s363, %s364
    %p378 = scmp.eq.s32.totalorder %s31, 3
    %p379 = por %p377, %p378
    %p381 = scmp.ne.s32.totalorder %s364, %s380
    %p382 = scmp.eq.s32.totalorder %s31, 0
    %p383 = por %p381, %p382
    %s384 = ssub.s32 %s33, %s40
    %p385 = scmp.eq.s32.totalorder %s384, 0
    %s387 = sadd.s32 %s386, 1
    %s388 = scalar_select %p385, %s386, %s387
    %p391 = pneg %p385
    %p392 = scmp.eq.s32.totalorder %s25, 3
    %p393 = por %p391, %p392
    %p394 = scmp.ne.s32.totalorder %s386, %s389
    %p395 = scmp.eq.s32.totalorder %s25, 0
    %p396 = por %p394, %p395
    %p397 = scmp.ne.s32.totalorder %s386, %s389
    %p398 = scmp.eq.s32.totalorder %s30, 3
    %p399 = por %p397, %p398
    %p400 = scmp.ne.s32.totalorder %s389, %s390
    %p401 = scmp.eq.s32.totalorder %s30, 0
    %p402 = por %p400, %p401
    %p403 = scmp.ne.s32.totalorder %s389, %s390
    %p404 = scmp.eq.s32.totalorder %s31, 3
    %p405 = por %p403, %p404
    %p407 = scmp.ne.s32.totalorder %s390, %s406
    %p408 = scmp.eq.s32.totalorder %s31, 0
    %p409 = por %p407, %p408
    %s410 = ssub.s32 %s33, %s40
    %p411 = scmp.eq.s32.totalorder %s410, 0
    %s413 = sadd.s32 %s412, 1
    %s414 = scalar_select %p411, %s412, %s413
    %p417 = pneg %p411
    %p418 = scmp.eq.s32.totalorder %s25, 3
    %p419 = por %p417, %p418
    %p420 = scmp.ne.s32.totalorder %s412, %s415
    %p421 = scmp.eq.s32.totalorder %s25, 0
    %p422 = por %p420, %p421
    %p423 = scmp.ne.s32.totalorder %s412, %s415
    %p424 = scmp.eq.s32.totalorder %s30, 3
    %p425 = por %p423, %p424
    %p426 = scmp.ne.s32.totalorder %s415, %s416
    %p427 = scmp.eq.s32.totalorder %s30, 0
    %p428 = por %p426, %p427
    %p429 = scmp.ne.s32.totalorder %s415, %s416
    %p430 = scmp.eq.s32.totalorder %s31, 3
    %p431 = por %p429, %p430
    %p433 = scmp.ne.s32.totalorder %s416, %s432
    %p434 = scmp.eq.s32.totalorder %s31, 0
    %p435 = por %p433, %p434
    %s436 = ssub.s32 %s33, %s40
    %p437 = scmp.eq.s32.totalorder %s436, 0
    %s439 = sadd.s32 %s438, 1
    %s440 = scalar_select %p437, %s438, %s439
    %p443 = pneg %p437
    %p444 = scmp.eq.s32.totalorder %s25, 3
    %p445 = por %p443, %p444
    %p446 = scmp.ne.s32.totalorder %s438, %s441
    %p447 = scmp.eq.s32.totalorder %s25, 0
    %p448 = por %p446, %p447
    %p449 = scmp.ne.s32.totalorder %s438, %s441
    %p450 = scmp.eq.s32.totalorder %s30, 3
    %p451 = por %p449, %p450
    %p452 = scmp.ne.s32.totalorder %s441, %s442
    %p453 = scmp.eq.s32.totalorder %s30, 0
    %p454 = por %p452, %p453
    %p455 = scmp.ne.s32.totalorder %s441, %s442
    %p456 = scmp.eq.s32.totalorder %s31, 3
    %p457 = por %p455, %p456
    %p459 = scmp.ne.s32.totalorder %s442, %s458
    %p460 = scmp.eq.s32.totalorder %s31, 0
    %p461 = por %p459, %p460
    %s462 = ssub.s32 %s33, %s40
    %p463 = scmp.eq.s32.totalorder %s462, 0
    %s465 = sadd.s32 %s464, 1
    %s466 = scalar_select %p463, %s464, %s465
    %p469 = pneg %p463
    %p470 = scmp.eq.s32.totalorder %s25, 3
    %p471 = por %p469, %p470
    %p472 = scmp.ne.s32.totalorder %s464, %s467
    %p473 = scmp.eq.s32.totalorder %s25, 0
    %p474 = por %p472, %p473
    %p475 = scmp.ne.s32.totalorder %s464, %s467
    %p476 = scmp.eq.s32.totalorder %s30, 3
    %p477 = por %p475, %p476
    %p478 = scmp.ne.s32.totalorder %s467, %s468
    %p479 = scmp.eq.s32.totalorder %s30, 0
    %p480 = por %p478, %p479
    %p481 = scmp.ne.s32.totalorder %s467, %s468
    %p482 = scmp.eq.s32.totalorder %s31, 3
    %p483 = por %p481, %p482
    %p485 = scmp.ne.s32.totalorder %s468, %s484
    %p486 = scmp.eq.s32.totalorder %s31, 0
    %p487 = por %p485, %p486
    %s488 = ssub.s32 %s33, %s40
    %p489 = scmp.eq.s32.totalorder %s488, 0
    %s491 = sadd.s32 %s490, 1
    %s492 = scalar_select %p489, %s490, %s491
    %p495 = pneg %p489
    %p496 = scmp.eq.s32.totalorder %s25, 3
    %p497 = por %p495, %p496
    %p498 = scmp.ne.s32.totalorder %s490, %s493
    %p499 = scmp.eq.s32.totalorder %s25, 0
    %p500 = por %p498, %p499
    %p501 = scmp.ne.s32.totalorder %s490, %s493
    %p502 = scmp.eq.s32.totalorder %s30, 3
    %p503 = por %p501, %p502
    %p504 = scmp.ne.s32.totalorder %s493, %s494
    %p505 = scmp.eq.s32.totalorder %s30, 0
    %p506 = por %p504, %p505
    %p507 = scmp.ne.s32.totalorder %s493, %s494
    %p508 = scmp.eq.s32.totalorder %s31, 3
    %p509 = por %p507, %p508
    %p511 = scmp.ne.s32.totalorder %s494, %s510
    %p512 = scmp.eq.s32.totalorder %s31, 0
    %p513 = por %p511, %p512
    %s514 = ssub.s32 %s32, %s44
    %p515 = scmp.eq.s32.totalorder %s514, 0
    %s517 = sadd.s32 %s516, 1
    %s518 = scalar_select %p515, %s516, %s517
    %p521 = pneg %p515
    %p522 = scmp.eq.s32.totalorder %s25, 3
    %p523 = por %p521, %p522
    %p524 = scmp.ne.s32.totalorder %s516, %s519
    %p525 = scmp.eq.s32.totalorder %s25, 0
    %p526 = por %p524, %p525
    %p527 = scmp.ne.s32.totalorder %s516, %s519
    %p528 = scmp.eq.s32.totalorder %s30, 3
    %p529 = por %p527, %p528
    %p530 = scmp.ne.s32.totalorder %s519, %s520
    %p531 = scmp.eq.s32.totalorder %s30, 0
    %p532 = por %p530, %p531
    %p533 = scmp.ne.s32.totalorder %s519, %s520
    %p534 = scmp.eq.s32.totalorder %s31, 3
    %p535 = por %p533, %p534
    %p537 = scmp.ne.s32.totalorder %s520, %s536
    %p538 = scmp.eq.s32.totalorder %s31, 0
    %p539 = por %p537, %p538
    %p540 = scmp.le.s32.totalorder 1, %s25
    %p541 = scmp.lt.s32.totalorder %s25, 5
    %p542 = pnand %p540, %p541
    %p543 = pneg %p542
    // Predicated region
    $region9: #{mlm_bert_forward.2} parent=5 // pred_check
      _
    $region10: #{mlm_bert_forward.2} parent=5 // pred_check_branch
      %545 = sbr.rel (%p542) target = $region12
    $region11: #{mlm_bert_forward.2} parent=5 // pred_region
      %s546 = ssub.s32 %s25, 1
      // Predicated region
      $region13: #{mlm_bert_forward.2} parent=11 // pred_check
        %p547 = pneg %p110
      $region14: #{mlm_bert_forward.2} parent=11 // pred_check_branch
        %549 = sbr.rel (%p547) target = $region16
      $region15: #{mlm_bert_forward.2} parent=11 // pred_region
        _
      $region16: #{mlm_bert_forward.2} parent=11 // pred_fallthru
        _
      // Predicated region
      $region17: #{mlm_bert_forward.2} parent=11 // pred_check
        %p550 = pneg %p131
      $region18: #{mlm_bert_forward.2} parent=11 // pred_check_branch
        %552 = sbr.rel (%p550) target = $region20
      $region19: #{mlm_bert_forward.2} parent=11 // pred_region
        _
      $region20: #{mlm_bert_forward.2} parent=11 // pred_fallthru
        _
      // Predicated region
      $region21: #{mlm_bert_forward.2} parent=11 // pred_check
        %p553 = pneg %p152
      $region22: #{mlm_bert_forward.2} parent=11 // pred_check_branch
        %555 = sbr.rel (%p553) target = $region24
      $region23: #{mlm_bert_forward.2} parent=11 // pred_region
        _
      $region24: #{mlm_bert_forward.2} parent=11 // pred_fallthru
        _
      // Predicated region
      $region25: #{mlm_bert_forward.2} parent=11 // pred_check
        %p556 = pneg %p173
      $region26: #{mlm_bert_forward.2} parent=11 // pred_check_branch
        %558 = sbr.rel (%p556) target = $region28
      $region27: #{mlm_bert_forward.2} parent=11 // pred_region
        _
      $region28: #{mlm_bert_forward.2} parent=11 // pred_fallthru
        _
      // Predicated region
      $region29: #{mlm_bert_forward.2} parent=11 // pred_check
        %p559 = pneg %p194
      $region30: #{mlm_bert_forward.2} parent=11 // pred_check_branch
        %561 = sbr.rel (%p559) target = $region32
      $region31: #{mlm_bert_forward.2} parent=11 // pred_region
        _
      $region32: #{mlm_bert_forward.2} parent=11 // pred_fallthru
        _
    $region12: #{mlm_bert_forward.2} parent=5 // pred_fallthru
      _
    %p562 = scmp.lt.s32.totalorder %s25, 4
    // Predicated region
    $region33: #{mlm_bert_forward.2} parent=5 // pred_check
      %p563 = pneg %p562
    $region34: #{mlm_bert_forward.2} parent=5 // pred_check_branch
      %565 = sbr.rel (%p563) target = $region36
    $region35: #{mlm_bert_forward.2} parent=5 // pred_region
      // Predicated region
      $region37: #{mlm_bert_forward.2} parent=35 // pred_check
        %p566 = pneg %p57
      $region38: #{mlm_bert_forward.2} parent=35 // pred_check_branch
        %568 = sbr.rel (%p566) target = $region40
      $region39: #{mlm_bert_forward.2} parent=35 // pred_region
        %p569 = scmp.lt.s32.totalorder %s32, 1
        %s570 = scalar_select %p569, %s32, 1
        %s571 = smul.addr %s570, 8
        %s572 = scalar_lea.vmem %s0, %s571
      $region40: #{mlm_bert_forward.2} parent=35 // pred_fallthru
        _
      // Predicated region
      $region41: #{mlm_bert_forward.2} parent=35 // pred_check
        %p573 = pneg %p83
      $region42: #{mlm_bert_forward.2} parent=35 // pred_check_branch
        %575 = sbr.rel (%p573) target = $region44
      $region43: #{mlm_bert_forward.2} parent=35 // pred_region
        %p576 = scmp.lt.s32.totalorder %s32, 1
        %s577 = scalar_select %p576, %s32, 1
        %s578 = scalar_lea.vmem %s1, %s577
      $region44: #{mlm_bert_forward.2} parent=35 // pred_fallthru
        _
      // Predicated region
      $region45: #{mlm_bert_forward.2} parent=35 // pred_check
        %p579 = pneg %p214
      $region46: #{mlm_bert_forward.2} parent=35 // pred_check_branch
        %581 = sbr.rel (%p579) target = $region48
      $region47: #{mlm_bert_forward.2} parent=35 // pred_region
        %p582 = scmp.lt.s32.totalorder %s33, 1
        %s583 = scalar_select %p582, %s33, 1
        %s584 = smul.addr %s583, 4
        %s585 = smul.addr %s584, 8
        %s586 = scalar_lea.vmem %s7, %s585
      $region48: #{mlm_bert_forward.2} parent=35 // pred_fallthru
        _
      // Predicated region
      $region49: #{mlm_bert_forward.2} parent=35 // pred_check
        %p587 = pneg %p240
      $region50: #{mlm_bert_forward.2} parent=35 // pred_check_branch
        %589 = sbr.rel (%p587) target = $region52
      $region51: #{mlm_bert_forward.2} parent=35 // pred_region
        %p590 = scmp.lt.s32.totalorder %s33, 1
        %s591 = scalar_select %p590, %s33, 1
        %s592 = scalar_lea.vmem %s8, %s591
      $region52: #{mlm_bert_forward.2} parent=35 // pred_fallthru
        _
      // Predicated region
      $region53: #{mlm_bert_forward.2} parent=35 // pred_check
        %p593 = pneg %p266
      $region54: #{mlm_bert_forward.2} parent=35 // pred_check_branch
        %595 = sbr.rel (%p593) target = $region56
      $region55: #{mlm_bert_forward.2} parent=35 // pred_region
        %p596 = scmp.lt.s32.totalorder %s33, 1
        %s597 = scalar_select %p596, %s33, 1
        %s598 = smul.addr %s597, 4
        %s599 = smul.addr %s598, 8
        %s600 = scalar_lea.vmem %s9, %s599
      $region56: #{mlm_bert_forward.2} parent=35 // pred_fallthru
        _
      // Predicated region
      $region57: #{mlm_bert_forward.2} parent=35 // pred_check
        %p601 = pneg %p292
      $region58: #{mlm_bert_forward.2} parent=35 // pred_check_branch
        %603 = sbr.rel (%p601) target = $region60
      $region59: #{mlm_bert_forward.2} parent=35 // pred_region
        %p604 = scmp.lt.s32.totalorder %s33, 1
        %s605 = scalar_select %p604, %s33, 1
        %s606 = scalar_lea.vmem %s10, %s605
      $region60: #{mlm_bert_forward.2} parent=35 // pred_fallthru
        _
      // Predicated region
      $region61: #{mlm_bert_forward.2} parent=35 // pred_check
        %p607 = pneg %p318
      $region62: #{mlm_bert_forward.2} parent=35 // pred_check_branch
        %609 = sbr.rel (%p607) target = $region64
      $region63: #{mlm_bert_forward.2} parent=35 // pred_region
        %p610 = scmp.lt.s32.totalorder %s33, 1
        %s611 = scalar_select %p610, %s33, 1
        %s612 = scalar_lea.vmem %s11, %s611
      $region64: #{mlm_bert_forward.2} parent=35 // pred_fallthru
        _
      // Predicated region
      $region65: #{mlm_bert_forward.2} parent=35 // pred_check
        %p613 = pneg %p344
      $region66: #{mlm_bert_forward.2} parent=35 // pred_check_branch
        %615 = sbr.rel (%p613) target = $region68
      $region67: #{mlm_bert_forward.2} parent=35 // pred_region
        %p616 = scmp.lt.s32.totalorder %s33, 1
        %s617 = scalar_select %p616, %s33, 1
        %s618 = scalar_lea.vmem %s12, %s617
      $region68: #{mlm_bert_forward.2} parent=35 // pred_fallthru
        _
      // Predicated region
      $region69: #{mlm_bert_forward.2} parent=35 // pred_check
        %p619 = pneg %p370
      $region70: #{mlm_bert_forward.2} parent=35 // pred_check_branch
        %621 = sbr.rel (%p619) target = $region72
      $region71: #{mlm_bert_forward.2} parent=35 // pred_region
        %p622 = scmp.lt.s32.totalorder %s33, 1
        %s623 = scalar_select %p622, %s33, 1
        %s624 = smul.addr %s623, 4
        %s625 = smul.addr %s624, 8
        %s626 = scalar_lea.vmem %s13, %s625
      $region72: #{mlm_bert_forward.2} parent=35 // pred_fallthru
        _
      // Predicated region
      $region73: #{mlm_bert_forward.2} parent=35 // pred_check
        %p627 = pneg %p396
      $region74: #{mlm_bert_forward.2} parent=35 // pred_check_branch
        %629 = sbr.rel (%p627) target = $region76
      $region75: #{mlm_bert_forward.2} parent=35 // pred_region
        %p630 = scmp.lt.s32.totalorder %s33, 1
        %s631 = scalar_select %p630, %s33, 1
        %s632 = scalar_lea.vmem %s14, %s631
      $region76: #{mlm_bert_forward.2} parent=35 // pred_fallthru
        _
      // Predicated region
      $region77: #{mlm_bert_forward.2} parent=35 // pred_check
        %p633 = pneg %p422
      $region78: #{mlm_bert_forward.2} parent=35 // pred_check_branch
        %635 = sbr.rel (%p633) target = $region80
      $region79: #{mlm_bert_forward.2} parent=35 // pred_region
        %p636 = scmp.lt.s32.totalorder %s33, 1
        %s637 = scalar_select %p636, %s33, 1
        %s638 = smul.addr %s637, 16
        %s639 = smul.addr %s638, 8
        %s640 = scalar_lea.vmem %s15, %s639
      $region80: #{mlm_bert_forward.2} parent=35 // pred_fallthru
        _
      // Predicated region
      $region81: #{mlm_bert_forward.2} parent=35 // pred_check
        %p641 = pneg %p448
      $region82: #{mlm_bert_forward.2} parent=35 // pred_check_branch
        %643 = sbr.rel (%p641) target = $region84
      $region83: #{mlm_bert_forward.2} parent=35 // pred_region
        %p644 = scmp.lt.s32.totalorder %s33, 1
        %s645 = scalar_select %p644, %s33, 1
        %s646 = scalar_lea.vmem %s16, %s645
      $region84: #{mlm_bert_forward.2} parent=35 // pred_fallthru
        _
      // Predicated region
      $region85: #{mlm_bert_forward.2} parent=35 // pred_check
        %p647 = pneg %p474
      $region86: #{mlm_bert_forward.2} parent=35 // pred_check_branch
        %649 = sbr.rel (%p647) target = $region88
      $region87: #{mlm_bert_forward.2} parent=35 // pred_region
        %p650 = scmp.lt.s32.totalorder %s33, 1
        %s651 = scalar_select %p650, %s33, 1
        %s652 = scalar_lea.vmem %s17, %s651
      $region88: #{mlm_bert_forward.2} parent=35 // pred_fallthru
        _
      // Predicated region
      $region89: #{mlm_bert_forward.2} parent=35 // pred_check
        %p653 = pneg %p500
      $region90: #{mlm_bert_forward.2} parent=35 // pred_check_branch
        %655 = sbr.rel (%p653) target = $region92
      $region91: #{mlm_bert_forward.2} parent=35 // pred_region
        %p656 = scmp.lt.s32.totalorder %s33, 1
        %s657 = scalar_select %p656, %s33, 1
        %s658 = scalar_lea.vmem %s18, %s657
      $region92: #{mlm_bert_forward.2} parent=35 // pred_fallthru
        _
    $region36: #{mlm_bert_forward.2} parent=5 // pred_fallthru
      _
    %p659 = scmp.le.s32.totalorder 1, %s25
    %p660 = scmp.lt.s32.totalorder %s25, 5
    %p661 = pnand %p659, %p660
    %p662 = pneg %p661
    // Predicated region
    $region93: #{mlm_bert_forward.2} parent=5 // pred_check
      _
    $region94: #{mlm_bert_forward.2} parent=5 // pred_check_branch
      %664 = sbr.rel (%p661) target = $region96
    $region95: #{mlm_bert_forward.2} parent=5 // pred_region
      %s665 = ssub.s32 %s25, 1
      %p666 = scmp.lt.s32.totalorder %s34, 1
      %s667 = scalar_select %p666, %s34, 1
      %s668 = smul.addr %s667, 8
      %s669 = scalar_lea.vmem %s0, %s668
      %p670 = pneg %p63
      %p671 = pneg %p60
      %p672 = scmp.lt.s32.totalorder %s34, 1
      %s673 = scalar_select %p672, %s34, 1
      %s674 = scalar_lea.vmem %s1, %s673
      %p675 = pneg %p89
      %p676 = pneg %p86
      %p677 = pneg %p110
      %p678 = pneg %p107
      %p679 = pneg %p131
      %p680 = pneg %p128
      %p681 = pneg %p152
      %p682 = pneg %p149
      %p683 = pneg %p173
      %p684 = pneg %p170
      %p685 = pneg %p194
      %p686 = pneg %p191
      %p687 = scmp.lt.s32.totalorder %s35, 1
      %s688 = scalar_select %p687, %s35, 1
      %s689 = smul.addr %s688, 4
      %s690 = smul.addr %s689, 8
      %s691 = scalar_lea.vmem %s7, %s690
      %p692 = pneg %p220
      %p693 = pneg %p217
      %p694 = scmp.lt.s32.totalorder %s35, 1
      %s695 = scalar_select %p694, %s35, 1
      %s696 = scalar_lea.vmem %s8, %s695
      %p697 = pneg %p246
      %p698 = pneg %p243
      %p699 = scmp.lt.s32.totalorder %s35, 1
      %s700 = scalar_select %p699, %s35, 1
      %s701 = smul.addr %s700, 4
      %s702 = smul.addr %s701, 8
      %s703 = scalar_lea.vmem %s9, %s702
      %p704 = pneg %p272
      %p705 = pneg %p269
      %p706 = scmp.lt.s32.totalorder %s35, 1
      %s707 = scalar_select %p706, %s35, 1
      %s708 = scalar_lea.vmem %s10, %s707
      %p709 = pneg %p298
      %p710 = pneg %p295
      %p711 = scmp.lt.s32.totalorder %s35, 1
      %s712 = scalar_select %p711, %s35, 1
      %s713 = scalar_lea.vmem %s11, %s712
      %p714 = pneg %p324
      %p715 = pneg %p321
      %p716 = scmp.lt.s32.totalorder %s35, 1
      %s717 = scalar_select %p716, %s35, 1
      %s718 = scalar_lea.vmem %s12, %s717
      %p719 = pneg %p350
      %p720 = pneg %p347
      %p721 = scmp.lt.s32.totalorder %s35, 1
      %s722 = scalar_select %p721, %s35, 1
      %s723 = smul.addr %s722, 4
      %s724 = smul.addr %s723, 8
      %s725 = scalar_lea.vmem %s13, %s724
      %p726 = pneg %p376
      %p727 = pneg %p373
      %p728 = scmp.lt.s32.totalorder %s35, 1
      %s729 = scalar_select %p728, %s35, 1
      %s730 = scalar_lea.vmem %s14, %s729
      %p731 = pneg %p402
      %p732 = pneg %p399
      %p733 = scmp.lt.s32.totalorder %s35, 1
      %s734 = scalar_select %p733, %s35, 1
      %s735 = smul.addr %s734, 16
      %s736 = smul.addr %s735, 8
      %s737 = scalar_lea.vmem %s15, %s736
      %p738 = pneg %p428
      %p739 = pneg %p425
      %p740 = scmp.lt.s32.totalorder %s35, 1
      %s741 = scalar_select %p740, %s35, 1
      %s742 = scalar_lea.vmem %s16, %s741
      %p743 = pneg %p454
      %p744 = pneg %p451
      %p745 = scmp.lt.s32.totalorder %s35, 1
      %s746 = scalar_select %p745, %s35, 1
      %s747 = scalar_lea.vmem %s17, %s746
      %p748 = pneg %p480
      %p749 = pneg %p477
      %p750 = scmp.lt.s32.totalorder %s35, 1
      %s751 = scalar_select %p750, %s35, 1
      %s752 = scalar_lea.vmem %s18, %s751
      %p753 = pneg %p506
      %p754 = pneg %p503
      %p755 = pneg %p532
      %p756 = pneg %p529
      %p757 = scmp.lt.s32.totalorder %s34, 1
      %s758 = scalar_select %p757, %s34, 1
      %s759 = smul.addr %s758, 8
      %s760 = scalar_lea.vmem %s19, %s759
      %p761 = scmp.lt.s32.totalorder %s34, 1
      %s762 = scalar_select %p761, %s34, 1
      %s763 = smul.addr %s762, 8
      %s764 = scalar_lea.vmem %s0, %s763
      %p765 = scmp.lt.s32.totalorder %s34, 1
      %s766 = scalar_select %p765, %s34, 1
      %s767 = scalar_lea.vmem %s1, %s766
      %p768 = scmp.lt.s32.totalorder %s35, 1
      %s769 = scalar_select %p768, %s35, 1
      %s770 = smul.addr %s769, 4
      %s771 = smul.addr %s770, 8
      %s772 = scalar_lea.vmem %s7, %s771
      %p773 = scmp.lt.s32.totalorder %s35, 1
      %s774 = scalar_select %p773, %s35, 1
      %s775 = scalar_lea.vmem %s8, %s774
      %p776 = scmp.lt.s32.totalorder %s35, 1
      %s777 = scalar_select %p776, %s35, 1
      %s778 = smul.addr %s777, 4
      %s779 = smul.addr %s778, 8
      %s780 = scalar_lea.vmem %s9, %s779
      %p781 = scmp.lt.s32.totalorder %s35, 1
      %s782 = scalar_select %p781, %s35, 1
      %s783 = scalar_lea.vmem %s10, %s782
      %p784 = scmp.lt.s32.totalorder %s35, 1
      %s785 = scalar_select %p784, %s35, 1
      %s786 = scalar_lea.vmem %s11, %s785
      %p787 = scmp.lt.s32.totalorder %s35, 1
      %s788 = scalar_select %p787, %s35, 1
      %s789 = scalar_lea.vmem %s12, %s788
      %p790 = scmp.lt.s32.totalorder %s35, 1
      %s791 = scalar_select %p790, %s35, 1
      %s792 = smul.addr %s791, 4
      %s793 = smul.addr %s792, 8
      %s794 = scalar_lea.vmem %s13, %s793
      %p795 = scmp.lt.s32.totalorder %s35, 1
      %s796 = scalar_select %p795, %s35, 1
      %s797 = scalar_lea.vmem %s14, %s796
      %p798 = scmp.lt.s32.totalorder %s35, 1
      %s799 = scalar_select %p798, %s35, 1
      %s800 = smul.addr %s799, 16
      %s801 = smul.addr %s800, 8
      %s802 = scalar_lea.vmem %s15, %s801
      %p803 = scmp.lt.s32.totalorder %s35, 1
      %s804 = scalar_select %p803, %s35, 1
      %s805 = scalar_lea.vmem %s16, %s804
      %p806 = scmp.lt.s32.totalorder %s35, 1
      %s807 = scalar_select %p806, %s35, 1
      %s808 = scalar_lea.vmem %s17, %s807
      %p809 = scmp.lt.s32.totalorder %s35, 1
      %s810 = scalar_select %p809, %s35, 1
      %s811 = scalar_lea.vmem %s18, %s810
      %p812 = scmp.lt.s32.totalorder %s34, 1
      %s813 = scalar_select %p812, %s34, 1
      %s814 = smul.addr %s813, 8
      %s815 = scalar_lea.vmem %s19, %s814
      %p816 = scmp.eq.s32.totalorder %s35, 0
      // Predicated region
      $region97: #{mlm_bert_forward.2} parent=95 // pred_check
        %p817 = pneg %p816
      $region98: #{mlm_bert_forward.2} parent=95 // pred_check_branch
        %819 = sbr.rel (%p817) target = $region100
      $region99: #{mlm_bert_forward.2} parent=95 // pred_region
        %v820 = vld [vmem:[%s764] sm:$0xff]
        %v821 = vld [vmem:[%s2] sm:$0xff]
        %v822 = vld [vmem:[%s2 + $0x8] sm:$0xff]
        %v823 = vld [vmem:[%s2 + $0x10] sm:$0xff]
        %v824 = vld [vmem:[%s2 + $0x18] sm:$0xff]
        %v825 = vld [vmem:[%s2 + $0x20] sm:$0xff]
        %v826 = vld [vmem:[%s2 + $0x28] sm:$0xff]
        %v827 = vld [vmem:[%s2 + $0x30] sm:$0xff]
        %v828 = vld [vmem:[%s2 + $0x38] sm:$0xff]
        %v829 = vld [vmem:[%s2 + $0x40] sm:$0xff]
        %v830 = vld [vmem:[%s2 + $0x48] sm:$0xff]
        %v831 = vld [vmem:[%s2 + $0x50] sm:$0xff]
        %v832 = vld [vmem:[%s2 + $0x58] sm:$0xff]
        %v833 = vld [vmem:[%s2 + $0x60] sm:$0xff]
        %v834 = vld [vmem:[%s2 + $0x68] sm:$0xff]
        %v835 = vld [vmem:[%s2 + $0x70] sm:$0xff]
        %v836 = vld [vmem:[%s2 + $0x78] sm:$0xff]
        %v837 = vld [vmem:[%s3] sm:$0x1]
        %v839 = vlaneseq
        %v840 = vshrl.u32 %v839, 7
        %v841 = vsub.s32 0, %v840
        %v842 = vrot.slane %v837, %v841
        %844 = vmatprep.subr.mxu0 0.0
        %845 = vmatpush1.msra.mxu0 %v821
        %846 = vmatprep.subr.mxu0 0.0
        %847 = vmatpush1.msra.mxu0 %v822
        %848 = vmatprep.subr.mxu0 0.0
        %849 = vmatpush1.msra.mxu0 %v823
        %850 = vmatprep.subr.mxu0 0.0
        %851 = vmatpush1.msra.mxu0 %v824
        %852 = vmatprep.subr.mxu0 0.0
        %853 = vmatpush1.msra.mxu0 %v825
        %854 = vmatprep.subr.mxu0 0.0
        %855 = vmatpush1.msra.mxu0 %v826
        %856 = vmatprep.subr.mxu0 0.0
        %857 = vmatpush1.msra.mxu0 %v827
        %858 = vmatprep.subr.mxu0 0.0
        %859 = vmatpush1.msra.mxu0 %v828
        %860 = vmatprep.subr.mxu0 0.0
        %861 = vmatpush1.msra.mxu0 %v829
        %862 = vmatprep.subr.mxu0 0.0
        %863 = vmatpush1.msra.mxu0 %v830
        %864 = vmatprep.subr.mxu0 0.0
        %865 = vmatpush1.msra.mxu0 %v831
        %866 = vmatprep.subr.mxu0 0.0
        %867 = vmatpush1.msra.mxu0 %v832
        %868 = vmatprep.subr.mxu0 0.0
        %869 = vmatpush1.msra.mxu0 %v833
        %870 = vmatprep.subr.mxu0 0.0
        %871 = vmatpush1.msra.mxu0 %v834
        %872 = vmatprep.subr.mxu0 0.0
        %873 = vmatpush1.msra.mxu0 %v835
        %874 = vmatprep.subr.mxu0 0.0
        %875 = vmatpush1.msra.mxu0 %v836
        %876 = vmatprep.subr.mxu0 0.0
        %877 = vmatpush1.msra.mxu0 0.0
        %878 = vmatprep.subr.mxu0 0.0
        %879 = vmatpush1.msra.mxu0 0.0
        %880 = vmatprep.subr.mxu0 0.0
        %881 = vmatpush1.msra.mxu0 0.0
        %882 = vmatprep.subr.mxu0 0.0
        %883 = vmatpush1.msra.mxu0 0.0
        %884 = vmatprep.subr.mxu0 0.0
        %885 = vmatpush1.msra.mxu0 0.0
        %886 = vmatprep.subr.mxu0 0.0
        %887 = vmatpush1.msra.mxu0 0.0
        %888 = vmatprep.subr.mxu0 0.0
        %889 = vmatpush1.msra.mxu0 0.0
        %890 = vmatprep.subr.mxu0 0.0
        %891 = vmatpush1.msra.mxu0 0.0
        %892 = vmatprep.subr.mxu0 0.0
        %893 = vmatpush1.msra.mxu0 0.0
        %894 = vmatprep.subr.mxu0 0.0
        %895 = vmatpush1.msra.mxu0 0.0
        %896 = vmatprep.subr.mxu0 0.0
        %897 = vmatpush1.msra.mxu0 0.0
        %898 = vmatprep.subr.mxu0 0.0
        %899 = vmatpush1.msra.mxu0 0.0
        %900 = vmatprep.subr.mxu0 0.0
        %901 = vmatpush1.msra.mxu0 0.0
        %902 = vmatprep.subr.mxu0 0.0
        %903 = vmatpush1.msra.mxu0 0.0
        %904 = vmatprep.subr.mxu0 0.0
        %905 = vmatpush1.msra.mxu0 0.0
        %906 = vmatprep.subr.mxu0 0.0
        %907 = vmatpush1.msra.mxu0 0.0
        %908 = vmatprep.mubr.f32.mxu0 0.0
        %909 = vmatmul.mubr.f32.gmra.mrb[0].mxu0 %v820
        %v910 = vpop.f32.mrb[0].mxu0
        %v911 = vadd.f32 %v842, %v910
        %v912 = vpop.f32.mrb[0].mxu0
        %913 = vdwg.mxu0
        %v914 = vld [vmem:[%s4] sm:$0xff]
        %v915 = vadd.f32 %v911, %v914
        %v916 = vld [vmem:[%s5] sm:$0x1]
        %v917 = vld [vmem:[%s6] sm:$0x1]
        %vm918 = vcmask 261120
        %v919 = vsel %vm918, %v915, 0.0
        %920 = vadd.xlane.f32.xlu0 %v919
        %v921 = vpop.xlane.xlu0 %920
        %v922 = vrcp.pop 32.0
        %v923 = vmul.f32 %v921, %v922
        %v924 = vmul.f32 %v915, %v915
        %v925 = vsel %vm918, %v924, 0.0
        %926 = vadd.xlane.f32.xlu0 %v925
        %v927 = vpop.xlane.xlu0 %926
        %v928 = vmul.f32 %v927, %v922
        %v929 = vmul.f32 %v923, %v923
        %v930 = vsub.f32 %v928, %v929
        %v931 = vsub.f32 %v915, %v923
        %v932 = vadd.f32 %v930, 1e-05
        %v933 = vrsqrt.pop %v932
        %v934 = vmul.f32 %v931, %v933
        %v936 = vlaneseq
        %v937 = vshrl.u32 %v936, 7
        %v938 = vsub.s32 0, %v937
        %v939 = vrot.slane %v916, %v938
        %v941 = vmul.f32 %v934, %v939
        %v943 = vlaneseq
        %v944 = vshrl.u32 %v943, 7
        %v945 = vsub.s32 0, %v944
        %v946 = vrot.slane %v917, %v945
        %v948 = vadd.f32 %v941, %v946
        %949 = vst.msk [vmem:[#allocation2] sm:$0xff] %vm918, %v948
      $region100: #{mlm_bert_forward.2} parent=95 // pred_fallthru
        _
      %v950 = vld [vmem:[#allocation2] sm:$0xff]
      %v951 = vld [vmem:[%s767] sm:$0x1]
      %v952 = vsub.f32 1.0, %v951
      %v953 = vmul.f32 %v952, -1e+09
      %v954 = vld [vmem:[%s772] sm:$0xff]
      %v955 = vld [vmem:[%s772 + $0x8] sm:$0xff]
      %v956 = vld [vmem:[%s772 + $0x10] sm:$0xff]
      %v957 = vld [vmem:[%s772 + $0x18] sm:$0xff]
      %v958 = vld [vmem:[%s775] sm:$0x1]
      %v960 = vlaneseq
      %v961 = vshrl.u32 %v960, 7
      %v962 = vsub.s32 0, %v961
      %v963 = vrot.slane %v958, %v962
      %vm965 = vcmask 261120
      %v967 = vsel %vm965, %v950, 0
      %969 = vmatprep.subr.mxu0 0.0
      %970 = vmatpush1.msra.mxu0 %v954
      %971 = vmatprep.subr.mxu0 0.0
      %972 = vmatpush1.msra.mxu0 %v955
      %973 = vmatprep.subr.mxu0 0.0
      %974 = vmatpush1.msra.mxu0 %v956
      %975 = vmatprep.subr.mxu0 0.0
      %976 = vmatpush1.msra.mxu0 %v957
      %977 = vmatprep.subr.mxu0 0.0
      %978 = vmatpush1.msra.mxu0 0.0
      %979 = vmatprep.subr.mxu0 0.0
      %980 = vmatpush1.msra.mxu0 0.0
      %981 = vmatprep.subr.mxu0 0.0
      %982 = vmatpush1.msra.mxu0 0.0
      %983 = vmatprep.subr.mxu0 0.0
      %984 = vmatpush1.msra.mxu0 0.0
      %985 = vmatprep.subr.mxu0 0.0
      %986 = vmatpush1.msra.mxu0 0.0
      %987 = vmatprep.subr.mxu0 0.0
      %988 = vmatpush1.msra.mxu0 0.0
      %989 = vmatprep.subr.mxu0 0.0
      %990 = vmatpush1.msra.mxu0 0.0
      %991 = vmatprep.subr.mxu0 0.0
      %992 = vmatpush1.msra.mxu0 0.0
      %993 = vmatprep.subr.mxu0 0.0
      %994 = vmatpush1.msra.mxu0 0.0
      %995 = vmatprep.subr.mxu0 0.0
      %996 = vmatpush1.msra.mxu0 0.0
      %997 = vmatprep.subr.mxu0 0.0
      %998 = vmatpush1.msra.mxu0 0.0
      %999 = vmatprep.subr.mxu0 0.0
      %1000 = vmatpush1.msra.mxu0 0.0
      %1001 = vmatprep.subr.mxu0 0.0
      %1002 = vmatpush1.msra.mxu0 0.0
      %1003 = vmatprep.subr.mxu0 0.0
      %1004 = vmatpush1.msra.mxu0 0.0
      %1005 = vmatprep.subr.mxu0 0.0
      %1006 = vmatpush1.msra.mxu0 0.0
      %1007 = vmatprep.subr.mxu0 0.0
      %1008 = vmatpush1.msra.mxu0 0.0
      %1009 = vmatprep.subr.mxu0 0.0
      %1010 = vmatpush1.msra.mxu0 0.0
      %1011 = vmatprep.subr.mxu0 0.0
      %1012 = vmatpush1.msra.mxu0 0.0
      %1013 = vmatprep.subr.mxu0 0.0
      %1014 = vmatpush1.msra.mxu0 0.0
      %1015 = vmatprep.subr.mxu0 0.0
      %1016 = vmatpush1.msra.mxu0 0.0
      %1017 = vmatprep.subr.mxu0 0.0
      %1018 = vmatpush1.msra.mxu0 0.0
      %1019 = vmatprep.subr.mxu0 0.0
      %1020 = vmatpush1.msra.mxu0 0.0
      %1021 = vmatprep.subr.mxu0 0.0
      %1022 = vmatpush1.msra.mxu0 0.0
      %1023 = vmatprep.subr.mxu0 0.0
      %1024 = vmatpush1.msra.mxu0 0.0
      %1025 = vmatprep.subr.mxu0 0.0
      %1026 = vmatpush1.msra.mxu0 0.0
      %1027 = vmatprep.subr.mxu0 0.0
      %1028 = vmatpush1.msra.mxu0 0.0
      %1029 = vmatprep.subr.mxu0 0.0
      %1030 = vmatpush1.msra.mxu0 0.0
      %1031 = vmatprep.subr.mxu0 0.0
      %1032 = vmatpush1.msra.mxu0 0.0
      %1033 = vmatprep.mubr.f32.mxu0 0.0
      %1034 = vmatmul.mubr.f32.gmra.mrb[0].mxu0 %v967
      %v1035 = vpop.f32.mrb[0].mxu0
      %v1036 = vadd.f32 %v963, %v1035
      %v1037 = vpop.f32.mrb[0].mxu0
      %1038 = vdwg.mxu0
      %v1039 = vmul.f32 %v1036, 0.35355338
      %v1041 = vlaneseq
      %v1042 = vshrl.u32 %v1041, 7
      %v1043 = vsub.s32 0, %v1042
      %v1044 = vrot.slane %v953, %v1043
      %1047 = vrot.lane.b32.xlu0 %v1036, 96
      %v1048 = vpop.permute.xlu0 %1047
      %vm1049 = vcmask 64512
      %v1051 = vsel %vm1049, %v1039, 0
      %v1053 = vsel %vm1049, %v1048, 0
      %1055 = vmatprep.subr.mxu0 0.0
      %1056 = vmatpush1.xpose.msra.mxu0 %v1053
      %1057 = vmatprep.subr.mxu0 0.0
      %1058 = vmatpush1.xpose.msra.mxu0 0.0
      %1059 = vmatprep.subr.mxu0 0.0
      %1060 = vmatpush1.xpose.msra.mxu0 0.0
      %1061 = vmatprep.subr.mxu0 0.0
      %1062 = vmatpush1.xpose.msra.mxu0 0.0
      %1063 = vmatprep.subr.mxu0 0.0
      %1064 = vmatpush1.xpose.msra.mxu0 0.0
      %1065 = vmatprep.subr.mxu0 0.0
      %1066 = vmatpush1.xpose.msra.mxu0 0.0
      %1067 = vmatprep.subr.mxu0 0.0
      %1068 = vmatpush1.xpose.msra.mxu0 0.0
      %1069 = vmatprep.subr.mxu0 0.0
      %1070 = vmatpush1.xpose.msra.mxu0 0.0
      %1071 = vmatprep.subr.mxu0 0.0
      %1072 = vmatpush1.xpose.msra.mxu0 0.0
      %1073 = vmatprep.subr.mxu0 0.0
      %1074 = vmatpush1.xpose.msra.mxu0 0.0
      %1075 = vmatprep.subr.mxu0 0.0
      %1076 = vmatpush1.xpose.msra.mxu0 0.0
      %1077 = vmatprep.subr.mxu0 0.0
      %1078 = vmatpush1.xpose.msra.mxu0 0.0
      %1079 = vmatprep.subr.mxu0 0.0
      %1080 = vmatpush1.xpose.msra.mxu0 0.0
      %1081 = vmatprep.subr.mxu0 0.0
      %1082 = vmatpush1.xpose.msra.mxu0 0.0
      %1083 = vmatprep.subr.mxu0 0.0
      %1084 = vmatpush1.xpose.msra.mxu0 0.0
      %1085 = vmatprep.subr.mxu0 0.0
      %1086 = vmatpush1.xpose.msra.mxu0 0.0
      %1087 = vmatprep.subr.mxu0 0.0
      %1088 = vmatpush1.xpose.msra.mxu0 0.0
      %1089 = vmatprep.subr.mxu0 0.0
      %1090 = vmatpush1.xpose.msra.mxu0 0.0
      %1091 = vmatprep.subr.mxu0 0.0
      %1092 = vmatpush1.xpose.msra.mxu0 0.0
      %1093 = vmatprep.subr.mxu0 0.0
      %1094 = vmatpush1.xpose.msra.mxu0 0.0
      %1095 = vmatprep.subr.mxu0 0.0
      %1096 = vmatpush1.xpose.msra.mxu0 0.0
      %1097 = vmatprep.subr.mxu0 0.0
      %1098 = vmatpush1.xpose.msra.mxu0 0.0
      %1099 = vmatprep.subr.mxu0 0.0
      %1100 = vmatpush1.xpose.msra.mxu0 0.0
      %1101 = vmatprep.subr.mxu0 0.0
      %1102 = vmatpush1.xpose.msra.mxu0 0.0
      %1103 = vmatprep.subr.mxu0 0.0
      %1104 = vmatpush1.xpose.msra.mxu0 0.0
      %1105 = vmatprep.subr.mxu0 0.0
      %1106 = vmatpush1.xpose.msra.mxu0 0.0
      %1107 = vmatprep.subr.mxu0 0.0
      %1108 = vmatpush1.xpose.msra.mxu0 0.0
      %1109 = vmatprep.subr.mxu0 0.0
      %1110 = vmatpush1.xpose.msra.mxu0 0.0
      %1111 = vmatprep.subr.mxu0 0.0
      %1112 = vmatpush1.xpose.msra.mxu0 0.0
      %1113 = vmatprep.subr.mxu0 0.0
      %1114 = vmatpush1.xpose.msra.mxu0 0.0
      %1115 = vmatprep.subr.mxu0 0.0
      %1116 = vmatpush1.xpose.msra.mxu0 0.0
      %1117 = vmatprep.subr.mxu0 0.0
      %1118 = vmatpush1.xpose.msra.mxu0 0.0
      %1119 = vmatprep.mubr.f32.mxu0 0.0
      %1120 = vmatmul.mubr.f32.gmra.mrb[0].mxu0 %v1051
      %v1121 = vpop.f32.mrb[0].mxu0
      %v1122 = vadd.f32 %v1044, %v1121
      %v1123 = vpop.f32.mrb[0].mxu0
      %1124 = vdwg.mxu0
      %v1125 = vsel %vm1049, %v1122, -inf
      %1126 = vmax.xlane.f32.xlu0 %v1125
      %v1127 = vpop.xlane.xlu0 %1126
      %v1128 = vsub.f32 %v1122, %v1127
      %v1129 = vmul.f32 %v1128, 1.442695
      %v1130 = vpow.pop %v1129
      %v1131 = vsel %vm1049, %v1130, 0.0
      %1132 = vadd.xlane.f32.xlu0 %v1131
      %v1133 = vpop.xlane.xlu0 %1132
      %v1134 = vrcp.pop %v1133
      %v1135 = vmul.f32 %v1130, %v1134
      %1136 = vrot.lane.b32.xlu0 %v1036, 64
      %v1137 = vpop.permute.xlu0 %1136
      %v1140 = vsel %vm1049, %v1135, 0
      %1142 = vmatprep.subr.mxu0 0.0
      %1143 = vmatpush1.msra.mxu0 %v1137
      %1144 = vmatprep.subr.mxu0 0.0
      %1145 = vmatpush1.msra.mxu0 0.0
      %1146 = vmatprep.subr.mxu0 0.0
      %1147 = vmatpush1.msra.mxu0 0.0
      %1148 = vmatprep.subr.mxu0 0.0
      %1149 = vmatpush1.msra.mxu0 0.0
      %1150 = vmatprep.subr.mxu0 0.0
      %1151 = vmatpush1.msra.mxu0 0.0
      %1152 = vmatprep.subr.mxu0 0.0
      %1153 = vmatpush1.msra.mxu0 0.0
      %1154 = vmatprep.subr.mxu0 0.0
      %1155 = vmatpush1.msra.mxu0 0.0
      %1156 = vmatprep.subr.mxu0 0.0
      %1157 = vmatpush1.msra.mxu0 0.0
      %1158 = vmatprep.subr.mxu0 0.0
      %1159 = vmatpush1.msra.mxu0 0.0
      %1160 = vmatprep.subr.mxu0 0.0
      %1161 = vmatpush1.msra.mxu0 0.0
      %1162 = vmatprep.subr.mxu0 0.0
      %1163 = vmatpush1.msra.mxu0 0.0
      %1164 = vmatprep.subr.mxu0 0.0
      %1165 = vmatpush1.msra.mxu0 0.0
      %1166 = vmatprep.subr.mxu0 0.0
      %1167 = vmatpush1.msra.mxu0 0.0
      %1168 = vmatprep.subr.mxu0 0.0
      %1169 = vmatpush1.msra.mxu0 0.0
      %1170 = vmatprep.subr.mxu0 0.0
      %1171 = vmatpush1.msra.mxu0 0.0
      %1172 = vmatprep.subr.mxu0 0.0
      %1173 = vmatpush1.msra.mxu0 0.0
      %1174 = vmatprep.subr.mxu0 0.0
      %1175 = vmatpush1.msra.mxu0 0.0
      %1176 = vmatprep.subr.mxu0 0.0
      %1177 = vmatpush1.msra.mxu0 0.0
      %1178 = vmatprep.subr.mxu0 0.0
      %1179 = vmatpush1.msra.mxu0 0.0
      %1180 = vmatprep.subr.mxu0 0.0
      %1181 = vmatpush1.msra.mxu0 0.0
      %1182 = vmatprep.subr.mxu0 0.0
      %1183 = vmatpush1.msra.mxu0 0.0
      %1184 = vmatprep.subr.mxu0 0.0
      %1185 = vmatpush1.msra.mxu0 0.0
      %1186 = vmatprep.subr.mxu0 0.0
      %1187 = vmatpush1.msra.mxu0 0.0
      %1188 = vmatprep.subr.mxu0 0.0
      %1189 = vmatpush1.msra.mxu0 0.0
      %1190 = vmatprep.subr.mxu0 0.0
      %1191 = vmatpush1.msra.mxu0 0.0
      %1192 = vmatprep.subr.mxu0 0.0
      %1193 = vmatpush1.msra.mxu0 0.0
      %1194 = vmatprep.subr.mxu0 0.0
      %1195 = vmatpush1.msra.mxu0 0.0
      %1196 = vmatprep.subr.mxu0 0.0
      %1197 = vmatpush1.msra.mxu0 0.0
      %1198 = vmatprep.subr.mxu0 0.0
      %1199 = vmatpush1.msra.mxu0 0.0
      %1200 = vmatprep.subr.mxu0 0.0
      %1201 = vmatpush1.msra.mxu0 0.0
      %1202 = vmatprep.subr.mxu0 0.0
      %1203 = vmatpush1.msra.mxu0 0.0
      %1204 = vmatprep.subr.mxu0 0.0
      %1205 = vmatpush1.msra.mxu0 0.0
      %1206 = vmatprep.mubr.f32.mxu0 0.0
      %1207 = vmatmul.mubr.f32.gmra.mrb[0].mxu0 %v1140
      %v1208 = vpop.f32.mrb[0].mxu0
      %v1209 = vadd.f32 0.0, %v1208
      %v1210 = vpop.f32.mrb[0].mxu0
      %1211 = vdwg.mxu0
      %v1212 = vld [vmem:[%s780] sm:$0xff]
      %1213 = vrot.lane.b32.xlu0 %v1039, 120
      %v1214 = vpop.permute.xlu0 %1213
      %1215 = vrot.lane.b32.xlu0 %v1036, 88
      %v1216 = vpop.permute.xlu0 %1215
      %v1217 = vsel %vm1049, %v1214, 0
      %v1219 = vsel %vm1049, %v1216, 0
      %1221 = vmatprep.subr.mxu0 0.0
      %1222 = vmatpush1.xpose.msra.mxu0 %v1219
      %1223 = vmatprep.subr.mxu0 0.0
      %1224 = vmatpush1.xpose.msra.mxu0 0.0
      %1225 = vmatprep.subr.mxu0 0.0
      %1226 = vmatpush1.xpose.msra.mxu0 0.0
      %1227 = vmatprep.subr.mxu0 0.0
      %1228 = vmatpush1.xpose.msra.mxu0 0.0
      %1229 = vmatprep.subr.mxu0 0.0
      %1230 = vmatpush1.xpose.msra.mxu0 0.0
      %1231 = vmatprep.subr.mxu0 0.0
      %1232 = vmatpush1.xpose.msra.mxu0 0.0
      %1233 = vmatprep.subr.mxu0 0.0
      %1234 = vmatpush1.xpose.msra.mxu0 0.0
      %1235 = vmatprep.subr.mxu0 0.0
      %1236 = vmatpush1.xpose.msra.mxu0 0.0
      %1237 = vmatprep.subr.mxu0 0.0
      %1238 = vmatpush1.xpose.msra.mxu0 0.0
      %1239 = vmatprep.subr.mxu0 0.0
      %1240 = vmatpush1.xpose.msra.mxu0 0.0
      %1241 = vmatprep.subr.mxu0 0.0
      %1242 = vmatpush1.xpose.msra.mxu0 0.0
      %1243 = vmatprep.subr.mxu0 0.0
      %1244 = vmatpush1.xpose.msra.mxu0 0.0
      %1245 = vmatprep.subr.mxu0 0.0
      %1246 = vmatpush1.xpose.msra.mxu0 0.0
      %1247 = vmatprep.subr.mxu0 0.0
      %1248 = vmatpush1.xpose.msra.mxu0 0.0
      %1249 = vmatprep.subr.mxu0 0.0
      %1250 = vmatpush1.xpose.msra.mxu0 0.0
      %1251 = vmatprep.subr.mxu0 0.0
      %1252 = vmatpush1.xpose.msra.mxu0 0.0
      %1253 = vmatprep.subr.mxu0 0.0
      %1254 = vmatpush1.xpose.msra.mxu0 0.0
      %1255 = vmatprep.subr.mxu0 0.0
      %1256 = vmatpush1.xpose.msra.mxu0 0.0
      %1257 = vmatprep.subr.mxu0 0.0
      %1258 = vmatpush1.xpose.msra.mxu0 0.0
      %1259 = vmatprep.subr.mxu0 0.0
      %1260 = vmatpush1.xpose.msra.mxu0 0.0
      %1261 = vmatprep.subr.mxu0 0.0
      %1262 = vmatpush1.xpose.msra.mxu0 0.0
      %1263 = vmatprep.subr.mxu0 0.0
      %1264 = vmatpush1.xpose.msra.mxu0 0.0
      %1265 = vmatprep.subr.mxu0 0.0
      %1266 = vmatpush1.xpose.msra.mxu0 0.0
      %1267 = vmatprep.subr.mxu0 0.0
      %1268 = vmatpush1.xpose.msra.mxu0 0.0
      %1269 = vmatprep.subr.mxu0 0.0
      %1270 = vmatpush1.xpose.msra.mxu0 0.0
      %1271 = vmatprep.subr.mxu0 0.0
      %1272 = vmatpush1.xpose.msra.mxu0 0.0
      %1273 = vmatprep.subr.mxu0 0.0
      %1274 = vmatpush1.xpose.msra.mxu0 0.0
      %1275 = vmatprep.subr.mxu0 0.0
      %1276 = vmatpush1.xpose.msra.mxu0 0.0
      %1277 = vmatprep.subr.mxu0 0.0
      %1278 = vmatpush1.xpose.msra.mxu0 0.0
      %1279 = vmatprep.subr.mxu0 0.0
      %1280 = vmatpush1.xpose.msra.mxu0 0.0
      %1281 = vmatprep.subr.mxu0 0.0
      %1282 = vmatpush1.xpose.msra.mxu0 0.0
      %1283 = vmatprep.subr.mxu0 0.0
      %1284 = vmatpush1.xpose.msra.mxu0 0.0
      %1285 = vmatprep.mubr.f32.mxu0 0.0
      %1286 = vmatmul.mubr.f32.gmra.mrb[0].mxu0 %v1217
      %v1287 = vpop.f32.mrb[0].mxu0
      %v1288 = vadd.f32 %v1044, %v1287
      %v1289 = vpop.f32.mrb[0].mxu0
      %1290 = vdwg.mxu0
      %v1291 = vsel %vm1049, %v1288, -inf
      %1292 = vmax.xlane.f32.xlu0 %v1291
      %v1293 = vpop.xlane.xlu0 %1292
      %v1294 = vsub.f32 %v1288, %v1293
      %v1295 = vmul.f32 %v1294, 1.442695
      %v1296 = vpow.pop %v1295
      %v1297 = vsel %vm1049, %v1296, 0.0
      %1298 = vadd.xlane.f32.xlu0 %v1297
      %v1299 = vpop.xlane.xlu0 %1298
      %v1300 = vrcp.pop %v1299
      %v1301 = vmul.f32 %v1296, %v1300
      %1302 = vrot.lane.b32.xlu0 %v1036, 56
      %v1303 = vpop.permute.xlu0 %1302
      %v1306 = vsel %vm1049, %v1301, 0
      %1308 = vmatprep.subr.mxu0 0.0
      %1309 = vmatpush1.msra.mxu0 %v1303
      %1310 = vmatprep.subr.mxu0 0.0
      %1311 = vmatpush1.msra.mxu0 0.0
      %1312 = vmatprep.subr.mxu0 0.0
      %1313 = vmatpush1.msra.mxu0 0.0
      %1314 = vmatprep.subr.mxu0 0.0
      %1315 = vmatpush1.msra.mxu0 0.0
      %1316 = vmatprep.subr.mxu0 0.0
      %1317 = vmatpush1.msra.mxu0 0.0
      %1318 = vmatprep.subr.mxu0 0.0
      %1319 = vmatpush1.msra.mxu0 0.0
      %1320 = vmatprep.subr.mxu0 0.0
      %1321 = vmatpush1.msra.mxu0 0.0
      %1322 = vmatprep.subr.mxu0 0.0
      %1323 = vmatpush1.msra.mxu0 0.0
      %1324 = vmatprep.subr.mxu0 0.0
      %1325 = vmatpush1.msra.mxu0 0.0
      %1326 = vmatprep.subr.mxu0 0.0
      %1327 = vmatpush1.msra.mxu0 0.0
      %1328 = vmatprep.subr.mxu0 0.0
      %1329 = vmatpush1.msra.mxu0 0.0
      %1330 = vmatprep.subr.mxu0 0.0
      %1331 = vmatpush1.msra.mxu0 0.0
      %1332 = vmatprep.subr.mxu0 0.0
      %1333 = vmatpush1.msra.mxu0 0.0
      %1334 = vmatprep.subr.mxu0 0.0
      %1335 = vmatpush1.msra.mxu0 0.0
      %1336 = vmatprep.subr.mxu0 0.0
      %1337 = vmatpush1.msra.mxu0 0.0
      %1338 = vmatprep.subr.mxu0 0.0
      %1339 = vmatpush1.msra.mxu0 0.0
      %1340 = vmatprep.subr.mxu0 0.0
      %1341 = vmatpush1.msra.mxu0 0.0
      %1342 = vmatprep.subr.mxu0 0.0
      %1343 = vmatpush1.msra.mxu0 0.0
      %1344 = vmatprep.subr.mxu0 0.0
      %1345 = vmatpush1.msra.mxu0 0.0
      %1346 = vmatprep.subr.mxu0 0.0
      %1347 = vmatpush1.msra.mxu0 0.0
      %1348 = vmatprep.subr.mxu0 0.0
      %1349 = vmatpush1.msra.mxu0 0.0
      %1350 = vmatprep.subr.mxu0 0.0
      %1351 = vmatpush1.msra.mxu0 0.0
      %1352 = vmatprep.subr.mxu0 0.0
      %1353 = vmatpush1.msra.mxu0 0.0
      %1354 = vmatprep.subr.mxu0 0.0
      %1355 = vmatpush1.msra.mxu0 0.0
      %1356 = vmatprep.subr.mxu0 0.0
      %1357 = vmatpush1.msra.mxu0 0.0
      %1358 = vmatprep.subr.mxu0 0.0
      %1359 = vmatpush1.msra.mxu0 0.0
      %1360 = vmatprep.subr.mxu0 0.0
      %1361 = vmatpush1.msra.mxu0 0.0
      %1362 = vmatprep.subr.mxu0 0.0
      %1363 = vmatpush1.msra.mxu0 0.0
      %1364 = vmatprep.subr.mxu0 0.0
      %1365 = vmatpush1.msra.mxu0 0.0
      %1366 = vmatprep.subr.mxu0 0.0
      %1367 = vmatpush1.msra.mxu0 0.0
      %1368 = vmatprep.subr.mxu0 0.0
      %1369 = vmatpush1.msra.mxu0 0.0
      %1370 = vmatprep.subr.mxu0 0.0
      %1371 = vmatpush1.msra.mxu0 0.0
      %1372 = vmatprep.mubr.f32.mxu0 0.0
      %1373 = vmatmul.mubr.f32.gmra.mrb[0].mxu0 %v1306
      %v1374 = vpop.f32.mrb[0].mxu0
      %v1375 = vadd.f32 0.0, %v1374
      %v1376 = vpop.f32.mrb[0].mxu0
      %1377 = vdwg.mxu0
      %v1378 = vld [vmem:[%s780 + $0x8] sm:$0xff]
      %v1380 = vsel %vm1049, %v1375, 0
      %1382 = vmatprep.subr.mxu0 0.0
      %1383 = vmatpush1.msra.mxu0 %v1378
      %1384 = vmatprep.subr.mxu0 0.0
      %1385 = vmatpush1.msra.mxu0 0.0
      %1386 = vmatprep.subr.mxu0 0.0
      %1387 = vmatpush1.msra.mxu0 0.0
      %1388 = vmatprep.subr.mxu0 0.0
      %1389 = vmatpush1.msra.mxu0 0.0
      %1390 = vmatprep.subr.mxu0 0.0
      %1391 = vmatpush1.msra.mxu0 0.0
      %1392 = vmatprep.subr.mxu0 0.0
      %1393 = vmatpush1.msra.mxu0 0.0
      %1394 = vmatprep.subr.mxu0 0.0
      %1395 = vmatpush1.msra.mxu0 0.0
      %1396 = vmatprep.subr.mxu0 0.0
      %1397 = vmatpush1.msra.mxu0 0.0
      %1398 = vmatprep.subr.mxu0 0.0
      %1399 = vmatpush1.msra.mxu0 0.0
      %1400 = vmatprep.subr.mxu0 0.0
      %1401 = vmatpush1.msra.mxu0 0.0
      %1402 = vmatprep.subr.mxu0 0.0
      %1403 = vmatpush1.msra.mxu0 0.0
      %1404 = vmatprep.subr.mxu0 0.0
      %1405 = vmatpush1.msra.mxu0 0.0
      %1406 = vmatprep.subr.mxu0 0.0
      %1407 = vmatpush1.msra.mxu0 0.0
      %1408 = vmatprep.subr.mxu0 0.0
      %1409 = vmatpush1.msra.mxu0 0.0
      %1410 = vmatprep.subr.mxu0 0.0
      %1411 = vmatpush1.msra.mxu0 0.0
      %1412 = vmatprep.subr.mxu0 0.0
      %1413 = vmatpush1.msra.mxu0 0.0
      %1414 = vmatprep.subr.mxu0 0.0
      %1415 = vmatpush1.msra.mxu0 0.0
      %1416 = vmatprep.subr.mxu0 0.0
      %1417 = vmatpush1.msra.mxu0 0.0
      %1418 = vmatprep.subr.mxu0 0.0
      %1419 = vmatpush1.msra.mxu0 0.0
      %1420 = vmatprep.subr.mxu0 0.0
      %1421 = vmatpush1.msra.mxu0 0.0
      %1422 = vmatprep.subr.mxu0 0.0
      %1423 = vmatpush1.msra.mxu0 0.0
      %1424 = vmatprep.subr.mxu0 0.0
      %1425 = vmatpush1.msra.mxu0 0.0
      %1426 = vmatprep.subr.mxu0 0.0
      %1427 = vmatpush1.msra.mxu0 0.0
      %1428 = vmatprep.subr.mxu0 0.0
      %1429 = vmatpush1.msra.mxu0 0.0
      %1430 = vmatprep.subr.mxu0 0.0
      %1431 = vmatpush1.msra.mxu0 0.0
      %1432 = vmatprep.subr.mxu0 0.0
      %1433 = vmatpush1.msra.mxu0 0.0
      %1434 = vmatprep.subr.mxu0 0.0
      %1435 = vmatpush1.msra.mxu0 0.0
      %1436 = vmatprep.subr.mxu0 0.0
      %1437 = vmatpush1.msra.mxu0 0.0
      %1438 = vmatprep.subr.mxu0 0.0
      %1439 = vmatpush1.msra.mxu0 0.0
      %1440 = vmatprep.subr.mxu0 0.0
      %1441 = vmatpush1.msra.mxu0 0.0
      %1442 = vmatprep.subr.mxu0 0.0
      %1443 = vmatpush1.msra.mxu0 0.0
      %1444 = vmatprep.subr.mxu0 0.0
      %1445 = vmatpush1.msra.mxu0 0.0
      %1446 = vmatprep.mubr.f32.mxu0 0.0
      %1447 = vmatmul.mubr.f32.gmra.mrb[0].mxu0 %v1380
      %v1448 = vpop.f32.mrb[0].mxu0
      %v1449 = vadd.f32 0.0, %v1448
      %v1450 = vpop.f32.mrb[0].mxu0
      %1451 = vdwg.mxu0
      %v1453 = vsel %vm1049, %v1209, 0
      %1455 = vmatprep.subr.mxu0 0.0
      %1456 = vmatpush1.msra.mxu0 %v1212
      %1457 = vmatprep.subr.mxu0 0.0
      %1458 = vmatpush1.msra.mxu0 0.0
      %1459 = vmatprep.subr.mxu0 0.0
      %1460 = vmatpush1.msra.mxu0 0.0
      %1461 = vmatprep.subr.mxu0 0.0
      %1462 = vmatpush1.msra.mxu0 0.0
      %1463 = vmatprep.subr.mxu0 0.0
      %1464 = vmatpush1.msra.mxu0 0.0
      %1465 = vmatprep.subr.mxu0 0.0
      %1466 = vmatpush1.msra.mxu0 0.0
      %1467 = vmatprep.subr.mxu0 0.0
      %1468 = vmatpush1.msra.mxu0 0.0
      %1469 = vmatprep.subr.mxu0 0.0
      %1470 = vmatpush1.msra.mxu0 0.0
      %1471 = vmatprep.subr.mxu0 0.0
      %1472 = vmatpush1.msra.mxu0 0.0
      %1473 = vmatprep.subr.mxu0 0.0
      %1474 = vmatpush1.msra.mxu0 0.0
      %1475 = vmatprep.subr.mxu0 0.0
      %1476 = vmatpush1.msra.mxu0 0.0
      %1477 = vmatprep.subr.mxu0 0.0
      %1478 = vmatpush1.msra.mxu0 0.0
      %1479 = vmatprep.subr.mxu0 0.0
      %1480 = vmatpush1.msra.mxu0 0.0
      %1481 = vmatprep.subr.mxu0 0.0
      %1482 = vmatpush1.msra.mxu0 0.0
      %1483 = vmatprep.subr.mxu0 0.0
      %1484 = vmatpush1.msra.mxu0 0.0
      %1485 = vmatprep.subr.mxu0 0.0
      %1486 = vmatpush1.msra.mxu0 0.0
      %1487 = vmatprep.subr.mxu0 0.0
      %1488 = vmatpush1.msra.mxu0 0.0
      %1489 = vmatprep.subr.mxu0 0.0
      %1490 = vmatpush1.msra.mxu0 0.0
      %1491 = vmatprep.subr.mxu0 0.0
      %1492 = vmatpush1.msra.mxu0 0.0
      %1493 = vmatprep.subr.mxu0 0.0
      %1494 = vmatpush1.msra.mxu0 0.0
      %1495 = vmatprep.subr.mxu0 0.0
      %1496 = vmatpush1.msra.mxu0 0.0
      %1497 = vmatprep.subr.mxu0 0.0
      %1498 = vmatpush1.msra.mxu0 0.0
      %1499 = vmatprep.subr.mxu0 0.0
      %1500 = vmatpush1.msra.mxu0 0.0
      %1501 = vmatprep.subr.mxu0 0.0
      %1502 = vmatpush1.msra.mxu0 0.0
      %1503 = vmatprep.subr.mxu0 0.0
      %1504 = vmatpush1.msra.mxu0 0.0
      %1505 = vmatprep.subr.mxu0 0.0
      %1506 = vmatpush1.msra.mxu0 0.0
      %1507 = vmatprep.subr.mxu0 0.0
      %1508 = vmatpush1.msra.mxu0 0.0
      %1509 = vmatprep.subr.mxu0 0.0
      %1510 = vmatpush1.msra.mxu0 0.0
      %1511 = vmatprep.subr.mxu0 0.0
      %1512 = vmatpush1.msra.mxu0 0.0
      %1513 = vmatprep.subr.mxu0 0.0
      %1514 = vmatpush1.msra.mxu0 0.0
      %1515 = vmatprep.subr.mxu0 0.0
      %1516 = vmatpush1.msra.mxu0 0.0
      %1517 = vmatprep.subr.mxu0 0.0
      %1518 = vmatpush1.msra.mxu0 0.0
      %1519 = vmatprep.mubr.f32.mxu0 0.0
      %1520 = vmatmul.mubr.f32.gmra.mrb[0].mxu0 %v1453
      %v1521 = vpop.f32.mrb[0].mxu0
      %v1522 = vadd.f32 %v1449, %v1521
      %v1523 = vpop.f32.mrb[0].mxu0
      %1524 = vdwg.mxu0
      %1525 = vrot.lane.b32.xlu0 %v1039, 112
      %v1526 = vpop.permute.xlu0 %1525
      %1527 = vrot.lane.b32.xlu0 %v1036, 80
      %v1528 = vpop.permute.xlu0 %1527
      %v1529 = vsel %vm1049, %v1526, 0
      %v1531 = vsel %vm1049, %v1528, 0
      %1533 = vmatprep.subr.mxu0 0.0
      %1534 = vmatpush1.xpose.msra.mxu0 %v1531
      %1535 = vmatprep.subr.mxu0 0.0
      %1536 = vmatpush1.xpose.msra.mxu0 0.0
      %1537 = vmatprep.subr.mxu0 0.0
      %1538 = vmatpush1.xpose.msra.mxu0 0.0
      %1539 = vmatprep.subr.mxu0 0.0
      %1540 = vmatpush1.xpose.msra.mxu0 0.0
      %1541 = vmatprep.subr.mxu0 0.0
      %1542 = vmatpush1.xpose.msra.mxu0 0.0
      %1543 = vmatprep.subr.mxu0 0.0
      %1544 = vmatpush1.xpose.msra.mxu0 0.0
      %1545 = vmatprep.subr.mxu0 0.0
      %1546 = vmatpush1.xpose.msra.mxu0 0.0
      %1547 = vmatprep.subr.mxu0 0.0
      %1548 = vmatpush1.xpose.msra.mxu0 0.0
      %1549 = vmatprep.subr.mxu0 0.0
      %1550 = vmatpush1.xpose.msra.mxu0 0.0
      %1551 = vmatprep.subr.mxu0 0.0
      %1552 = vmatpush1.xpose.msra.mxu0 0.0
      %1553 = vmatprep.subr.mxu0 0.0
      %1554 = vmatpush1.xpose.msra.mxu0 0.0
      %1555 = vmatprep.subr.mxu0 0.0
      %1556 = vmatpush1.xpose.msra.mxu0 0.0
      %1557 = vmatprep.subr.mxu0 0.0
      %1558 = vmatpush1.xpose.msra.mxu0 0.0
      %1559 = vmatprep.subr.mxu0 0.0
      %1560 = vmatpush1.xpose.msra.mxu0 0.0
      %1561 = vmatprep.subr.mxu0 0.0
      %1562 = vmatpush1.xpose.msra.mxu0 0.0
      %1563 = vmatprep.subr.mxu0 0.0
      %1564 = vmatpush1.xpose.msra.mxu0 0.0
      %1565 = vmatprep.subr.mxu0 0.0
      %1566 = vmatpush1.xpose.msra.mxu0 0.0
      %1567 = vmatprep.subr.mxu0 0.0
      %1568 = vmatpush1.xpose.msra.mxu0 0.0
      %1569 = vmatprep.subr.mxu0 0.0
      %1570 = vmatpush1.xpose.msra.mxu0 0.0
      %1571 = vmatprep.subr.mxu0 0.0
      %1572 = vmatpush1.xpose.msra.mxu0 0.0
      %1573 = vmatprep.subr.mxu0 0.0
      %1574 = vmatpush1.xpose.msra.mxu0 0.0
      %1575 = vmatprep.subr.mxu0 0.0
      %1576 = vmatpush1.xpose.msra.mxu0 0.0
      %1577 = vmatprep.subr.mxu0 0.0
      %1578 = vmatpush1.xpose.msra.mxu0 0.0
      %1579 = vmatprep.subr.mxu0 0.0
      %1580 = vmatpush1.xpose.msra.mxu0 0.0
      %1581 = vmatprep.subr.mxu0 0.0
      %1582 = vmatpush1.xpose.msra.mxu0 0.0
      %1583 = vmatprep.subr.mxu0 0.0
      %1584 = vmatpush1.xpose.msra.mxu0 0.0
      %1585 = vmatprep.subr.mxu0 0.0
      %1586 = vmatpush1.xpose.msra.mxu0 0.0
      %1587 = vmatprep.subr.mxu0 0.0
      %1588 = vmatpush1.xpose.msra.mxu0 0.0
      %1589 = vmatprep.subr.mxu0 0.0
      %1590 = vmatpush1.xpose.msra.mxu0 0.0
      %1591 = vmatprep.subr.mxu0 0.0
      %1592 = vmatpush1.xpose.msra.mxu0 0.0
      %1593 = vmatprep.subr.mxu0 0.0
      %1594 = vmatpush1.xpose.msra.mxu0 0.0
      %1595 = vmatprep.subr.mxu0 0.0
      %1596 = vmatpush1.xpose.msra.mxu0 0.0
      %1597 = vmatprep.mubr.f32.mxu0 0.0
      %1598 = vmatmul.mubr.f32.gmra.mrb[0].mxu0 %v1529
      %v1599 = vpop.f32.mrb[0].mxu0
      %v1600 = vadd.f32 %v1044, %v1599
      %v1601 = vpop.f32.mrb[0].mxu0
      %1602 = vdwg.mxu0
      %v1603 = vsel %vm1049, %v1600, -inf
      %1604 = vmax.xlane.f32.xlu0 %v1603
      %v1605 = vpop.xlane.xlu0 %1604
      %v1606 = vsub.f32 %v1600, %v1605
      %v1607 = vmul.f32 %v1606, 1.442695
      %v1608 = vpow.pop %v1607
      %v1609 = vsel %vm1049, %v1608, 0.0
      %1610 = vadd.xlane.f32.xlu0 %v1609
      %v1611 = vpop.xlane.xlu0 %1610
      %v1612 = vrcp.pop %v1611
      %v1613 = vmul.f32 %v1608, %v1612
      %1614 = vrot.lane.b32.xlu0 %v1036, 48
      %v1615 = vpop.permute.xlu0 %1614
      %v1618 = vsel %vm1049, %v1613, 0
      %1620 = vmatprep.subr.mxu0 0.0
      %1621 = vmatpush1.msra.mxu0 %v1615
      %1622 = vmatprep.subr.mxu0 0.0
      %1623 = vmatpush1.msra.mxu0 0.0
      %1624 = vmatprep.subr.mxu0 0.0
      %1625 = vmatpush1.msra.mxu0 0.0
      %1626 = vmatprep.subr.mxu0 0.0
      %1627 = vmatpush1.msra.mxu0 0.0
      %1628 = vmatprep.subr.mxu0 0.0
      %1629 = vmatpush1.msra.mxu0 0.0
      %1630 = vmatprep.subr.mxu0 0.0
      %1631 = vmatpush1.msra.mxu0 0.0
      %1632 = vmatprep.subr.mxu0 0.0
      %1633 = vmatpush1.msra.mxu0 0.0
      %1634 = vmatprep.subr.mxu0 0.0
      %1635 = vmatpush1.msra.mxu0 0.0
      %1636 = vmatprep.subr.mxu0 0.0
      %1637 = vmatpush1.msra.mxu0 0.0
      %1638 = vmatprep.subr.mxu0 0.0
      %1639 = vmatpush1.msra.mxu0 0.0
      %1640 = vmatprep.subr.mxu0 0.0
      %1641 = vmatpush1.msra.mxu0 0.0
      %1642 = vmatprep.subr.mxu0 0.0
      %1643 = vmatpush1.msra.mxu0 0.0
      %1644 = vmatprep.subr.mxu0 0.0
      %1645 = vmatpush1.msra.mxu0 0.0
      %1646 = vmatprep.subr.mxu0 0.0
      %1647 = vmatpush1.msra.mxu0 0.0
      %1648 = vmatprep.subr.mxu0 0.0
      %1649 = vmatpush1.msra.mxu0 0.0
      %1650 = vmatprep.subr.mxu0 0.0
      %1651 = vmatpush1.msra.mxu0 0.0
      %1652 = vmatprep.subr.mxu0 0.0
      %1653 = vmatpush1.msra.mxu0 0.0
      %1654 = vmatprep.subr.mxu0 0.0
      %1655 = vmatpush1.msra.mxu0 0.0
      %1656 = vmatprep.subr.mxu0 0.0
      %1657 = vmatpush1.msra.mxu0 0.0
      %1658 = vmatprep.subr.mxu0 0.0
      %1659 = vmatpush1.msra.mxu0 0.0
      %1660 = vmatprep.subr.mxu0 0.0
      %1661 = vmatpush1.msra.mxu0 0.0
      %1662 = vmatprep.subr.mxu0 0.0
      %1663 = vmatpush1.msra.mxu0 0.0
      %1664 = vmatprep.subr.mxu0 0.0
      %1665 = vmatpush1.msra.mxu0 0.0
      %1666 = vmatprep.subr.mxu0 0.0
      %1667 = vmatpush1.msra.mxu0 0.0
      %1668 = vmatprep.subr.mxu0 0.0
      %1669 = vmatpush1.msra.mxu0 0.0
      %1670 = vmatprep.subr.mxu0 0.0
      %1671 = vmatpush1.msra.mxu0 0.0
      %1672 = vmatprep.subr.mxu0 0.0
      %1673 = vmatpush1.msra.mxu0 0.0
      %1674 = vmatprep.subr.mxu0 0.0
      %1675 = vmatpush1.msra.mxu0 0.0
      %1676 = vmatprep.subr.mxu0 0.0
      %1677 = vmatpush1.msra.mxu0 0.0
      %1678 = vmatprep.subr.mxu0 0.0
      %1679 = vmatpush1.msra.mxu0 0.0
      %1680 = vmatprep.subr.mxu0 0.0
      %1681 = vmatpush1.msra.mxu0 0.0
      %1682 = vmatprep.subr.mxu0 0.0
      %1683 = vmatpush1.msra.mxu0 0.0
      %1684 = vmatprep.mubr.f32.mxu0 0.0
      %1685 = vmatmul.mubr.f32.gmra.mrb[0].mxu0 %v1618
      %v1686 = vpop.f32.mrb[0].mxu0
      %v1687 = vadd.f32 0.0, %v1686
      %v1688 = vpop.f32.mrb[0].mxu0
      %1689 = vdwg.mxu0
      %v1690 = vld [vmem:[%s780 + $0x10] sm:$0xff]
      %v1692 = vsel %vm1049, %v1687, 0
      %1694 = vmatprep.subr.mxu0 0.0
      %1695 = vmatpush1.msra.mxu0 %v1690
      %1696 = vmatprep.subr.mxu0 0.0
      %1697 = vmatpush1.msra.mxu0 0.0
      %1698 = vmatprep.subr.mxu0 0.0
      %1699 = vmatpush1.msra.mxu0 0.0
      %1700 = vmatprep.subr.mxu0 0.0
      %1701 = vmatpush1.msra.mxu0 0.0
      %1702 = vmatprep.subr.mxu0 0.0
      %1703 = vmatpush1.msra.mxu0 0.0
      %1704 = vmatprep.subr.mxu0 0.0
      %1705 = vmatpush1.msra.mxu0 0.0
      %1706 = vmatprep.subr.mxu0 0.0
      %1707 = vmatpush1.msra.mxu0 0.0
      %1708 = vmatprep.subr.mxu0 0.0
      %1709 = vmatpush1.msra.mxu0 0.0
      %1710 = vmatprep.subr.mxu0 0.0
      %1711 = vmatpush1.msra.mxu0 0.0
      %1712 = vmatprep.subr.mxu0 0.0
      %1713 = vmatpush1.msra.mxu0 0.0
      %1714 = vmatprep.subr.mxu0 0.0
      %1715 = vmatpush1.msra.mxu0 0.0
      %1716 = vmatprep.subr.mxu0 0.0
      %1717 = vmatpush1.msra.mxu0 0.0
      %1718 = vmatprep.subr.mxu0 0.0
      %1719 = vmatpush1.msra.mxu0 0.0
      %1720 = vmatprep.subr.mxu0 0.0
      %1721 = vmatpush1.msra.mxu0 0.0
      %1722 = vmatprep.subr.mxu0 0.0
      %1723 = vmatpush1.msra.mxu0 0.0
      %1724 = vmatprep.subr.mxu0 0.0
      %1725 = vmatpush1.msra.mxu0 0.0
      %1726 = vmatprep.subr.mxu0 0.0
      %1727 = vmatpush1.msra.mxu0 0.0
      %1728 = vmatprep.subr.mxu0 0.0
      %1729 = vmatpush1.msra.mxu0 0.0
      %1730 = vmatprep.subr.mxu0 0.0
      %1731 = vmatpush1.msra.mxu0 0.0
      %1732 = vmatprep.subr.mxu0 0.0
      %1733 = vmatpush1.msra.mxu0 0.0
      %1734 = vmatprep.subr.mxu0 0.0
      %1735 = vmatpush1.msra.mxu0 0.0
      %1736 = vmatprep.subr.mxu0 0.0
      %1737 = vmatpush1.msra.mxu0 0.0
      %1738 = vmatprep.subr.mxu0 0.0
      %1739 = vmatpush1.msra.mxu0 0.0
      %1740 = vmatprep.subr.mxu0 0.0
      %1741 = vmatpush1.msra.mxu0 0.0
      %1742 = vmatprep.subr.mxu0 0.0
      %1743 = vmatpush1.msra.mxu0 0.0
      %1744 = vmatprep.subr.mxu0 0.0
      %1745 = vmatpush1.msra.mxu0 0.0
      %1746 = vmatprep.subr.mxu0 0.0
      %1747 = vmatpush1.msra.mxu0 0.0
      %1748 = vmatprep.subr.mxu0 0.0
      %1749 = vmatpush1.msra.mxu0 0.0
      %1750 = vmatprep.subr.mxu0 0.0
      %1751 = vmatpush1.msra.mxu0 0.0
      %1752 = vmatprep.subr.mxu0 0.0
      %1753 = vmatpush1.msra.mxu0 0.0
      %1754 = vmatprep.subr.mxu0 0.0
      %1755 = vmatpush1.msra.mxu0 0.0
      %1756 = vmatprep.subr.mxu0 0.0
      %1757 = vmatpush1.msra.mxu0 0.0
      %1758 = vmatprep.mubr.f32.mxu0 0.0
      %1759 = vmatmul.mubr.f32.gmra.mrb[0].mxu0 %v1692
      %v1760 = vpop.f32.mrb[0].mxu0
      %v1761 = vadd.f32 0.0, %v1760
      %v1762 = vpop.f32.mrb[0].mxu0
      %1763 = vdwg.mxu0
      %v1764 = vadd.f32 %v1522, %v1761
      %1765 = vrot.lane.b32.xlu0 %v1039, 104
      %v1766 = vpop.permute.xlu0 %1765
      %1767 = vrot.lane.b32.xlu0 %v1036, 72
      %v1768 = vpop.permute.xlu0 %1767
      %v1769 = vsel %vm1049, %v1766, 0
      %v1771 = vsel %vm1049, %v1768, 0
      %1773 = vmatprep.subr.mxu0 0.0
      %1774 = vmatpush1.xpose.msra.mxu0 %v1771
      %1775 = vmatprep.subr.mxu0 0.0
      %1776 = vmatpush1.xpose.msra.mxu0 0.0
      %1777 = vmatprep.subr.mxu0 0.0
      %1778 = vmatpush1.xpose.msra.mxu0 0.0
      %1779 = vmatprep.subr.mxu0 0.0
      %1780 = vmatpush1.xpose.msra.mxu0 0.0
      %1781 = vmatprep.subr.mxu0 0.0
      %1782 = vmatpush1.xpose.msra.mxu0 0.0
      %1783 = vmatprep.subr.mxu0 0.0
      %1784 = vmatpush1.xpose.msra.mxu0 0.0
      %1785 = vmatprep.subr.mxu0 0.0
      %1786 = vmatpush1.xpose.msra.mxu0 0.0
      %1787 = vmatprep.subr.mxu0 0.0
      %1788 = vmatpush1.xpose.msra.mxu0 0.0
      %1789 = vmatprep.subr.mxu0 0.0
      %1790 = vmatpush1.xpose.msra.mxu0 0.0
      %1791 = vmatprep.subr.mxu0 0.0
      %1792 = vmatpush1.xpose.msra.mxu0 0.0
      %1793 = vmatprep.subr.mxu0 0.0
      %1794 = vmatpush1.xpose.msra.mxu0 0.0
      %1795 = vmatprep.subr.mxu0 0.0
      %1796 = vmatpush1.xpose.msra.mxu0 0.0
      %1797 = vmatprep.subr.mxu0 0.0
      %1798 = vmatpush1.xpose.msra.mxu0 0.0
      %1799 = vmatprep.subr.mxu0 0.0
      %1800 = vmatpush1.xpose.msra.mxu0 0.0
      %1801 = vmatprep.subr.mxu0 0.0
      %1802 = vmatpush1.xpose.msra.mxu0 0.0
      %1803 = vmatprep.subr.mxu0 0.0
      %1804 = vmatpush1.xpose.msra.mxu0 0.0
      %1805 = vmatprep.subr.mxu0 0.0
      %1806 = vmatpush1.xpose.msra.mxu0 0.0
      %1807 = vmatprep.subr.mxu0 0.0
      %1808 = vmatpush1.xpose.msra.mxu0 0.0
      %1809 = vmatprep.subr.mxu0 0.0
      %1810 = vmatpush1.xpose.msra.mxu0 0.0
      %1811 = vmatprep.subr.mxu0 0.0
      %1812 = vmatpush1.xpose.msra.mxu0 0.0
      %1813 = vmatprep.subr.mxu0 0.0
      %1814 = vmatpush1.xpose.msra.mxu0 0.0
      %1815 = vmatprep.subr.mxu0 0.0
      %1816 = vmatpush1.xpose.msra.mxu0 0.0
      %1817 = vmatprep.subr.mxu0 0.0
      %1818 = vmatpush1.xpose.msra.mxu0 0.0
      %1819 = vmatprep.subr.mxu0 0.0
      %1820 = vmatpush1.xpose.msra.mxu0 0.0
      %1821 = vmatprep.subr.mxu0 0.0
      %1822 = vmatpush1.xpose.msra.mxu0 0.0
      %1823 = vmatprep.subr.mxu0 0.0
      %1824 = vmatpush1.xpose.msra.mxu0 0.0
      %1825 = vmatprep.subr.mxu0 0.0
      %1826 = vmatpush1.xpose.msra.mxu0 0.0
      %1827 = vmatprep.subr.mxu0 0.0
      %1828 = vmatpush1.xpose.msra.mxu0 0.0
      %1829 = vmatprep.subr.mxu0 0.0
      %1830 = vmatpush1.xpose.msra.mxu0 0.0
      %1831 = vmatprep.subr.mxu0 0.0
      %1832 = vmatpush1.xpose.msra.mxu0 0.0
      %1833 = vmatprep.subr.mxu0 0.0
      %1834 = vmatpush1.xpose.msra.mxu0 0.0
      %1835 = vmatprep.subr.mxu0 0.0
      %1836 = vmatpush1.xpose.msra.mxu0 0.0
      %1837 = vmatprep.mubr.f32.mxu0 0.0
      %1838 = vmatmul.mubr.f32.gmra.mrb[0].mxu0 %v1769
      %v1839 = vpop.f32.mrb[0].mxu0
      %v1840 = vadd.f32 %v1044, %v1839
      %v1841 = vpop.f32.mrb[0].mxu0
      %1842 = vdwg.mxu0
      %v1843 = vsel %vm1049, %v1840, -inf
      %1844 = vmax.xlane.f32.xlu0 %v1843
      %v1845 = vpop.xlane.xlu0 %1844
      %v1846 = vsub.f32 %v1840, %v1845
      %v1847 = vmul.f32 %v1846, 1.442695
      %v1848 = vpow.pop %v1847
      %v1849 = vsel %vm1049, %v1848, 0.0
      %1850 = vadd.xlane.f32.xlu0 %v1849
      %v1851 = vpop.xlane.xlu0 %1850
      %v1852 = vrcp.pop %v1851
      %v1853 = vmul.f32 %v1848, %v1852
      %1854 = vrot.lane.b32.xlu0 %v1036, 40
      %v1855 = vpop.permute.xlu0 %1854
      %v1858 = vsel %vm1049, %v1853, 0
      %1860 = vmatprep.subr.mxu0 0.0
      %1861 = vmatpush1.msra.mxu0 %v1855
      %1862 = vmatprep.subr.mxu0 0.0
      %1863 = vmatpush1.msra.mxu0 0.0
      %1864 = vmatprep.subr.mxu0 0.0
      %1865 = vmatpush1.msra.mxu0 0.0
      %1866 = vmatprep.subr.mxu0 0.0
      %1867 = vmatpush1.msra.mxu0 0.0
      %1868 = vmatprep.subr.mxu0 0.0
      %1869 = vmatpush1.msra.mxu0 0.0
      %1870 = vmatprep.subr.mxu0 0.0
      %1871 = vmatpush1.msra.mxu0 0.0
      %1872 = vmatprep.subr.mxu0 0.0
      %1873 = vmatpush1.msra.mxu0 0.0
      %1874 = vmatprep.subr.mxu0 0.0
      %1875 = vmatpush1.msra.mxu0 0.0
      %1876 = vmatprep.subr.mxu0 0.0
      %1877 = vmatpush1.msra.mxu0 0.0
      %1878 = vmatprep.subr.mxu0 0.0
      %1879 = vmatpush1.msra.mxu0 0.0
      %1880 = vmatprep.subr.mxu0 0.0
      %1881 = vmatpush1.msra.mxu0 0.0
      %1882 = vmatprep.subr.mxu0 0.0
      %1883 = vmatpush1.msra.mxu0 0.0
      %1884 = vmatprep.subr.mxu0 0.0
      %1885 = vmatpush1.msra.mxu0 0.0
      %1886 = vmatprep.subr.mxu0 0.0
      %1887 = vmatpush1.msra.mxu0 0.0
      %1888 = vmatprep.subr.mxu0 0.0
      %1889 = vmatpush1.msra.mxu0 0.0
      %1890 = vmatprep.subr.mxu0 0.0
      %1891 = vmatpush1.msra.mxu0 0.0
      %1892 = vmatprep.subr.mxu0 0.0
      %1893 = vmatpush1.msra.mxu0 0.0
      %1894 = vmatprep.subr.mxu0 0.0
      %1895 = vmatpush1.msra.mxu0 0.0
      %1896 = vmatprep.subr.mxu0 0.0
      %1897 = vmatpush1.msra.mxu0 0.0
      %1898 = vmatprep.subr.mxu0 0.0
      %1899 = vmatpush1.msra.mxu0 0.0
      %1900 = vmatprep.subr.mxu0 0.0
      %1901 = vmatpush1.msra.mxu0 0.0
      %1902 = vmatprep.subr.mxu0 0.0
      %1903 = vmatpush1.msra.mxu0 0.0
      %1904 = vmatprep.subr.mxu0 0.0
      %1905 = vmatpush1.msra.mxu0 0.0
      %1906 = vmatprep.subr.mxu0 0.0
      %1907 = vmatpush1.msra.mxu0 0.0
      %1908 = vmatprep.subr.mxu0 0.0
      %1909 = vmatpush1.msra.mxu0 0.0
      %1910 = vmatprep.subr.mxu0 0.0
      %1911 = vmatpush1.msra.mxu0 0.0
      %1912 = vmatprep.subr.mxu0 0.0
      %1913 = vmatpush1.msra.mxu0 0.0
      %1914 = vmatprep.subr.mxu0 0.0
      %1915 = vmatpush1.msra.mxu0 0.0
      %1916 = vmatprep.subr.mxu0 0.0
      %1917 = vmatpush1.msra.mxu0 0.0
      %1918 = vmatprep.subr.mxu0 0.0
      %1919 = vmatpush1.msra.mxu0 0.0
      %1920 = vmatprep.subr.mxu0 0.0
      %1921 = vmatpush1.msra.mxu0 0.0
      %1922 = vmatprep.subr.mxu0 0.0
      %1923 = vmatpush1.msra.mxu0 0.0
      %1924 = vmatprep.mubr.f32.mxu0 0.0
      %1925 = vmatmul.mubr.f32.gmra.mrb[0].mxu0 %v1858
      %v1926 = vpop.f32.mrb[0].mxu0
      %v1927 = vadd.f32 0.0, %v1926
      %v1928 = vpop.f32.mrb[0].mxu0
      %1929 = vdwg.mxu0
      %v1930 = vld [vmem:[%s780 + $0x18] sm:$0xff]
      %v1932 = vsel %vm1049, %v1927, 0
      %1934 = vmatprep.subr.mxu0 0.0
      %1935 = vmatpush1.msra.mxu0 %v1930
      %1936 = vmatprep.subr.mxu0 0.0
      %1937 = vmatpush1.msra.mxu0 0.0
      %1938 = vmatprep.subr.mxu0 0.0
      %1939 = vmatpush1.msra.mxu0 0.0
      %1940 = vmatprep.subr.mxu0 0.0
      %1941 = vmatpush1.msra.mxu0 0.0
      %1942 = vmatprep.subr.mxu0 0.0
      %1943 = vmatpush1.msra.mxu0 0.0
      %1944 = vmatprep.subr.mxu0 0.0
      %1945 = vmatpush1.msra.mxu0 0.0
      %1946 = vmatprep.subr.mxu0 0.0
      %1947 = vmatpush1.msra.mxu0 0.0
      %1948 = vmatprep.subr.mxu0 0.0
      %1949 = vmatpush1.msra.mxu0 0.0
      %1950 = vmatprep.subr.mxu0 0.0
      %1951 = vmatpush1.msra.mxu0 0.0
      %1952 = vmatprep.subr.mxu0 0.0
      %1953 = vmatpush1.msra.mxu0 0.0
      %1954 = vmatprep.subr.mxu0 0.0
      %1955 = vmatpush1.msra.mxu0 0.0
      %1956 = vmatprep.subr.mxu0 0.0
      %1957 = vmatpush1.msra.mxu0 0.0
      %1958 = vmatprep.subr.mxu0 0.0
      %1959 = vmatpush1.msra.mxu0 0.0
      %1960 = vmatprep.subr.mxu0 0.0
      %1961 = vmatpush1.msra.mxu0 0.0
      %1962 = vmatprep.subr.mxu0 0.0
      %1963 = vmatpush1.msra.mxu0 0.0
      %1964 = vmatprep.subr.mxu0 0.0
      %1965 = vmatpush1.msra.mxu0 0.0
      %1966 = vmatprep.subr.mxu0 0.0
      %1967 = vmatpush1.msra.mxu0 0.0
      %1968 = vmatprep.subr.mxu0 0.0
      %1969 = vmatpush1.msra.mxu0 0.0
      %1970 = vmatprep.subr.mxu0 0.0
      %1971 = vmatpush1.msra.mxu0 0.0
      %1972 = vmatprep.subr.mxu0 0.0
      %1973 = vmatpush1.msra.mxu0 0.0
      %1974 = vmatprep.subr.mxu0 0.0
      %1975 = vmatpush1.msra.mxu0 0.0
      %1976 = vmatprep.subr.mxu0 0.0
      %1977 = vmatpush1.msra.mxu0 0.0
      %1978 = vmatprep.subr.mxu0 0.0
      %1979 = vmatpush1.msra.mxu0 0.0
      %1980 = vmatprep.subr.mxu0 0.0
      %1981 = vmatpush1.msra.mxu0 0.0
      %1982 = vmatprep.subr.mxu0 0.0
      %1983 = vmatpush1.msra.mxu0 0.0
      %1984 = vmatprep.subr.mxu0 0.0
      %1985 = vmatpush1.msra.mxu0 0.0
      %1986 = vmatprep.subr.mxu0 0.0
      %1987 = vmatpush1.msra.mxu0 0.0
      %1988 = vmatprep.subr.mxu0 0.0
      %1989 = vmatpush1.msra.mxu0 0.0
      %1990 = vmatprep.subr.mxu0 0.0
      %1991 = vmatpush1.msra.mxu0 0.0
      %1992 = vmatprep.subr.mxu0 0.0
      %1993 = vmatpush1.msra.mxu0 0.0
      %1994 = vmatprep.subr.mxu0 0.0
      %1995 = vmatpush1.msra.mxu0 0.0
      %1996 = vmatprep.subr.mxu0 0.0
      %1997 = vmatpush1.msra.mxu0 0.0
      %1998 = vmatprep.mubr.f32.mxu0 0.0
      %1999 = vmatmul.mubr.f32.gmra.mrb[0].mxu0 %v1932
      %v2000 = vpop.f32.mrb[0].mxu0
      %v2001 = vadd.f32 0.0, %v2000
      %v2002 = vpop.f32.mrb[0].mxu0
      %2003 = vdwg.mxu0
      %v2004 = vadd.f32 %v1764, %v2001
      %v2005 = vld [vmem:[%s783] sm:$0x1]
      %v2007 = vlaneseq
      %v2008 = vshrl.u32 %v2007, 7
      %v2009 = vsub.s32 0, %v2008
      %v2010 = vrot.slane %v2005, %v2009
      %v2012 = vadd.f32 %v2004, %v2010
      %v2013 = vadd.f32 %v950, %v2012
      %v2014 = vld [vmem:[%s786] sm:$0x1]
      %v2015 = vld [vmem:[%s789] sm:$0x1]
      %v2016 = vsel %vm965, %v2013, 0.0
      %2017 = vadd.xlane.f32.xlu0 %v2016
      %v2018 = vpop.xlane.xlu0 %2017
      %v2019 = vrcp.pop 32.0
      %v2020 = vmul.f32 %v2018, %v2019
      %v2021 = vmul.f32 %v2013, %v2013
      %v2022 = vsel %vm965, %v2021, 0.0
      %2023 = vadd.xlane.f32.xlu0 %v2022
      %v2024 = vpop.xlane.xlu0 %2023
      %v2025 = vmul.f32 %v2024, %v2019
      %v2026 = vmul.f32 %v2020, %v2020
      %v2027 = vsub.f32 %v2025, %v2026
      %v2028 = vsub.f32 %v2013, %v2020
      %v2029 = vadd.f32 %v2027, 1e-05
      %v2030 = vrsqrt.pop %v2029
      %v2031 = vmul.f32 %v2028, %v2030
      %v2033 = vlaneseq
      %v2034 = vshrl.u32 %v2033, 7
      %v2035 = vsub.s32 0, %v2034
      %v2036 = vrot.slane %v2014, %v2035
      %v2038 = vmul.f32 %v2031, %v2036
      %v2040 = vlaneseq
      %v2041 = vshrl.u32 %v2040, 7
      %v2042 = vsub.s32 0, %v2041
      %v2043 = vrot.slane %v2015, %v2042
      %v2045 = vadd.f32 %v2038, %v2043
      %v2046 = vld [vmem:[%s794] sm:$0xff]
      %v2047 = vld [vmem:[%s794 + $0x8] sm:$0xff]
      %v2048 = vld [vmem:[%s794 + $0x10] sm:$0xff]
      %v2049 = vld [vmem:[%s794 + $0x18] sm:$0xff]
      %v2050 = vld [vmem:[%s797] sm:$0x1]
      %v2052 = vlaneseq
      %v2053 = vshrl.u32 %v2052, 7
      %v2054 = vsub.s32 0, %v2053
      %v2055 = vrot.slane %v2050, %v2054
      %v2058 = vsel %vm965, %v2045, 0
      %2060 = vmatprep.subr.mxu0 0.0
      %2061 = vmatpush1.msra.mxu0 %v2046
      %2062 = vmatprep.subr.mxu0 0.0
      %2063 = vmatpush1.msra.mxu0 %v2047
      %2064 = vmatprep.subr.mxu0 0.0
      %2065 = vmatpush1.msra.mxu0 %v2048
      %2066 = vmatprep.subr.mxu0 0.0
      %2067 = vmatpush1.msra.mxu0 %v2049
      %2068 = vmatprep.subr.mxu0 0.0
      %2069 = vmatpush1.msra.mxu0 0.0
      %2070 = vmatprep.subr.mxu0 0.0
      %2071 = vmatpush1.msra.mxu0 0.0
      %2072 = vmatprep.subr.mxu0 0.0
      %2073 = vmatpush1.msra.mxu0 0.0
      %2074 = vmatprep.subr.mxu0 0.0
      %2075 = vmatpush1.msra.mxu0 0.0
      %2076 = vmatprep.subr.mxu0 0.0
      %2077 = vmatpush1.msra.mxu0 0.0
      %2078 = vmatprep.subr.mxu0 0.0
      %2079 = vmatpush1.msra.mxu0 0.0
      %2080 = vmatprep.subr.mxu0 0.0
      %2081 = vmatpush1.msra.mxu0 0.0
      %2082 = vmatprep.subr.mxu0 0.0
      %2083 = vmatpush1.msra.mxu0 0.0
      %2084 = vmatprep.subr.mxu0 0.0
      %2085 = vmatpush1.msra.mxu0 0.0
      %2086 = vmatprep.subr.mxu0 0.0
      %2087 = vmatpush1.msra.mxu0 0.0
      %2088 = vmatprep.subr.mxu0 0.0
      %2089 = vmatpush1.msra.mxu0 0.0
      %2090 = vmatprep.subr.mxu0 0.0
      %2091 = vmatpush1.msra.mxu0 0.0
      %2092 = vmatprep.subr.mxu0 0.0
      %2093 = vmatpush1.msra.mxu0 0.0
      %2094 = vmatprep.subr.mxu0 0.0
      %2095 = vmatpush1.msra.mxu0 0.0
      %2096 = vmatprep.subr.mxu0 0.0
      %2097 = vmatpush1.msra.mxu0 0.0
      %2098 = vmatprep.subr.mxu0 0.0
      %2099 = vmatpush1.msra.mxu0 0.0
      %2100 = vmatprep.subr.mxu0 0.0
      %2101 = vmatpush1.msra.mxu0 0.0
      %2102 = vmatprep.subr.mxu0 0.0
      %2103 = vmatpush1.msra.mxu0 0.0
      %2104 = vmatprep.subr.mxu0 0.0
      %2105 = vmatpush1.msra.mxu0 0.0
      %2106 = vmatprep.subr.mxu0 0.0
      %2107 = vmatpush1.msra.mxu0 0.0
      %2108 = vmatprep.subr.mxu0 0.0
      %2109 = vmatpush1.msra.mxu0 0.0
      %2110 = vmatprep.subr.mxu0 0.0
      %2111 = vmatpush1.msra.mxu0 0.0
      %2112 = vmatprep.subr.mxu0 0.0
      %2113 = vmatpush1.msra.mxu0 0.0
      %2114 = vmatprep.subr.mxu0 0.0
      %2115 = vmatpush1.msra.mxu0 0.0
      %2116 = vmatprep.subr.mxu0 0.0
      %2117 = vmatpush1.msra.mxu0 0.0
      %2118 = vmatprep.subr.mxu0 0.0
      %2119 = vmatpush1.msra.mxu0 0.0
      %2120 = vmatprep.subr.mxu0 0.0
      %2121 = vmatpush1.msra.mxu0 0.0
      %2122 = vmatprep.subr.mxu0 0.0
      %2123 = vmatpush1.msra.mxu0 0.0
      %2124 = vmatprep.mubr.f32.mxu0 0.0
      %2125 = vmatmul.mubr.f32.gmra.mrb[0].mxu0 %v2058
      %v2126 = vpop.f32.mrb[0].mxu0
      %v2127 = vadd.f32 %v2055, %v2126
      %v2128 = vpop.f32.mrb[0].mxu0
      %2129 = vdwg.mxu0
      %v2130 = vmax.f32 %v2127, 0.0
      %v2131 = vld [vmem:[%s802] sm:$0xff]
      %v2132 = vld [vmem:[%s802 + $0x8] sm:$0xff]
      %v2133 = vld [vmem:[%s802 + $0x10] sm:$0xff]
      %v2134 = vld [vmem:[%s802 + $0x18] sm:$0xff]
      %v2135 = vld [vmem:[%s802 + $0x20] sm:$0xff]
      %v2136 = vld [vmem:[%s802 + $0x28] sm:$0xff]
      %v2137 = vld [vmem:[%s802 + $0x30] sm:$0xff]
      %v2138 = vld [vmem:[%s802 + $0x38] sm:$0xff]
      %v2139 = vld [vmem:[%s802 + $0x40] sm:$0xff]
      %v2140 = vld [vmem:[%s802 + $0x48] sm:$0xff]
      %v2141 = vld [vmem:[%s802 + $0x50] sm:$0xff]
      %v2142 = vld [vmem:[%s802 + $0x58] sm:$0xff]
      %v2143 = vld [vmem:[%s802 + $0x60] sm:$0xff]
      %v2144 = vld [vmem:[%s802 + $0x68] sm:$0xff]
      %v2145 = vld [vmem:[%s802 + $0x70] sm:$0xff]
      %v2146 = vld [vmem:[%s802 + $0x78] sm:$0xff]
      %v2147 = vld [vmem:[%s805] sm:$0x1]
      %v2149 = vlaneseq
      %v2150 = vshrl.u32 %v2149, 7
      %v2151 = vsub.s32 0, %v2150
      %v2152 = vrot.slane %v2147, %v2151
      %2154 = vmatprep.subr.mxu0 0.0
      %2155 = vmatpush1.msra.mxu0 %v2131
      %2156 = vmatprep.subr.mxu0 0.0
      %2157 = vmatpush1.msra.mxu0 %v2132
      %2158 = vmatprep.subr.mxu0 0.0
      %2159 = vmatpush1.msra.mxu0 %v2133
      %2160 = vmatprep.subr.mxu0 0.0
      %2161 = vmatpush1.msra.mxu0 %v2134
      %2162 = vmatprep.subr.mxu0 0.0
      %2163 = vmatpush1.msra.mxu0 %v2135
      %2164 = vmatprep.subr.mxu0 0.0
      %2165 = vmatpush1.msra.mxu0 %v2136
      %2166 = vmatprep.subr.mxu0 0.0
      %2167 = vmatpush1.msra.mxu0 %v2137
      %2168 = vmatprep.subr.mxu0 0.0
      %2169 = vmatpush1.msra.mxu0 %v2138
      %2170 = vmatprep.subr.mxu0 0.0
      %2171 = vmatpush1.msra.mxu0 %v2139
      %2172 = vmatprep.subr.mxu0 0.0
      %2173 = vmatpush1.msra.mxu0 %v2140
      %2174 = vmatprep.subr.mxu0 0.0
      %2175 = vmatpush1.msra.mxu0 %v2141
      %2176 = vmatprep.subr.mxu0 0.0
      %2177 = vmatpush1.msra.mxu0 %v2142
      %2178 = vmatprep.subr.mxu0 0.0
      %2179 = vmatpush1.msra.mxu0 %v2143
      %2180 = vmatprep.subr.mxu0 0.0
      %2181 = vmatpush1.msra.mxu0 %v2144
      %2182 = vmatprep.subr.mxu0 0.0
      %2183 = vmatpush1.msra.mxu0 %v2145
      %2184 = vmatprep.subr.mxu0 0.0
      %2185 = vmatpush1.msra.mxu0 %v2146
      %2186 = vmatprep.subr.mxu0 0.0
      %2187 = vmatpush1.msra.mxu0 0.0
      %2188 = vmatprep.subr.mxu0 0.0
      %2189 = vmatpush1.msra.mxu0 0.0
      %2190 = vmatprep.subr.mxu0 0.0
      %2191 = vmatpush1.msra.mxu0 0.0
      %2192 = vmatprep.subr.mxu0 0.0
      %2193 = vmatpush1.msra.mxu0 0.0
      %2194 = vmatprep.subr.mxu0 0.0
      %2195 = vmatpush1.msra.mxu0 0.0
      %2196 = vmatprep.subr.mxu0 0.0
      %2197 = vmatpush1.msra.mxu0 0.0
      %2198 = vmatprep.subr.mxu0 0.0
      %2199 = vmatpush1.msra.mxu0 0.0
      %2200 = vmatprep.subr.mxu0 0.0
      %2201 = vmatpush1.msra.mxu0 0.0
      %2202 = vmatprep.subr.mxu0 0.0
      %2203 = vmatpush1.msra.mxu0 0.0
      %2204 = vmatprep.subr.mxu0 0.0
      %2205 = vmatpush1.msra.mxu0 0.0
      %2206 = vmatprep.subr.mxu0 0.0
      %2207 = vmatpush1.msra.mxu0 0.0
      %2208 = vmatprep.subr.mxu0 0.0
      %2209 = vmatpush1.msra.mxu0 0.0
      %2210 = vmatprep.subr.mxu0 0.0
      %2211 = vmatpush1.msra.mxu0 0.0
      %2212 = vmatprep.subr.mxu0 0.0
      %2213 = vmatpush1.msra.mxu0 0.0
      %2214 = vmatprep.subr.mxu0 0.0
      %2215 = vmatpush1.msra.mxu0 0.0
      %2216 = vmatprep.subr.mxu0 0.0
      %2217 = vmatpush1.msra.mxu0 0.0
      %2218 = vmatprep.mubr.f32.mxu0 0.0
      %2219 = vmatmul.mubr.f32.gmra.mrb[0].mxu0 %v2130
      %v2220 = vpop.f32.mrb[0].mxu0
      %v2221 = vadd.f32 %v2152, %v2220
      %v2222 = vpop.f32.mrb[0].mxu0
      %2223 = vdwg.mxu0
      %v2224 = vadd.f32 %v2045, %v2221
      %v2225 = vld [vmem:[%s808] sm:$0x1]
      %v2226 = vld [vmem:[%s811] sm:$0x1]
      %v2227 = vsel %vm965, %v2224, 0.0
      %2228 = vadd.xlane.f32.xlu0 %v2227
      %v2229 = vpop.xlane.xlu0 %2228
      %v2230 = vmul.f32 %v2229, %v2019
      %v2231 = vmul.f32 %v2224, %v2224
      %v2232 = vsel %vm965, %v2231, 0.0
      %2233 = vadd.xlane.f32.xlu0 %v2232
      %v2234 = vpop.xlane.xlu0 %2233
      %v2235 = vmul.f32 %v2234, %v2019
      %v2236 = vmul.f32 %v2230, %v2230
      %v2237 = vsub.f32 %v2235, %v2236
      %v2238 = vsub.f32 %v2224, %v2230
      %v2239 = vadd.f32 %v2237, 1e-05
      %v2240 = vrsqrt.pop %v2239
      %v2241 = vmul.f32 %v2238, %v2240
      %v2243 = vlaneseq
      %v2244 = vshrl.u32 %v2243, 7
      %v2245 = vsub.s32 0, %v2244
      %v2246 = vrot.slane %v2225, %v2245
      %v2248 = vmul.f32 %v2241, %v2246
      %v2250 = vlaneseq
      %v2251 = vshrl.u32 %v2250, 7
      %v2252 = vsub.s32 0, %v2251
      %v2253 = vrot.slane %v2226, %v2252
      %v2255 = vadd.f32 %v2248, %v2253
      %2256 = vst.msk [vmem:[#allocation2] sm:$0xff] %vm965, %v2255
      %p2257 = scmp.eq.s32.totalorder %s35, 1
      // Predicated region
      $region101: #{mlm_bert_forward.2} parent=95 // pred_check
        %p2258 = pneg %p2257
      $region102: #{mlm_bert_forward.2} parent=95 // pred_check_branch
        %2260 = sbr.rel (%p2258) target = $region104
      $region103: #{mlm_bert_forward.2} parent=95 // pred_region
        %2261 = vst.msk [vmem:[%s815] sm:$0xff] %vm965, %v2255
      $region104: #{mlm_bert_forward.2} parent=95 // pred_fallthru
        _
      %p2262 = scmp.lt.s32.totalorder %s34, 1
      %s2263 = scalar_select %p2262, %s34, 1
      %s2264 = smul.addr %s2263, 8
      %s2265 = scalar_lea.vmem %s19, %s2264
      // Predicated region
      $region105: #{mlm_bert_forward.2} parent=95 // pred_check
        %p2266 = pneg %p529
      $region106: #{mlm_bert_forward.2} parent=95 // pred_check_branch
        %2268 = sbr.rel (%p2266) target = $region108
      $region107: #{mlm_bert_forward.2} parent=95 // pred_region
        _
      $region108: #{mlm_bert_forward.2} parent=95 // pred_fallthru
        _
    $region96: #{mlm_bert_forward.2} parent=5 // pred_fallthru
      _
    %p2269 = scmp.le.s32.totalorder 2, %s25
    // Predicated region
    $region109: #{mlm_bert_forward.2} parent=5 // pred_check
      %p2270 = pneg %p2269
    $region110: #{mlm_bert_forward.2} parent=5 // pred_check_branch
      %2272 = sbr.rel (%p2270) target = $region112
    $region111: #{mlm_bert_forward.2} parent=5 // pred_region
      %s2273 = ssub.s32 %s25, 2
      // Predicated region
      $region113: #{mlm_bert_forward.2} parent=111 // pred_check
        %p2274 = pneg %p535
      $region114: #{mlm_bert_forward.2} parent=111 // pred_check_branch
        %2276 = sbr.rel (%p2274) target = $region116
      $region115: #{mlm_bert_forward.2} parent=111 // pred_region
        %p2277 = scmp.lt.s32.totalorder %s36, 1
        %s2278 = scalar_select %p2277, %s36, 1
        %s2279 = smul.addr %s2278, 8
        %s2280 = scalar_lea.vmem %s19, %s2279
      $region116: #{mlm_bert_forward.2} parent=111 // pred_fallthru
        _
    $region112: #{mlm_bert_forward.2} parent=5 // pred_fallthru
      _
  $region6: #{mlm_bert_forward.2} parent=0 // loop_footer
    %s29 = sadd.s32 1, %s25
  $region7: #{mlm_bert_forward.2} parent=0 // loop_footer_branch
    %24 = sbr.rel target = $region3
  $region8: #{mlm_bert_forward.2} parent=0 // loop_exit
    _

</llo_original>
